<compile_context>
chip_gen: v7x
topology: tpu7x:2x2x1
jax: 0.10.0
libtpu: 0.0.40
codegen_flags: <defaults>
</compile_context>

<pallas_src>
import functools

import jax
import jax.numpy as jnp
from jax.experimental import pallas as pl
from jax.experimental.pallas import tpu as pltpu

N_LEADS = 12
_NEG_INF = -1e30          # additive mask value (finite: no exp(-inf) NaN hazard)
_LN_EPS = 1e-5


# ===================================================== per-generation tuning knobs ==

_VMEM_LIMIT = 32 * 1024 * 1024   # conservative default; refined by _setup_vmem_limit()


def _setup_vmem_limit():
    """Pick vmem_limit_bytes per TPU generation (96 MiB on v5e/v6e, ~48 MiB on v7x)."""
    global _VMEM_LIMIT
    try:
        cap = int(pltpu.get_tpu_info().vmem_capacity_bytes)
    except Exception:
        return                                    # keep the safe 32 MiB default
    if cap >= 100 * 1024 * 1024:                  # v5e / v6e: 128 MiB physical
        _VMEM_LIMIT = 96 * 1024 * 1024
    else:                                         # v7x: 64 MiB physical per TC
        _VMEM_LIMIT = min(48 * 1024 * 1024, max(16 * 1024 * 1024, (cap * 3) // 4))


def _cp(n_axes):
    return pltpu.CompilerParams(dimension_semantics=("parallel",) * n_axes,
                                vmem_limit_bytes=_VMEM_LIMIT)


def _row_tile(M):
    """Row tile for the linear/FF kernels: biggest that fits the per-gen VMEM budget."""
    cap = 1024 if _VMEM_LIMIT >= 64 * 1024 * 1024 else 512
    if M <= cap:
        return M
    for t in (1024, 512, 256, 128):
        if t <= cap and M % t == 0:
            return t
    return M


# ================================================= single-buffered constant specs ==

_BUFFERED1_OK = False


def _probe_buffered1():
    """Check that pl.Buffered(1) (single-buffered grid-constant operands) lowers & works."""
    global _BUFFERED1_OK
    try:
        x = jnp.arange(32 * 128, dtype=jnp.float32).reshape(32, 128)
        c = jnp.full((8, 128), 3.0, jnp.float32)

        def k(x_ref, c_ref, o_ref):
            o_ref[...] = x_ref[...] + c_ref[...]

        out = pl.pallas_call(
            k,
            out_shape=jax.ShapeDtypeStruct((32, 128), jnp.float32),
            grid=(4,),
            in_specs=[
                pl.BlockSpec((8, 128), lambda i: (i, 0)),
                pl.BlockSpec((8, 128), lambda i: (0, 0), pipeline_mode=pl.Buffered(1)),
            ],
            out_specs=pl.BlockSpec((8, 128), lambda i: (i, 0)),
        )(x, c)
        jax.block_until_ready(out)
        _BUFFERED1_OK = bool(jnp.max(jnp.abs(out - (x + 3.0))) < 1e-6)
    except Exception:
        _BUFFERED1_OK = False


def _const_spec(block_shape, index_map):
    """BlockSpec for an operand whose block index is grid-constant: single-buffer it
    (halves its resident VMEM) when the feature is available on this build."""
    if _BUFFERED1_OK:
        return pl.BlockSpec(block_shape, index_map, pipeline_mode=pl.Buffered(1))
    return pl.BlockSpec(block_shape, index_map)


# =============================================================== PositionalEncoding ==
# The spec module: pos_emb = cat([sin(pos ⊗ inv_freq), cos(pos ⊗ inv_freq)])[:, None, :]

_POS_ENC_USE_PALLAS = False  # set by _probe_pos_enc_support() at startup


def _inv_freq(d_model):
    return 1.0 / (10000.0 ** (jnp.arange(0, d_model, 2, dtype=jnp.float32) / d_model))


def _pos_enc_kernel(pos_ref, inv_ref, o_ref):
    # pos_ref: (K, 1), inv_ref: (1, d_half) -> o_ref: (K, 2*d_half)
    # sin/cos written with static slices (no lane-axis concat / XLU relayout).
    d_half = inv_ref.shape[1]
    s = pos_ref[...] * inv_ref[...]                 # outer product via broadcast
    o_ref[:, :d_half] = jnp.sin(s)
    o_ref[:, d_half:] = jnp.cos(s)


def _pos_enc_pallas(pos_2d, inv_2d):
    K = pos_2d.shape[0]
    d_half = inv_2d.shape[1]
    return pl.pallas_call(
        _pos_enc_kernel,
        out_shape=jax.ShapeDtypeStruct((K, 2 * d_half), jnp.float32),
        grid=(1,),
        in_specs=[
            pl.BlockSpec((K, 1), lambda i: (0, 0)),
            pl.BlockSpec((1, d_half), lambda i: (0, 0)),
        ],
        out_specs=pl.BlockSpec((K, 2 * d_half), lambda i: (0, 0)),
        compiler_params=_cp(1),
    )(pos_2d, inv_2d)


def _probe_pos_enc_support():
    """Eagerly check in-kernel sin/cos lowering (and numerics) on this Mosaic build."""
    global _POS_ENC_USE_PALLAS
    try:
        pos = jnp.arange(7.0, -1.0, -1.0, dtype=jnp.float32).reshape(8, 1)
        inv = _inv_freq(16).reshape(1, 8)
        out = _pos_enc_pallas(pos, inv)
        jax.block_until_ready(out)
        s = pos * inv
        ref = jnp.concatenate([jnp.sin(s), jnp.cos(s)], axis=-1)
        _POS_ENC_USE_PALLAS = bool(jnp.max(jnp.abs(out - ref)) < 1e-3)
    except Exception:
        # TODO(synk): this Mosaic build lacks in-kernel sin/cos lowering; PositionalEncoding
        #             falls back to the numerically-identical XLA formulation.
        _POS_ENC_USE_PALLAS = False


def positional_encoding(pos_seq, d_model):
    """Exact PyTorch PositionalEncoding.forward: pos_seq (K,) -> (K, 1, d_model)."""
    K = pos_seq.shape[0]
    inv = _inv_freq(d_model)
    if _POS_ENC_USE_PALLAS:
        pe = _pos_enc_pallas(pos_seq.reshape(K, 1).astype(jnp.float32),
                             inv.reshape(1, d_model // 2))
    else:
        s = jnp.outer(pos_seq.astype(jnp.float32), inv)
        pe = jnp.concatenate([jnp.sin(s), jnp.cos(s)], axis=-1)
    return pe[:, None, :]


def _posenc_rproj_kernel(inv_ref, wt_ref, wb_ref, o_ref, *, k_total):
    # Fused PositionalEncoding + relative-key projection for all layers:
    #   out = sin(S) @ w_r[:d_half] + cos(S) @ w_r[d_half:]   with S = pos ⊗ inv_freq
    # Positions (descending k_total-1 .. 0) are generated in-kernel via iota -- no
    # pos_emb HBM round-trip and no lane-sparse (K,1) operand DMA.
    d_half = inv_ref.shape[1]
    r = jax.lax.broadcasted_iota(jnp.int32, (k_total, d_half), 0).astype(jnp.float32)
    pos = (k_total - 1.0) - r
    s = pos * inv_ref[...]
    acc = jnp.dot(jnp.sin(s).astype(jnp.bfloat16), wt_ref[...],
                  preferred_element_type=jnp.float32)
    acc = acc + jnp.dot(jnp.cos(s).astype(jnp.bfloat16), wb_ref[...],
                        preferred_element_type=jnp.float32)
    o_ref[...] = acc.astype(o_ref.dtype)


def posenc_r_projection(k_total, d_model, w_r_all):
    """PositionalEncoding(arange(K-1..0)) @ w_r_all, one kernel, bf16 output."""
    d_half = d_model // 2
    NW = w_r_all.shape[1]
    if not _POS_ENC_USE_PALLAS:
        pos_seq = jnp.arange(k_total - 1, -1, -1.0, dtype=jnp.float32)
        pe = positional_encoding(pos_seq, d_model)[:, 0, :]
        return linear(pe, w_r_all)
    inv = _inv_freq(d_model).reshape(1, d_half).astype(jnp.float32)
    return pl.pallas_call(
        functools.partial(_posenc_rproj_kernel, k_total=k_total),
        out_shape=jax.ShapeDtypeStruct((k_total, NW), jnp.bfloat16),
        grid=(1,),
        in_specs=[
            _const_spec((1, d_half), lambda i: (0, 0)),
            _const_spec((d_half, NW), lambda i: (0, 0)),
            _const_spec((d_half, NW), lambda i: (0, 0)),
        ],
        out_specs=pl.BlockSpec((k_total, NW), lambda i: (0, 0)),
        compiler_params=_cp(1),
    )(inv, w_r_all[:d_half].astype(jnp.bfloat16), w_r_all[d_half:].astype(jnp.bfloat16))


# ===================================================================== rel_shift ==
# Semantics (valid region identical to the PyTorch view-trick, invalid region zeroed;
# the invalid region j > mlen + i is always removed by the causal/memory mask):
#     out[n, i, j] = x[n, i, j + (Q-1-i)]   if j + (Q-1-i) < K   else 0

_REL_SHIFT_MODE = "unroll"   # set by _probe_rel_shift(): "roll" | "roll_flip" | "unroll"


def _rel_shift_unrolled(x):
    """Reference / fallback implementation (pure jnp, also valid inside a kernel)."""
    g, Q, K = x.shape
    row = jax.lax.broadcasted_iota(jnp.int32, (Q, K), 0)
    out = jnp.zeros_like(x)
    for i in range(Q):                               # static unroll (Q is small)
        s = Q - 1 - i
        if s == 0:
            shifted = x
        else:
            shifted = jnp.concatenate(
                [x[:, :, s:], jnp.zeros((g, Q, s), x.dtype)], axis=-1)
        out = out + jnp.where(row == i, shifted, 0.0)
    return out


def _rel_shift_in_kernel(x, mode):
    """rel_shift of a VMEM-resident (g, Q, K) tensor; single strided XLU roll + select."""
    g, Q, K = x.shape
    if mode == "unroll":
        return _rel_shift_unrolled(x)
    if mode == "roll":       # jnp.roll convention: out[j] = x[j - shift]
        rolled = pltpu.roll(x, shift=(1 - Q) % K, axis=2, stride=1, stride_axis=1)
    else:                    # "roll_flip": opposite convention
        rolled = pltpu.roll(x, shift=Q - 1, axis=2, stride=-1, stride_axis=1)
    row = jax.lax.broadcasted_iota(jnp.int32, (Q, K), 0)
    col = jax.lax.broadcasted_iota(jnp.int32, (Q, K), 1)
    valid = (col + (Q - 1) - row) < K
    return jnp.where(valid[None, :, :], rolled, 0.0)


def _probe_rel_shift(g, Q, K):
    """Pick the strided-roll convention that matches the reference, else fall back."""
    global _REL_SHIFT_MODE
    x = jax.random.normal(jax.random.PRNGKey(1), (g, Q, K), jnp.float32)
    ref = _rel_shift_unrolled(x)
    for mode in ("roll", "roll_flip"):
        try:
            def kern(x_ref, o_ref, _mode=mode):
                o_ref[...] = _rel_shift_in_kernel(x_ref[...], _mode)

            out = pl.pallas_call(
                kern,
                out_shape=jax.ShapeDtypeStruct((g, Q, K), jnp.float32),
                grid=(1,),
                in_specs=[pl.BlockSpec((g, Q, K), lambda i: (0, 0, 0))],
                out_specs=pl.BlockSpec((g, Q, K), lambda i: (0, 0, 0)),
                compiler_params=_cp(1),
            )(x)
            jax.block_until_ready(out)
            if float(jnp.max(jnp.abs(out - ref))) < 1e-6:
                _REL_SHIFT_MODE = mode
                return
        except Exception:
            continue
    _REL_SHIFT_MODE = "unroll"


# ============================================================ fused matmul kernels ==

def _linear_kernel(x_ref, w_ref, b_ref, o_ref, *, relu):
    acc = jnp.dot(x_ref[...], w_ref[...], preferred_element_type=jnp.float32) + b_ref[...]
    if relu:
        acc = jnp.maximum(acc, 0.0)
    o_ref[...] = acc.astype(o_ref.dtype)


def _linear_res_ln_kernel(x_ref, w_ref, b_ref, res_ref, g_ref, be_ref, o_ref, *, eps):
    # LayerNorm(res + x @ w + b) -- matmul + residual + LN fused (f32 LN math).
    acc = jnp.dot(x_ref[...], w_ref[...], preferred_element_type=jnp.float32) + b_ref[...]
    h = res_ref[...].astype(jnp.float32) + acc
    mean = jnp.mean(h, axis=-1, keepdims=True)
    var = jnp.mean((h - mean) ** 2, axis=-1, keepdims=True)
    y = (h - mean) * jax.lax.rsqrt(var + eps) * g_ref[...] + be_ref[...]
    o_ref[...] = y.astype(o_ref.dtype)


def _ff_block_kernel(x_ref, w1_ref, b1_ref, w2_ref, b2_ref, g_ref, be_ref, o_ref, *, eps):
    # LayerNorm(x + relu(x@w1+b1)@w2 + b2) -- whole position-wise FF in one kernel.
    # TODO(synk): for very large d_inner on v7x, additionally tile d_inner with an inner
    #             fori_loop accumulator instead of holding the full (tm, d_inner) h1.
    x = x_ref[...]                                           # bf16; also the residual
    h1 = jnp.dot(x, w1_ref[...], preferred_element_type=jnp.float32) + b1_ref[...]
    h1 = jnp.maximum(h1, 0.0).astype(jnp.bfloat16)           # bf16 into the second matmul
    h2 = jnp.dot(h1, w2_ref[...], preferred_element_type=jnp.float32) + b2_ref[...]
    h = x.astype(jnp.float32) + h2
    mean = jnp.mean(h, axis=-1, keepdims=True)
    var = jnp.mean((h - mean) ** 2, axis=-1, keepdims=True)
    y = (h - mean) * jax.lax.rsqrt(var + eps) * g_ref[...] + be_ref[...]
    o_ref[...] = y.astype(o_ref.dtype)


def linear(x, w, b=None, relu=False):
    """x:(M,K) -> (M,N) bf16. bf16 MXU operands, f32 accumulation, resident weights."""
    M, Kd = x.shape
    N = w.shape[1]
    if b is None:
        b = jnp.zeros((N,), jnp.float32)
    tm = _row_tile(M)
    return pl.pallas_call(
        functools.partial(_linear_kernel, relu=relu),
        out_shape=jax.ShapeDtypeStruct((M, N), jnp.bfloat16),
        grid=(M // tm,),
        in_specs=[
            pl.BlockSpec((tm, Kd), lambda i: (i, 0)),
            _const_spec((Kd, N), lambda i: (0, 0)),          # weight stays resident
            _const_spec((1, N), lambda i: (0, 0)),
        ],
        out_specs=pl.BlockSpec((tm, N), lambda i: (i, 0)),
        compiler_params=_cp(1),
    )(x.astype(jnp.bfloat16), w.astype(jnp.bfloat16), b.reshape(1, N).astype(jnp.float32))


def linear_res_ln(x, w, b, res, gamma, beta, eps=_LN_EPS):
    """LayerNorm(res + x @ w + b) in a single pallas_call; bf16 activations in/out."""
    M, Kd = x.shape
    N = w.shape[1]
    if b is None:
        b = jnp.zeros((N,), jnp.float32)
    tm = _row_tile(M)
    return pl.pallas_call(
        functools.partial(_linear_res_ln_kernel, eps=eps),
        out_shape=jax.ShapeDtypeStruct((M, N), jnp.bfloat16),
        grid=(M // tm,),
        in_specs=[
            pl.BlockSpec((tm, Kd), lambda i: (i, 0)),
            _const_spec((Kd, N), lambda i: (0, 0)),
            _const_spec((1, N), lambda i: (0, 0)),
            pl.BlockSpec((tm, N), lambda i: (i, 0)),
            _const_spec((1, N), lambda i: (0, 0)),
            _const_spec((1, N), lambda i: (0, 0)),
        ],
        out_specs=pl.BlockSpec((tm, N), lambda i: (i, 0)),
        compiler_params=_cp(1),
    )(x.astype(jnp.bfloat16), w.astype(jnp.bfloat16), b.reshape(1, N).astype(jnp.float32),
      res.astype(jnp.bfloat16), gamma.reshape(1, N).astype(jnp.float32),
      beta.reshape(1, N).astype(jnp.float32))


def ff_block(x, w1, b1, w2, b2, gamma, beta, eps=_LN_EPS):
    """LayerNorm(x + relu(x@w1+b1)@w2 + b2) in a single pallas_call; bf16 in/out."""
    M, d_model = x.shape
    d_inner = w1.shape[1]
    tm = _row_tile(M)
    return pl.pallas_call(
        functools.partial(_ff_block_kernel, eps=eps),
        out_shape=jax.ShapeDtypeStruct((M, d_model), jnp.bfloat16),
        grid=(M // tm,),
        in_specs=[
            pl.BlockSpec((tm, d_model), lambda i: (i, 0)),
            _const_spec((d_model, d_inner), lambda i: (0, 0)),
            _const_spec((1, d_inner), lambda i: (0, 0)),
            _const_spec((d_inner, d_model), lambda i: (0, 0)),
            _const_spec((1, d_model), lambda i: (0, 0)),
            _const_spec((1, d_model), lambda i: (0, 0)),
            _const_spec((1, d_model), lambda i: (0, 0)),
        ],
        out_specs=pl.BlockSpec((tm, d_model), lambda i: (i, 0)),
        compiler_params=_cp(1),
    )(x.astype(jnp.bfloat16), w1.astype(jnp.bfloat16),
      b1.reshape(1, d_inner).astype(jnp.float32), w2.astype(jnp.bfloat16),
      b2.reshape(1, d_model).astype(jnp.float32),
      gamma.reshape(1, d_model).astype(jnp.float32),
      beta.reshape(1, d_model).astype(jnp.float32))


# =============================================================== fused attention ==

def _head_group(N, Q, K, D):
    """Heads per attention grid step: bound the f32 (g, Q, K) score temporaries while
    keeping the lane-dense (Q, g*D) output block legal (g*D % 128 == 0 unless g == N)."""
    budget = max(_VMEM_LIMIT // 4, 6 * Q * K * 4)
    per_head = 6 * Q * K * 4          # ~ac, bd, rolled, score, e, p live at once (f32)
    for g in range(N, 0, -1):
        if N % g:
            continue
        if g * per_head > budget:
            continue
        if g < N and (g * D) % 128 != 0:
            continue
        return g
    return N


def _fused_attn_kernel(q_ref, k_ref, v_ref, rk_ref, rwb_ref, rrb_ref, mask_ref, o_ref,
                       *, scale, rel_mode):
    # One grid step = one (batch, head-group).  All matmuls bf16 on the MXU, f32 accum;
    # softmax math f32; rel_shift via strided XLU roll; lane-dense output slabs.
    q = q_ref[...]                                    # (g, Q, D) bf16
    qrw = q + rwb_ref[...]                            # bias adds fused in-kernel
    qrr = q + rrb_ref[...]
    ac = jnp.einsum('nqd,nkd->nqk', qrw, k_ref[...],
                    preferred_element_type=jnp.float32)
    bd = _rel_shift_in_kernel(
        jnp.einsum('nqd,nkd->nqk', qrr, rk_ref[...],
                   preferred_element_type=jnp.float32), rel_mode)
    score = (ac + bd) * scale + mask_ref[...]         # additive 0/-1e30 mask
    m = jnp.max(score, axis=-1, keepdims=True)
    e = jnp.exp(score - m)
    p = e * pl.reciprocal(jnp.sum(e, axis=-1, keepdims=True), approx=True)
    pv = jnp.einsum('nqk,nkd->nqd', p.astype(jnp.bfloat16), v_ref[...],
                    preferred_element_type=jnp.float32)
    g, _, D = pv.shape
    for n in range(g):                                # per-head slabs at static lane offsets
        o_ref[:, n * D:(n + 1) * D] = pv[n].astype(o_ref.dtype)


def fused_relpos_attention(q, k, v, rk, rwb, rrb, mask_add, scale):
    """q:(B,N,Q,D), k/v:(B,N,K,D), rk:(N,K,D), rwb/rrb:(N,D), mask:(Q,K) -> (B,Q,N*D)."""
    B, N, Q, D = q.shape
    K = k.shape[2]
    g = _head_group(N, Q, K, D)
    NH = N // g
    kernel = functools.partial(_fused_attn_kernel, scale=scale, rel_mode=_REL_SHIFT_MODE)
    return pl.pallas_call(
        kernel,
        out_shape=jax.ShapeDtypeStruct((B, Q, N * D), jnp.bfloat16),
        grid=(B, NH),
        in_specs=[
            pl.BlockSpec((None, g, Q, D), lambda b, h: (b, h, 0, 0)),
            pl.BlockSpec((None, g, K, D), lambda b, h: (b, h, 0, 0)),
            pl.BlockSpec((None, g, K, D), lambda b, h: (b, h, 0, 0)),
            pl.BlockSpec((g, K, D), lambda b, h: (h, 0, 0)),   # no batch HBM broadcast
            pl.BlockSpec((g, 1, D), lambda b, h: (h, 0, 0)),
            pl.BlockSpec((g, 1, D), lambda b, h: (h, 0, 0)),
            _const_spec((Q, K), lambda b, h: (0, 0)),
        ],
        out_specs=pl.BlockSpec((None, Q, g * D), lambda b, h: (b, 0, h)),
        compiler_params=_cp(2),
    )(q.astype(jnp.bfloat16), k.astype(jnp.bfloat16), v.astype(jnp.bfloat16),
      rk.astype(jnp.bfloat16),
      rwb.reshape(N, 1, D).astype(jnp.bfloat16),
      rrb.reshape(N, 1, D).astype(jnp.bfloat16),
      mask_add.astype(jnp.float32))


# ======================================================================== glue ==

def _make_additive_mask(Q, K, num_masked, perc):
    # TODO(synk): generate_random_sequence_mask is not defined in the source module;
    #             deterministic stand-in masking `num_masked` key positions per query,
    #             combined with the standard TransformerXL causal/memory mask
    #             (keys j > mlen + i), which also covers the rel_shift wrap region.
    del perc
    rows = jnp.arange(Q)[:, None]
    cols = jnp.arange(K)[None, :]
    mlen = K - Q
    masked = cols > (rows + mlen)
    for t in range(num_masked):
        masked = jnp.logical_or(masked, cols == (rows * 3 + t * 5) % K)
    return jnp.where(masked, _NEG_INF, 0.0).astype(jnp.float32)


def encoder_layer(p, dec_inp, r_head_k, r_w_bias, r_r_bias, mask_add, mem):
    """dec_inp:(Q,B,d_model), r_head_k:(N,K,D), mem:(mlen,B,d_model)."""
    Q, B, d_model = dec_inp.shape
    N, D = r_w_bias.shape
    scale = 1.0 / (D ** 0.5)

    cat = jnp.concatenate([mem.astype(jnp.bfloat16), dec_inp.astype(jnp.bfloat16)], axis=0)
    K = cat.shape[0]

    w_heads = linear(cat.reshape(K * B, d_model), p['w_qkv'])    # (K*B, 3*N*D) bf16
    w_heads = w_heads.reshape(K, B, 3, N, D)
    q = w_heads[-Q:, :, 0].transpose(1, 2, 0, 3)                 # (B, N, Q, D) bf16
    k = w_heads[:, :, 1].transpose(1, 2, 0, 3)                   # (B, N, K, D) bf16
    v = w_heads[:, :, 2].transpose(1, 2, 0, 3)

    # one fused launch: bias adds, AC/BD matmuls, rel_shift, mask, softmax, P@V,
    # lane-dense (B, Q, N*D) output.
    attn = fused_relpos_attention(q, k, v, r_head_k, r_w_bias, r_r_bias, mask_add, scale)

    res = dec_inp.transpose(1, 0, 2).reshape(B * Q, d_model)
    # attention output projection + residual + LayerNorm: one kernel
    out_attn = linear_res_ln(attn.reshape(B * Q, N * D), p['w_o'], None,
                             res, p['ln_a_g'], p['ln_a_b'])
    # position-wise FF (FF1 + ReLU + FF2 + residual + LayerNorm): one kernel
    out = ff_block(out_attn, p['w_ff1'], p['b_ff1'], p['w_ff2'], p['b_ff2'],
                   p['ln_f_g'], p['ln_f_b'])
    return out.reshape(B, Q, d_model).transpose(1, 0, 2)


def transformer_xl_forward(params, args, src, mems):
    """src:(B, N_LEADS, seg_len), mems: list of n_layer+1 arrays (mem_len, B, d_model)."""
    d_model = args['dim_model']
    n_head = args['num_heads']
    d_head = d_model // n_head
    n_layer = args['num_trans_layers']

    w = jnp.transpose(src, (2, 0, 1)).astype(jnp.float32)        # (seg_len, B, N_LEADS)
    Q, B, _ = w.shape
    mlen = mems[0].shape[0]
    K = mlen + args['seq_length']

    mask_add = _make_additive_mask(Q, K, args['num_masked_samples'], args['perc_masked_samp'])

    # input embedding: lane-sparse (12 leads) -> left to XLA per feedback
    core_out = jnp.einsum('qbl,ld->qbd', w, params['w_in']) + params['b_in']

    # PositionalEncoding fused into the all-layer relative-key projection (one kernel,
    # no HBM round-trip of pos_emb); dropout == identity.
    w_r_all = jnp.concatenate([lp['w_r'] for lp in params['layers']], axis=1)
    r_all = posenc_r_projection(K, d_model, w_r_all).reshape(K, n_layer, n_head, d_head)

    hids = [core_out]
    for i, lp in enumerate(params['layers']):
        r_head_k = jnp.transpose(r_all[:, i], (1, 0, 2))         # (N, K, D) bf16
        core_out = encoder_layer(lp, core_out, r_head_k,
                                 params['r_w_bias'], params['r_r_bias'],
                                 mask_add, mems[i])
        hids.append(core_out)

    # decoder head: lane-sparse (12 leads) -> left to XLA per feedback
    pred = jnp.einsum('qbd,dl->qbl', core_out.astype(jnp.float32),
                      params['w_dec']) + params['b_dec']
    pred = pred.transpose(1, 2, 0)                               # (B, N_LEADS, seg_len)

    # _update_mems (dropout layers are identity: eval / p=0)
    end_idx = mlen + args['seq_length']
    beg_idx = max(0, end_idx - args['mem_len'])
    new_mems = [
        jax.lax.stop_gradient(
            jnp.concatenate([mems[i], hids[i].astype(jnp.float32)], axis=0)[beg_idx:end_idx])
        for i in range(len(hids))
    ]
    return pred, new_mems


# ====================================================================== params ==

def init_params(key, args):
    d_model, d_inner = args['dim_model'], args['dim_inner']
    n_head = args['num_heads']
    d_head = d_model // n_head
    n_layer = args['num_trans_layers']

    def nrm(k, shape, std=0.02):
        return std * jax.random.normal(k, shape, jnp.float32)

    keys = jax.random.split(key, 6 + 8 * n_layer)
    params = {
        'w_in': nrm(keys[0], (N_LEADS, d_model)),
        'b_in': nrm(keys[1], (d_model,)),
        'w_dec': nrm(keys[2], (d_model, N_LEADS)),
        'b_dec': nrm(keys[3], (N_LEADS,)),
        'r_w_bias': nrm(keys[4], (n_head, d_head)),
        'r_r_bias': nrm(keys[5], (n_head, d_head)),
        'layers': [],
    }
    for li in range(n_layer):
        k = keys[6 + 8 * li: 6 + 8 * (li + 1)]
        params['layers'].append({
            'w_qkv': nrm(k[0], (d_model, 3 * n_head * d_head)),
            'w_r': nrm(k[1], (d_model, n_head * d_head)),
            'w_o': nrm(k[2], (n_head * d_head, d_model)),
            'ln_a_g': jnp.ones((d_model,), jnp.float32),
            'ln_a_b': jnp.zeros((d_model,), jnp.float32),
            'w_ff1': nrm(k[3], (d_model, d_inner)),
            'b_ff1': nrm(k[4], (d_inner,)),
            'w_ff2': nrm(k[5], (d_inner, d_model)),
            'b_ff2': nrm(k[6], (d_model,)),
            'ln_f_g': jnp.ones((d_model,), jnp.float32),
            'ln_f_b': jnp.zeros((d_model,), jnp.float32),
        })
    return params


# ======================================================================== main ==

if __name__ == "__main__":
    args = {
        'num_masked_samples': 2,
        'perc_masked_samp': 0.15,
        'batch_size': 2,
        'seq_length': 8,
        'dim_model': 32,
        'dim_inner': 64,
        'num_trans_layers': 2,
        'num_heads': 4,
        'dropout': 0.0,        # dropout layers are identity here (eval semantics)
        'dropout_attn': 0.0,
        'mem_len': 8,
    }

    # startup probes / per-generation tuning (all have safe fallbacks)
    _setup_vmem_limit()
    _probe_buffered1()
    _probe_pos_enc_support()
    d_head = args['dim_model'] // args['num_heads']
    K = args['mem_len'] + args['seq_length']
    g_probe = _head_group(args['num_heads'], args['seq_length'], K, d_head)
    _probe_rel_shift(g_probe, args['seq_length'], K)

    key = jax.random.PRNGKey(0)
    kp, ks, km = jax.random.split(key, 3)
    params = init_params(kp, args)

    src = jax.random.normal(ks, (args['batch_size'], N_LEADS, args['seq_length']), jnp.float32)
    mem_keys = jax.random.split(km, args['num_trans_layers'] + 1)
    mems = [0.1 * jax.random.normal(mk, (args['mem_len'], args['batch_size'], args['dim_model']),
                                    jnp.float32)
            for mk in mem_keys]

    # --- standalone check of the spec module (PositionalEncoding) against pure JAX ---
    pos_seq = jnp.arange(K - 1, -1, -1.0, dtype=jnp.float32)
    pe = positional_encoding(pos_seq, args['dim_model'])
    jax.block_until_ready(pe)
    sin_inp = jnp.outer(pos_seq, _inv_freq(args['dim_model']))
    pe_ref = jnp.concatenate([jnp.sin(sin_inp), jnp.cos(sin_inp)], axis=-1)[:, None, :]
    assert pe.shape == (K, 1, args['dim_model'])
    assert float(jnp.max(jnp.abs(pe - pe_ref))) < 1e-3

    # --- full TransformerXL forward that consumes the positional encoding ---
    fwd = jax.jit(lambda p, s, m: transformer_xl_forward(p, args, s, m))
    pred, new_mems = fwd(params, src, mems)
    jax.block_until_ready(pred)
    for m in new_mems:
        jax.block_until_ready(m)

    assert pred.shape == (args['batch_size'], N_LEADS, args['seq_length'])
    assert len(new_mems) == args['num_trans_layers'] + 1
    assert all(m.shape == (args['mem_len'], args['batch_size'], args['dim_model'])
               for m in new_mems)
    assert bool(jnp.all(jnp.isfinite(pred)))
    print("KERNEL_OK")
</pallas_src>

<mosaic_0001>
module attributes {stable_mosaic.version = 11 : i64} {
  func.func @k(%arg0: i32, %arg1: memref<8x128xf32, #tpu.memory_space<vmem>>, %arg2: memref<8x128xf32, #tpu.memory_space<vmem>>, %arg3: memref<8x128xf32, #tpu.memory_space<vmem>>) attributes {dimension_semantics = [#tpu.dimension_semantics<arbitrary>], iteration_bounds = array<i64: 4>, scalar_prefetch = 0 : i64, scratch_operands = 0 : i64, tpu.core_type = #tpu.core_type<tc>, window_params = [{transform_indices = @transform_0, window_bounds = array<i64: 8, 128>}, {pipeline_mode = #tpu.pipeline_mode<synchronous>, transform_indices = @transform_1, window_bounds = array<i64: 8, 128>}, {transform_indices = @transform_2, window_bounds = array<i64: 8, 128>}]} {
    %c0 = arith.constant 0 : index
    %c0_0 = arith.constant 0 : index
    %0 = vector.load %arg1[%c0, %c0_0] : memref<8x128xf32, #tpu.memory_space<vmem>>, vector<8x128xf32>
    %c0_1 = arith.constant 0 : index
    %c0_2 = arith.constant 0 : index
    %1 = vector.load %arg2[%c0_1, %c0_2] : memref<8x128xf32, #tpu.memory_space<vmem>>, vector<8x128xf32>
    %2 = arith.addf %0, %1 : vector<8x128xf32>
    %c0_3 = arith.constant 0 : index
    %c0_4 = arith.constant 0 : index
    %3 = vector.load %arg3[%c0_3, %c0_4] : memref<8x128xf32, #tpu.memory_space<vmem>>, vector<8x128xf32>
    tpu.vector_store %arg3[%c0_3, %c0_4], %2 {strides = array<i32>} : memref<8x128xf32, #tpu.memory_space<vmem>>, vector<8x128xf32>,
    return
  }
  func.func @transform_0(%arg0: i32) -> (i32, i32) {
    %c0_i32 = arith.constant 0 : i32
    %c0_i32_0 = arith.constant 0 : i32
    return %arg0, %c0_i32 : i32, i32
  }
  func.func @transform_1(%arg0: i32) -> (i32, i32) {
    %c0_i32 = arith.constant 0 : i32
    %c0_i32_0 = arith.constant 0 : i32
    %c0_i32_1 = arith.constant 0 : i32
    return %c0_i32, %c0_i32_0 : i32, i32
  }
  func.func @transform_2(%arg0: i32) -> (i32, i32) {
    %c0_i32 = arith.constant 0 : i32
    %c0_i32_0 = arith.constant 0 : i32
    return %arg0, %c0_i32 : i32, i32
  }
}

module attributes {stable_mosaic.version = 11 : i64} {
  func.func @_pos_enc_kernel(%arg0: i32, %arg1: memref<8x1xf32, #tpu.memory_space<vmem>>, %arg2: memref<1x8xf32, #tpu.memory_space<vmem>>, %arg3: memref<8x16xf32, #tpu.memory_space<vmem>>) attributes {dimension_semantics = [#tpu.dimension_semantics<parallel>], iteration_bounds = array<i64: 1>, scalar_prefetch = 0 : i64, scratch_operands = 0 : i64, tpu.core_type = #tpu.core_type<tc>, window_params = [{pipeline_mode = #tpu.pipeline_mode<synchronous>, transform_indices = @transform_0, window_bounds = array<i64: 8, 1>}, {pipeline_mode = #tpu.pipeline_mode<synchronous>, transform_indices = @transform_1, window_bounds = array<i64: 1, 8>}, {pipeline_mode = #tpu.pipeline_mode<synchronous>, transform_indices = @transform_2, window_bounds = array<i64: 8, 16>}]} {
    %c0 = arith.constant 0 : index
    %c0_0 = arith.constant 0 : index
    %0 = vector.load %arg1[%c0, %c0_0] : memref<8x1xf32, #tpu.memory_space<vmem>>, vector<8x1xf32>
    %c0_1 = arith.constant 0 : index
    %c0_2 = arith.constant 0 : index
    %1 = vector.load %arg2[%c0_1, %c0_2] : memref<1x8xf32, #tpu.memory_space<vmem>>, vector<1x8xf32>
    %2 = vector.broadcast %0 : vector<8x1xf32> to vector<8x8xf32>
    %3 = vector.broadcast %1 : vector<1x8xf32> to vector<8x8xf32>
    %4 = arith.mulf %2, %3 : vector<8x8xf32>
    %5 = math.sin %4 : vector<8x8xf32>
    %c0_3 = arith.constant 0 : index
    %c0_4 = arith.constant 0 : index
    %6 = vector.load %arg3[%c0_3, %c0_4] : memref<8x16xf32, #tpu.memory_space<vmem>>, vector<8x8xf32>
    tpu.vector_store %arg3[%c0_3, %c0_4], %5 {strides = array<i32>} : memref<8x16xf32, #tpu.memory_space<vmem>>, vector<8x8xf32>,
    %7 = math.cos %4 : vector<8x8xf32>
    %c0_5 = arith.constant 0 : index
    %c8 = arith.constant 8 : index
    %8 = vector.load %arg3[%c0_5, %c8] : memref<8x16xf32, #tpu.memory_space<vmem>>, vector<8x8xf32>
    tpu.vector_store %arg3[%c0_5, %c8], %7 {strides = array<i32>} : memref<8x16xf32, #tpu.memory_space<vmem>>, vector<8x8xf32>,
    return
  }
  func.func @transform_0(%arg0: i32) -> (i32, i32) {
    %c0_i32 = arith.constant 0 : i32
    %c0_i32_0 = arith.constant 0 : i32
    %c0_i32_1 = arith.constant 0 : i32
    return %c0_i32, %c0_i32_0 : i32, i32
  }
  func.func @transform_1(%arg0: i32) -> (i32, i32) {
    %c0_i32 = arith.constant 0 : i32
    %c0_i32_0 = arith.constant 0 : i32
    %c0_i32_1 = arith.constant 0 : i32
    return %c0_i32, %c0_i32_0 : i32, i32
  }
  func.func @transform_2(%arg0: i32) -> (i32, i32) {
    %c0_i32 = arith.constant 0 : i32
    %c0_i32_0 = arith.constant 0 : i32
    %c0_i32_1 = arith.constant 0 : i32
    return %c0_i32, %c0_i32_0 : i32, i32
  }
}

module attributes {stable_mosaic.version = 11 : i64} {
  func.func @kern(%arg0: i32, %arg1: memref<4x8x16xf32, #tpu.memory_space<vmem>>, %arg2: memref<4x8x16xf32, #tpu.memory_space<vmem>>) attributes {dimension_semantics = [#tpu.dimension_semantics<parallel>], iteration_bounds = array<i64: 1>, scalar_prefetch = 0 : i64, scratch_operands = 0 : i64, tpu.core_type = #tpu.core_type<tc>, window_params = [{pipeline_mode = #tpu.pipeline_mode<synchronous>, transform_indices = @transform_0, window_bounds = array<i64: 4, 8, 16>}, {pipeline_mode = #tpu.pipeline_mode<synchronous>, transform_indices = @transform_1, window_bounds = array<i64: 4, 8, 16>}]} {
    %c0 = arith.constant 0 : index
    %c0_0 = arith.constant 0 : index
    %c0_1 = arith.constant 0 : index
    %0 = vector.load %arg1[%c0, %c0_0, %c0_1] : memref<4x8x16xf32, #tpu.memory_space<vmem>>, vector<4x8x16xf32>
    %c9_i32 = arith.constant 9 : i32
    %1 = tpu.dynamic_rotate %0 by %c9_i32 dim 2 {stride = 1 : si32, stride_dimension = 1 : si32} : vector<4x8x16xf32>, i32 -> vector<4x8x16xf32>
    %2 = tpu.iota {dimensions = array<i32: 0>} : vector<8x16xi32>
    %3 = tpu.iota {dimensions = array<i32: 1>} : vector<8x16xi32>
    %c7_i32 = arith.constant 7 : i32
    %4 = vector.broadcast %c7_i32 : i32 to vector<8x16xi32>
    %5 = arith.addi %3, %4 : vector<8x16xi32>
    %6 = arith.subi %5, %2 : vector<8x16xi32>
    %c16_i32 = arith.constant 16 : i32
    %7 = vector.broadcast %c16_i32 : i32 to vector<8x16xi32>
    %8 = arith.cmpi slt, %6, %7 : vector<8x16xi32>
    %9 = vector.shape_cast %8 : vector<8x16xi1> to vector<1x8x16xi1>
    %cst = arith.constant 0.000000e+00 : f32
    %10 = vector.shape_cast %9 : vector<1x8x16xi1> to vector<1x8x16xi1>
    %11 = vector.broadcast %10 : vector<1x8x16xi1> to vector<4x8x16xi1>
    %12 = vector.broadcast %cst : f32 to vector<4x8x16xf32>
    %13 = arith.select %11, %1, %12 : vector<4x8x16xi1>, vector<4x8x16xf32>
    %c0_2 = arith.constant 0 : index
    %c0_3 = arith.constant 0 : index
    %c0_4 = arith.constant 0 : index
    %14 = vector.load %arg2[%c0_2, %c0_3, %c0_4] : memref<4x8x16xf32, #tpu.memory_space<vmem>>, vector<4x8x16xf32>
    tpu.vector_store %arg2[%c0_2, %c0_3, %c0_4], %13 {strides = array<i32>} : memref<4x8x16xf32, #tpu.memory_space<vmem>>, vector<4x8x16xf32>,
    return
  }
  func.func @transform_0(%arg0: i32) -> (i32, i32, i32) {
    %c0_i32 = arith.constant 0 : i32
    %c0_i32_0 = arith.constant 0 : i32
    %c0_i32_1 = arith.constant 0 : i32
    %c0_i32_2 = arith.constant 0 : i32
    return %c0_i32, %c0_i32_0, %c0_i32_1 : i32, i32, i32
  }
  func.func @transform_1(%arg0: i32) -> (i32, i32, i32) {
    %c0_i32 = arith.constant 0 : i32
    %c0_i32_0 = arith.constant 0 : i32
    %c0_i32_1 = arith.constant 0 : i32
    %c0_i32_2 = arith.constant 0 : i32
    return %c0_i32, %c0_i32_0, %c0_i32_1 : i32, i32, i32
  }
}

module attributes {stable_mosaic.version = 11 : i64} {
  func.func @_linear_kernel(%arg0: i32, %arg1: memref<32x32xbf16, #tpu.memory_space<vmem>>, %arg2: memref<32x96xbf16, #tpu.memory_space<vmem>>, %arg3: memref<1x96xf32, #tpu.memory_space<vmem>>, %arg4: memref<32x96xbf16, #tpu.memory_space<vmem>>) attributes {dimension_semantics = [#tpu.dimension_semantics<parallel>], iteration_bounds = array<i64: 1>, scalar_prefetch = 0 : i64, scratch_operands = 0 : i64, tpu.core_type = #tpu.core_type<tc>, window_params = [{transform_indices = @transform_0, window_bounds = array<i64: 32, 32>}, {pipeline_mode = #tpu.pipeline_mode<synchronous>, transform_indices = @transform_1, window_bounds = array<i64: 32, 96>}, {pipeline_mode = #tpu.pipeline_mode<synchronous>, transform_indices = @transform_2, window_bounds = array<i64: 1, 96>}, {transform_indices = @transform_3, window_bounds = array<i64: 32, 96>}]} {
    %c0 = arith.constant 0 : index
    %c0_0 = arith.constant 0 : index
    %0 = vector.load %arg1[%c0, %c0_0] : memref<32x32xbf16, #tpu.memory_space<vmem>>, vector<32x32xbf16>
    %c0_1 = arith.constant 0 : index
    %c0_2 = arith.constant 0 : index
    %1 = vector.load %arg2[%c0_1, %c0_2] : memref<32x96xbf16, #tpu.memory_space<vmem>>, vector<32x96xbf16>
    %cst = arith.constant dense<0.000000e+00> : vector<32x96xf32>
    %2 = tpu.matmul %0, %1, %cst {dimension_numbers = #tpu.dot_dimension_numbers<[1], [0], [0], [1], [0, 0, 1, 1], [], []>} : vector<32x32xbf16>, vector<32x96xbf16>, vector<32x96xf32> -> vector<32x96xf32>
    %c0_3 = arith.constant 0 : index
    %c0_4 = arith.constant 0 : index
    %3 = vector.load %arg3[%c0_3, %c0_4] : memref<1x96xf32, #tpu.memory_space<vmem>>, vector<1x96xf32>
    %4 = vector.broadcast %3 : vector<1x96xf32> to vector<32x96xf32>
    %5 = arith.addf %2, %4 : vector<32x96xf32>
    %6 = arith.truncf %5 : vector<32x96xf32> to vector<32x96xbf16>
    %c0_5 = arith.constant 0 : index
    %c0_6 = arith.constant 0 : index
    %7 = vector.load %arg4[%c0_5, %c0_6] : memref<32x96xbf16, #tpu.memory_space<vmem>>, vector<32x96xbf16>
    tpu.vector_store %arg4[%c0_5, %c0_6], %6 {strides = array<i32>} : memref<32x96xbf16, #tpu.memory_space<vmem>>, vector<32x96xbf16>,
    return
  }
  func.func @transform_0(%arg0: i32) -> (i32, i32) {
    %c0_i32 = arith.constant 0 : i32
    %c0_i32_0 = arith.constant 0 : i32
    return %arg0, %c0_i32 : i32, i32
  }
  func.func @transform_1(%arg0: i32) -> (i32, i32) {
    %c0_i32 = arith.constant 0 : i32
    %c0_i32_0 = arith.constant 0 : i32
    %c0_i32_1 = arith.constant 0 : i32
    return %c0_i32, %c0_i32_0 : i32, i32
  }
  func.func @transform_2(%arg0: i32) -> (i32, i32) {
    %c0_i32 = arith.constant 0 : i32
    %c0_i32_0 = arith.constant 0 : i32
    %c0_i32_1 = arith.constant 0 : i32
    return %c0_i32, %c0_i32_0 : i32, i32
  }
  func.func @transform_3(%arg0: i32) -> (i32, i32) {
    %c0_i32 = arith.constant 0 : i32
    %c0_i32_0 = arith.constant 0 : i32
    return %arg0, %c0_i32 : i32, i32
  }
}

module attributes {stable_mosaic.version = 11 : i64} {
  func.func @_linear_kernel(%arg0: i32, %arg1: memref<16x32xbf16, #tpu.memory_space<vmem>>, %arg2: memref<32x64xbf16, #tpu.memory_space<vmem>>, %arg3: memref<1x64xf32, #tpu.memory_space<vmem>>, %arg4: memref<16x64xbf16, #tpu.memory_space<vmem>>) attributes {dimension_semantics = [#tpu.dimension_semantics<parallel>], iteration_bounds = array<i64: 1>, scalar_prefetch = 0 : i64, scratch_operands = 0 : i64, tpu.core_type = #tpu.core_type<tc>, window_params = [{transform_indices = @transform_0, window_bounds = array<i64: 16, 32>}, {pipeline_mode = #tpu.pipeline_mode<synchronous>, transform_indices = @transform_1, window_bounds = array<i64: 32, 64>}, {pipeline_mode = #tpu.pipeline_mode<synchronous>, transform_indices = @transform_2, window_bounds = array<i64: 1, 64>}, {transform_indices = @transform_3, window_bounds = array<i64: 16, 64>}]} {
    %c0 = arith.constant 0 : index
    %c0_0 = arith.constant 0 : index
    %0 = vector.load %arg1[%c0, %c0_0] : memref<16x32xbf16, #tpu.memory_space<vmem>>, vector<16x32xbf16>
    %c0_1 = arith.constant 0 : index
    %c0_2 = arith.constant 0 : index
    %1 = vector.load %arg2[%c0_1, %c0_2] : memref<32x64xbf16, #tpu.memory_space<vmem>>, vector<32x64xbf16>
    %cst = arith.constant dense<0.000000e+00> : vector<16x64xf32>
    %2 = tpu.matmul %0, %1, %cst {dimension_numbers = #tpu.dot_dimension_numbers<[1], [0], [0], [1], [0, 0, 1, 1], [], []>} : vector<16x32xbf16>, vector<32x64xbf16>, vector<16x64xf32> -> vector<16x64xf32>
    %c0_3 = arith.constant 0 : index
    %c0_4 = arith.constant 0 : index
    %3 = vector.load %arg3[%c0_3, %c0_4] : memref<1x64xf32, #tpu.memory_space<vmem>>, vector<1x64xf32>
    %4 = vector.broadcast %3 : vector<1x64xf32> to vector<16x64xf32>
    %5 = arith.addf %2, %4 : vector<16x64xf32>
    %6 = arith.truncf %5 : vector<16x64xf32> to vector<16x64xbf16>
    %c0_5 = arith.constant 0 : index
    %c0_6 = arith.constant 0 : index
    %7 = vector.load %arg4[%c0_5, %c0_6] : memref<16x64xbf16, #tpu.memory_space<vmem>>, vector<16x64xbf16>
    tpu.vector_store %arg4[%c0_5, %c0_6], %6 {strides = array<i32>} : memref<16x64xbf16, #tpu.memory_space<vmem>>, vector<16x64xbf16>,
    return
  }
  func.func @transform_0(%arg0: i32) -> (i32, i32) {
    %c0_i32 = arith.constant 0 : i32
    %c0_i32_0 = arith.constant 0 : i32
    return %arg0, %c0_i32 : i32, i32
  }
  func.func @transform_1(%arg0: i32) -> (i32, i32) {
    %c0_i32 = arith.constant 0 : i32
    %c0_i32_0 = arith.constant 0 : i32
    %c0_i32_1 = arith.constant 0 : i32
    return %c0_i32, %c0_i32_0 : i32, i32
  }
  func.func @transform_2(%arg0: i32) -> (i32, i32) {
    %c0_i32 = arith.constant 0 : i32
    %c0_i32_0 = arith.constant 0 : i32
    %c0_i32_1 = arith.constant 0 : i32
    return %c0_i32, %c0_i32_0 : i32, i32
  }
  func.func @transform_3(%arg0: i32) -> (i32, i32) {
    %c0_i32 = arith.constant 0 : i32
    %c0_i32_0 = arith.constant 0 : i32
    return %arg0, %c0_i32 : i32, i32
  }
}

module attributes {stable_mosaic.version = 11 : i64} {
  func.func @_linear_res_ln_kernel(%arg0: i32, %arg1: memref<16x32xbf16, #tpu.memory_space<vmem>>, %arg2: memref<32x32xbf16, #tpu.memory_space<vmem>>, %arg3: memref<1x32xf32, #tpu.memory_space<vmem>>, %arg4: memref<16x32xbf16, #tpu.memory_space<vmem>>, %arg5: memref<1x32xf32, #tpu.memory_space<vmem>>, %arg6: memref<1x32xf32, #tpu.memory_space<vmem>>, %arg7: memref<16x32xbf16, #tpu.memory_space<vmem>>) attributes {dimension_semantics = [#tpu.dimension_semantics<parallel>], iteration_bounds = array<i64: 1>, scalar_prefetch = 0 : i64, scratch_operands = 0 : i64, tpu.core_type = #tpu.core_type<tc>, window_params = [{transform_indices = @transform_0, window_bounds = array<i64: 16, 32>}, {pipeline_mode = #tpu.pipeline_mode<synchronous>, transform_indices = @transform_1, window_bounds = array<i64: 32, 32>}, {pipeline_mode = #tpu.pipeline_mode<synchronous>, transform_indices = @transform_2, window_bounds = array<i64: 1, 32>}, {transform_indices = @transform_3, window_bounds = array<i64: 16, 32>}, {pipeline_mode = #tpu.pipeline_mode<synchronous>, transform_indices = @transform_4, window_bounds = array<i64: 1, 32>}, {pipeline_mode = #tpu.pipeline_mode<synchronous>, transform_indices = @transform_5, window_bounds = array<i64: 1, 32>}, {transform_indices = @transform_6, window_bounds = array<i64: 16, 32>}]} {
    %c0 = arith.constant 0 : index
    %c0_0 = arith.constant 0 : index
    %0 = vector.load %arg1[%c0, %c0_0] : memref<16x32xbf16, #tpu.memory_space<vmem>>, vector<16x32xbf16>
    %c0_1 = arith.constant 0 : index
    %c0_2 = arith.constant 0 : index
    %1 = vector.load %arg2[%c0_1, %c0_2] : memref<32x32xbf16, #tpu.memory_space<vmem>>, vector<32x32xbf16>
    %cst = arith.constant dense<0.000000e+00> : vector<16x32xf32>
    %2 = tpu.matmul %0, %1, %cst {dimension_numbers = #tpu.dot_dimension_numbers<[1], [0], [0], [1], [0, 0, 1, 1], [], []>} : vector<16x32xbf16>, vector<32x32xbf16>, vector<16x32xf32> -> vector<16x32xf32>
    %c0_3 = arith.constant 0 : index
    %c0_4 = arith.constant 0 : index
    %3 = vector.load %arg3[%c0_3, %c0_4] : memref<1x32xf32, #tpu.memory_space<vmem>>, vector<1x32xf32>
    %4 = vector.broadcast %3 : vector<1x32xf32> to vector<16x32xf32>
    %5 = arith.addf %2, %4 : vector<16x32xf32>
    %c0_5 = arith.constant 0 : index
    %c0_6 = arith.constant 0 : index
    %6 = vector.load %arg4[%c0_5, %c0_6] : memref<16x32xbf16, #tpu.memory_space<vmem>>, vector<16x32xbf16>
    %7 = arith.extf %6 : vector<16x32xbf16> to vector<16x32xf32>
    %8 = arith.addf %7, %5 : vector<16x32xf32>
    %cst_7 = arith.constant dense<0.000000e+00> : vector<16xf32>
    %9 = vector.multi_reduction <add>, %8, %cst_7 [1] : vector<16x32xf32> to vector<16xf32>
    %10 = vector.shape_cast %9 : vector<16xf32> to vector<16x1xf32>
    %cst_8 = arith.constant 3.200000e+01 : f32
    %11 = vector.broadcast %cst_8 : f32 to vector<16x1xf32>
    %12 = arith.divf %10, %11 : vector<16x1xf32>
    %13 = vector.broadcast %12 : vector<16x1xf32> to vector<16x32xf32>
    %14 = arith.subf %8, %13 : vector<16x32xf32>
    %15 = arith.mulf %14, %14 : vector<16x32xf32>
    %cst_9 = arith.constant dense<0.000000e+00> : vector<16xf32>
    %16 = vector.multi_reduction <add>, %15, %cst_9 [1] : vector<16x32xf32> to vector<16xf32>
    %17 = vector.shape_cast %16 : vector<16xf32> to vector<16x1xf32>
    %cst_10 = arith.constant 3.200000e+01 : f32
    %18 = vector.broadcast %cst_10 : f32 to vector<16x1xf32>
    %19 = arith.divf %17, %18 : vector<16x1xf32>
    %20 = vector.broadcast %12 : vector<16x1xf32> to vector<16x32xf32>
    %21 = arith.subf %8, %20 : vector<16x32xf32>
    %cst_11 = arith.constant 9.99999974E-6 : f32
    %22 = vector.broadcast %cst_11 : f32 to vector<16x1xf32>
    %23 = arith.addf %19, %22 : vector<16x1xf32>
    %24 = math.rsqrt %23 : vector<16x1xf32>
    %25 = vector.broadcast %24 : vector<16x1xf32> to vector<16x32xf32>
    %26 = arith.mulf %21, %25 : vector<16x32xf32>
    %c0_12 = arith.constant 0 : index
    %c0_13 = arith.constant 0 : index
    %27 = vector.load %arg5[%c0_12, %c0_13] : memref<1x32xf32, #tpu.memory_space<vmem>>, vector<1x32xf32>
    %28 = vector.broadcast %27 : vector<1x32xf32> to vector<16x32xf32>
    %29 = arith.mulf %26, %28 : vector<16x32xf32>
    %c0_14 = arith.constant 0 : index
    %c0_15 = arith.constant 0 : index
    %30 = vector.load %arg6[%c0_14, %c0_15] : memref<1x32xf32, #tpu.memory_space<vmem>>, vector<1x32xf32>
    %31 = vector.broadcast %30 : vector<1x32xf32> to vector<16x32xf32>
    %32 = arith.addf %29, %31 : vector<16x32xf32>
    %33 = arith.truncf %32 : vector<16x32xf32> to vector<16x32xbf16>
    %c0_16 = arith.constant 0 : index
    %c0_17 = arith.constant 0 : index
    %34 = vector.load %arg7[%c0_16, %c0_17] : memref<16x32xbf16, #tpu.memory_space<vmem>>, vector<16x32xbf16>
    tpu.vector_store %arg7[%c0_16, %c0_17], %33 {strides = array<i32>} : memref<16x32xbf16, #tpu.memory_space<vmem>>, vector<16x32xbf16>,
    return
  }
  func.func @transform_0(%arg0: i32) -> (i32, i32) {
    %c0_i32 = arith.constant 0 : i32
    %c0_i32_0 = arith.constant 0 : i32
    return %arg0, %c0_i32 : i32, i32
  }
  func.func @transform_1(%arg0: i32) -> (i32, i32) {
    %c0_i32 = arith.constant 0 : i32
    %c0_i32_0 = arith.constant 0 : i32
    %c0_i32_1 = arith.constant 0 : i32
    return %c0_i32, %c0_i32_0 : i32, i32
  }
  func.func @transform_2(%arg0: i32) -> (i32, i32) {
    %c0_i32 = arith.constant 0 : i32
    %c0_i32_0 = arith.constant 0 : i32
    %c0_i32_1 = arith.constant 0 : i32
    return %c0_i32, %c0_i32_0 : i32, i32
  }
  func.func @transform_3(%arg0: i32) -> (i32, i32) {
    %c0_i32 = arith.constant 0 : i32
    %c0_i32_0 = arith.constant 0 : i32
    return %arg0, %c0_i32 : i32, i32
  }
  func.func @transform_4(%arg0: i32) -> (i32, i32) {
    %c0_i32 = arith.constant 0 : i32
    %c0_i32_0 = arith.constant 0 : i32
    %c0_i32_1 = arith.constant 0 : i32
    return %c0_i32, %c0_i32_0 : i32, i32
  }
  func.func @transform_5(%arg0: i32) -> (i32, i32) {
    %c0_i32 = arith.constant 0 : i32
    %c0_i32_0 = arith.constant 0 : i32
    %c0_i32_1 = arith.constant 0 : i32
    return %c0_i32, %c0_i32_0 : i32, i32
  }
  func.func @transform_6(%arg0: i32) -> (i32, i32) {
    %c0_i32 = arith.constant 0 : i32
    %c0_i32_0 = arith.constant 0 : i32
    return %arg0, %c0_i32 : i32, i32
  }
}

module attributes {stable_mosaic.version = 11 : i64} {
  func.func @_ff_block_kernel(%arg0: i32, %arg1: memref<16x32xbf16, #tpu.memory_space<vmem>>, %arg2: memref<32x64xbf16, #tpu.memory_space<vmem>>, %arg3: memref<1x64xf32, #tpu.memory_space<vmem>>, %arg4: memref<64x32xbf16, #tpu.memory_space<vmem>>, %arg5: memref<1x32xf32, #tpu.memory_space<vmem>>, %arg6: memref<1x32xf32, #tpu.memory_space<vmem>>, %arg7: memref<1x32xf32, #tpu.memory_space<vmem>>, %arg8: memref<16x32xbf16, #tpu.memory_space<vmem>>) attributes {dimension_semantics = [#tpu.dimension_semantics<parallel>], iteration_bounds = array<i64: 1>, scalar_prefetch = 0 : i64, scratch_operands = 0 : i64, tpu.core_type = #tpu.core_type<tc>, window_params = [{transform_indices = @transform_0, window_bounds = array<i64: 16, 32>}, {pipeline_mode = #tpu.pipeline_mode<synchronous>, transform_indices = @transform_1, window_bounds = array<i64: 32, 64>}, {pipeline_mode = #tpu.pipeline_mode<synchronous>, transform_indices = @transform_2, window_bounds = array<i64: 1, 64>}, {pipeline_mode = #tpu.pipeline_mode<synchronous>, transform_indices = @transform_3, window_bounds = array<i64: 64, 32>}, {pipeline_mode = #tpu.pipeline_mode<synchronous>, transform_indices = @transform_4, window_bounds = array<i64: 1, 32>}, {pipeline_mode = #tpu.pipeline_mode<synchronous>, transform_indices = @transform_5, window_bounds = array<i64: 1, 32>}, {pipeline_mode = #tpu.pipeline_mode<synchronous>, transform_indices = @transform_6, window_bounds = array<i64: 1, 32>}, {transform_indices = @transform_7, window_bounds = array<i64: 16, 32>}]} {
    %c0 = arith.constant 0 : index
    %c0_0 = arith.constant 0 : index
    %0 = vector.load %arg1[%c0, %c0_0] : memref<16x32xbf16, #tpu.memory_space<vmem>>, vector<16x32xbf16>
    %c0_1 = arith.constant 0 : index
    %c0_2 = arith.constant 0 : index
    %1 = vector.load %arg2[%c0_1, %c0_2] : memref<32x64xbf16, #tpu.memory_space<vmem>>, vector<32x64xbf16>
    %cst = arith.constant dense<0.000000e+00> : vector<16x64xf32>
    %2 = tpu.matmul %0, %1, %cst {dimension_numbers = #tpu.dot_dimension_numbers<[1], [0], [0], [1], [0, 0, 1, 1], [], []>} : vector<16x32xbf16>, vector<32x64xbf16>, vector<16x64xf32> -> vector<16x64xf32>
    %c0_3 = arith.constant 0 : index
    %c0_4 = arith.constant 0 : index
    %3 = vector.load %arg3[%c0_3, %c0_4] : memref<1x64xf32, #tpu.memory_space<vmem>>, vector<1x64xf32>
    %4 = vector.broadcast %3 : vector<1x64xf32> to vector<16x64xf32>
    %5 = arith.addf %2, %4 : vector<16x64xf32>
    %cst_5 = arith.constant 0.000000e+00 : f32
    %6 = vector.broadcast %cst_5 : f32 to vector<16x64xf32>
    %7 = arith.maximumf %5, %6 : vector<16x64xf32>
    %8 = arith.truncf %7 : vector<16x64xf32> to vector<16x64xbf16>
    %c0_6 = arith.constant 0 : index
    %c0_7 = arith.constant 0 : index
    %9 = vector.load %arg4[%c0_6, %c0_7] : memref<64x32xbf16, #tpu.memory_space<vmem>>, vector<64x32xbf16>
    %cst_8 = arith.constant dense<0.000000e+00> : vector<16x32xf32>
    %10 = tpu.matmul %8, %9, %cst_8 {dimension_numbers = #tpu.dot_dimension_numbers<[1], [0], [0], [1], [0, 0, 1, 1], [], []>} : vector<16x64xbf16>, vector<64x32xbf16>, vector<16x32xf32> -> vector<16x32xf32>
    %c0_9 = arith.constant 0 : index
    %c0_10 = arith.constant 0 : index
    %11 = vector.load %arg5[%c0_9, %c0_10] : memref<1x32xf32, #tpu.memory_space<vmem>>, vector<1x32xf32>
    %12 = vector.broadcast %11 : vector<1x32xf32> to vector<16x32xf32>
    %13 = arith.addf %10, %12 : vector<16x32xf32>
    %14 = arith.extf %0 : vector<16x32xbf16> to vector<16x32xf32>
    %15 = arith.addf %14, %13 : vector<16x32xf32>
    %cst_11 = arith.constant dense<0.000000e+00> : vector<16xf32>
    %16 = vector.multi_reduction <add>, %15, %cst_11 [1] : vector<16x32xf32> to vector<16xf32>
    %17 = vector.shape_cast %16 : vector<16xf32> to vector<16x1xf32>
    %cst_12 = arith.constant 3.200000e+01 : f32
    %18 = vector.broadcast %cst_12 : f32 to vector<16x1xf32>
    %19 = arith.divf %17, %18 : vector<16x1xf32>
    %20 = vector.broadcast %19 : vector<16x1xf32> to vector<16x32xf32>
    %21 = arith.subf %15, %20 : vector<16x32xf32>
    %22 = arith.mulf %21, %21 : vector<16x32xf32>
    %cst_13 = arith.constant dense<0.000000e+00> : vector<16xf32>
    %23 = vector.multi_reduction <add>, %22, %cst_13 [1] : vector<16x32xf32> to vector<16xf32>
    %24 = vector.shape_cast %23 : vector<16xf32> to vector<16x1xf32>
    %cst_14 = arith.constant 3.200000e+01 : f32
    %25 = vector.broadcast %cst_14 : f32 to vector<16x1xf32>
    %26 = arith.divf %24, %25 : vector<16x1xf32>
    %27 = vector.broadcast %19 : vector<16x1xf32> to vector<16x32xf32>
    %28 = arith.subf %15, %27 : vector<16x32xf32>
    %cst_15 = arith.constant 9.99999974E-6 : f32
    %29 = vector.broadcast %cst_15 : f32 to vector<16x1xf32>
    %30 = arith.addf %26, %29 : vector<16x1xf32>
    %31 = math.rsqrt %30 : vector<16x1xf32>
    %32 = vector.broadcast %31 : vector<16x1xf32> to vector<16x32xf32>
    %33 = arith.mulf %28, %32 : vector<16x32xf32>
    %c0_16 = arith.constant 0 : index
    %c0_17 = arith.constant 0 : index
    %34 = vector.load %arg6[%c0_16, %c0_17] : memref<1x32xf32, #tpu.memory_space<vmem>>, vector<1x32xf32>
    %35 = vector.broadcast %34 : vector<1x32xf32> to vector<16x32xf32>
    %36 = arith.mulf %33, %35 : vector<16x32xf32>
    %c0_18 = arith.constant 0 : index
    %c0_19 = arith.constant 0 : index
    %37 = vector.load %arg7[%c0_18, %c0_19] : memref<1x32xf32, #tpu.memory_space<vmem>>, vector<1x32xf32>
    %38 = vector.broadcast %37 : vector<1x32xf32> to vector<16x32xf32>
    %39 = arith.addf %36, %38 : vector<16x32xf32>
    %40 = arith.truncf %39 : vector<16x32xf32> to vector<16x32xbf16>
    %c0_20 = arith.constant 0 : index
    %c0_21 = arith.constant 0 : index
    %41 = vector.load %arg8[%c0_20, %c0_21] : memref<16x32xbf16, #tpu.memory_space<vmem>>, vector<16x32xbf16>
    tpu.vector_store %arg8[%c0_20, %c0_21], %40 {strides = array<i32>} : memref<16x32xbf16, #tpu.memory_space<vmem>>, vector<16x32xbf16>,
    return
  }
  func.func @transform_0(%arg0: i32) -> (i32, i32) {
    %c0_i32 = arith.constant 0 : i32
    %c0_i32_0 = arith.constant 0 : i32
    return %arg0, %c0_i32 : i32, i32
  }
  func.func @transform_1(%arg0: i32) -> (i32, i32) {
    %c0_i32 = arith.constant 0 : i32
    %c0_i32_0 = arith.constant 0 : i32
    %c0_i32_1 = arith.constant 0 : i32
    return %c0_i32, %c0_i32_0 : i32, i32
  }
  func.func @transform_2(%arg0: i32) -> (i32, i32) {
    %c0_i32 = arith.constant 0 : i32
    %c0_i32_0 = arith.constant 0 : i32
    %c0_i32_1 = arith.constant 0 : i32
    return %c0_i32, %c0_i32_0 : i32, i32
  }
  func.func @transform_3(%arg0: i32) -> (i32, i32) {
    %c0_i32 = arith.constant 0 : i32
    %c0_i32_0 = arith.constant 0 : i32
    %c0_i32_1 = arith.constant 0 : i32
    return %c0_i32, %c0_i32_0 : i32, i32
  }
  func.func @transform_4(%arg0: i32) -> (i32, i32) {
    %c0_i32 = arith.constant 0 : i32
    %c0_i32_0 = arith.constant 0 : i32
    %c0_i32_1 = arith.constant 0 : i32
    return %c0_i32, %c0_i32_0 : i32, i32
  }
  func.func @transform_5(%arg0: i32) -> (i32, i32) {
    %c0_i32 = arith.constant 0 : i32
    %c0_i32_0 = arith.constant 0 : i32
    %c0_i32_1 = arith.constant 0 : i32
    return %c0_i32, %c0_i32_0 : i32, i32
  }
  func.func @transform_6(%arg0: i32) -> (i32, i32) {
    %c0_i32 = arith.constant 0 : i32
    %c0_i32_0 = arith.constant 0 : i32
    %c0_i32_1 = arith.constant 0 : i32
    return %c0_i32, %c0_i32_0 : i32, i32
  }
  func.func @transform_7(%arg0: i32) -> (i32, i32) {
    %c0_i32 = arith.constant 0 : i32
    %c0_i32_0 = arith.constant 0 : i32
    return %arg0, %c0_i32 : i32, i32
  }
}

module attributes {stable_mosaic.version = 11 : i64} {
  func.func @_fused_attn_kernel(%arg0: i32, %arg1: i32, %arg2: memref<1x4x8x8xbf16, #tpu.memory_space<vmem>>, %arg3: memref<1x4x16x8xbf16, #tpu.memory_space<vmem>>, %arg4: memref<1x4x16x8xbf16, #tpu.memory_space<vmem>>, %arg5: memref<4x16x8xbf16, #tpu.memory_space<vmem>>, %arg6: memref<4x1x8xbf16, #tpu.memory_space<vmem>>, %arg7: memref<4x1x8xbf16, #tpu.memory_space<vmem>>, %arg8: memref<8x16xf32, #tpu.memory_space<vmem>>, %arg9: memref<1x8x32xbf16, #tpu.memory_space<vmem>>) attributes {dimension_semantics = [#tpu.dimension_semantics<parallel>, #tpu.dimension_semantics<parallel>], iteration_bounds = array<i64: 2, 1>, scalar_prefetch = 0 : i64, scratch_operands = 0 : i64, tpu.core_type = #tpu.core_type<tc>, window_params = [{transform_indices = @transform_0, window_bounds = array<i64: 1, 4, 8, 8>}, {transform_indices = @transform_1, window_bounds = array<i64: 1, 4, 16, 8>}, {transform_indices = @transform_2, window_bounds = array<i64: 1, 4, 16, 8>}, {transform_indices = @transform_3, window_bounds = array<i64: 4, 16, 8>}, {transform_indices = @transform_4, window_bounds = array<i64: 4, 1, 8>}, {transform_indices = @transform_5, window_bounds = array<i64: 4, 1, 8>}, {pipeline_mode = #tpu.pipeline_mode<synchronous>, transform_indices = @transform_6, window_bounds = array<i64: 8, 16>}, {transform_indices = @transform_7, window_bounds = array<i64: 1, 8, 32>}]} {
    %c0 = arith.constant 0 : index
    %c0_0 = arith.constant 0 : index
    %c0_1 = arith.constant 0 : index
    %c0_2 = arith.constant 0 : index
    %0 = vector.load %arg2[%c0, %c0_0, %c0_1, %c0_2] : memref<1x4x8x8xbf16, #tpu.memory_space<vmem>>, vector<1x4x8x8xbf16>
    %1 = vector.shape_cast %0 : vector<1x4x8x8xbf16> to vector<4x8x8xbf16>
    %c0_3 = arith.constant 0 : index
    %c0_4 = arith.constant 0 : index
    %c0_5 = arith.constant 0 : index
    %2 = vector.load %arg6[%c0_3, %c0_4, %c0_5] : memref<4x1x8xbf16, #tpu.memory_space<vmem>>, vector<4x1x8xbf16>
    %3 = vector.broadcast %2 : vector<4x1x8xbf16> to vector<4x8x8xbf16>
    %4 = arith.addf %1, %3 : vector<4x8x8xbf16>
    %c0_6 = arith.constant 0 : index
    %c0_7 = arith.constant 0 : index
    %c0_8 = arith.constant 0 : index
    %5 = vector.load %arg7[%c0_6, %c0_7, %c0_8] : memref<4x1x8xbf16, #tpu.memory_space<vmem>>, vector<4x1x8xbf16>
    %6 = vector.broadcast %5 : vector<4x1x8xbf16> to vector<4x8x8xbf16>
    %7 = arith.addf %1, %6 : vector<4x8x8xbf16>
    %c0_9 = arith.constant 0 : index
    %c0_10 = arith.constant 0 : index
    %c0_11 = arith.constant 0 : index
    %c0_12 = arith.constant 0 : index
    %8 = vector.load %arg3[%c0_9, %c0_10, %c0_11, %c0_12] : memref<1x4x16x8xbf16, #tpu.memory_space<vmem>>, vector<1x4x16x8xbf16>
    %9 = vector.shape_cast %8 : vector<1x4x16x8xbf16> to vector<4x16x8xbf16>
    "tpu.trace_start"() <{level = 10 : i32, message = "nqd,nkd->nqk"}> : () -> ()
    %cst = arith.constant dense<0.000000e+00> : vector<4x8x16xf32>
    %10 = tpu.matmul %4, %9, %cst {dimension_numbers = #tpu.dot_dimension_numbers<[2], [2], [1], [1], [0, 0, 0, 1, 1, 1], [0], [0]>} : vector<4x8x8xbf16>, vector<4x16x8xbf16>, vector<4x8x16xf32> -> vector<4x8x16xf32>
    "tpu.trace_stop"() : () -> ()
    %c0_13 = arith.constant 0 : index
    %c0_14 = arith.constant 0 : index
    %c0_15 = arith.constant 0 : index
    %11 = vector.load %arg5[%c0_13, %c0_14, %c0_15] : memref<4x16x8xbf16, #tpu.memory_space<vmem>>, vector<4x16x8xbf16>
    "tpu.trace_start"() <{level = 10 : i32, message = "nqd,nkd->nqk"}> : () -> ()
    %cst_16 = arith.constant dense<0.000000e+00> : vector<4x8x16xf32>
    %12 = tpu.matmul %7, %11, %cst_16 {dimension_numbers = #tpu.dot_dimension_numbers<[2], [2], [1], [1], [0, 0, 0, 1, 1, 1], [0], [0]>} : vector<4x8x8xbf16>, vector<4x16x8xbf16>, vector<4x8x16xf32> -> vector<4x8x16xf32>
    "tpu.trace_stop"() : () -> ()
    %13 = tpu.iota {dimensions = array<i32: 0>} : vector<8x16xi32>
    %cst_17 = arith.constant 0.000000e+00 : f32
    %14 = vector.broadcast %cst_17 : f32 to vector<4x8x16xf32>
    %15 = vector.extract_strided_slice %12 {offsets = [0, 0, 7], sizes = [4, 8, 9], strides = [1, 1, 1]} : vector<4x8x16xf32> to vector<4x8x9xf32>
    %cst_18 = arith.constant 0.000000e+00 : f32
    %16 = vector.broadcast %cst_18 : f32 to vector<4x8x7xf32>
    %17 = tpu.concatenate %15, %16 in 2 : vector<4x8x9xf32>, vector<4x8x7xf32> -> vector<4x8x16xf32>
    %c0_i32 = arith.constant 0 : i32
    %18 = vector.broadcast %c0_i32 : i32 to vector<8x16xi32>
    %19 = arith.cmpi eq, %13, %18 : vector<8x16xi32>
    %cst_19 = arith.constant 0.000000e+00 : f32
    %20 = vector.shape_cast %19 : vector<8x16xi1> to vector<1x8x16xi1>
    %21 = vector.broadcast %20 : vector<1x8x16xi1> to vector<4x8x16xi1>
    %22 = vector.broadcast %cst_19 : f32 to vector<4x8x16xf32>
    %23 = arith.select %21, %17, %22 : vector<4x8x16xi1>, vector<4x8x16xf32>
    %24 = arith.addf %14, %23 : vector<4x8x16xf32>
    %25 = vector.extract_strided_slice %12 {offsets = [0, 0, 6], sizes = [4, 8, 10], strides = [1, 1, 1]} : vector<4x8x16xf32> to vector<4x8x10xf32>
    %cst_20 = arith.constant 0.000000e+00 : f32
    %26 = vector.broadcast %cst_20 : f32 to vector<4x8x6xf32>
    %27 = tpu.concatenate %25, %26 in 2 : vector<4x8x10xf32>, vector<4x8x6xf32> -> vector<4x8x16xf32>
    %c1_i32 = arith.constant 1 : i32
    %28 = vector.broadcast %c1_i32 : i32 to vector<8x16xi32>
    %29 = arith.cmpi eq, %13, %28 : vector<8x16xi32>
    %cst_21 = arith.constant 0.000000e+00 : f32
    %30 = vector.shape_cast %29 : vector<8x16xi1> to vector<1x8x16xi1>
    %31 = vector.broadcast %30 : vector<1x8x16xi1> to vector<4x8x16xi1>
    %32 = vector.broadcast %cst_21 : f32 to vector<4x8x16xf32>
    %33 = arith.select %31, %27, %32 : vector<4x8x16xi1>, vector<4x8x16xf32>
    %34 = arith.addf %24, %33 : vector<4x8x16xf32>
    %35 = vector.extract_strided_slice %12 {offsets = [0, 0, 5], sizes = [4, 8, 11], strides = [1, 1, 1]} : vector<4x8x16xf32> to vector<4x8x11xf32>
    %cst_22 = arith.constant 0.000000e+00 : f32
    %36 = vector.broadcast %cst_22 : f32 to vector<4x8x5xf32>
    %37 = tpu.concatenate %35, %36 in 2 : vector<4x8x11xf32>, vector<4x8x5xf32> -> vector<4x8x16xf32>
    %c2_i32 = arith.constant 2 : i32
    %38 = vector.broadcast %c2_i32 : i32 to vector<8x16xi32>
    %39 = arith.cmpi eq, %13, %38 : vector<8x16xi32>
    %cst_23 = arith.constant 0.000000e+00 : f32
    %40 = vector.shape_cast %39 : vector<8x16xi1> to vector<1x8x16xi1>
    %41 = vector.broadcast %40 : vector<1x8x16xi1> to vector<4x8x16xi1>
    %42 = vector.broadcast %cst_23 : f32 to vector<4x8x16xf32>
    %43 = arith.select %41, %37, %42 : vector<4x8x16xi1>, vector<4x8x16xf32>
    %44 = arith.addf %34, %43 : vector<4x8x16xf32>
    %45 = vector.extract_strided_slice %12 {offsets = [0, 0, 4], sizes = [4, 8, 12], strides = [1, 1, 1]} : vector<4x8x16xf32> to vector<4x8x12xf32>
    %cst_24 = arith.constant 0.000000e+00 : f32
    %46 = vector.broadcast %cst_24 : f32 to vector<4x8x4xf32>
    %47 = tpu.concatenate %45, %46 in 2 : vector<4x8x12xf32>, vector<4x8x4xf32> -> vector<4x8x16xf32>
    %c3_i32 = arith.constant 3 : i32
    %48 = vector.broadcast %c3_i32 : i32 to vector<8x16xi32>
    %49 = arith.cmpi eq, %13, %48 : vector<8x16xi32>
    %cst_25 = arith.constant 0.000000e+00 : f32
    %50 = vector.shape_cast %49 : vector<8x16xi1> to vector<1x8x16xi1>
    %51 = vector.broadcast %50 : vector<1x8x16xi1> to vector<4x8x16xi1>
    %52 = vector.broadcast %cst_25 : f32 to vector<4x8x16xf32>
    %53 = arith.select %51, %47, %52 : vector<4x8x16xi1>, vector<4x8x16xf32>
    %54 = arith.addf %44, %53 : vector<4x8x16xf32>
    %55 = vector.extract_strided_slice %12 {offsets = [0, 0, 3], sizes = [4, 8, 13], strides = [1, 1, 1]} : vector<4x8x16xf32> to vector<4x8x13xf32>
    %cst_26 = arith.constant 0.000000e+00 : f32
    %56 = vector.broadcast %cst_26 : f32 to vector<4x8x3xf32>
    %57 = tpu.concatenate %55, %56 in 2 : vector<4x8x13xf32>, vector<4x8x3xf32> -> vector<4x8x16xf32>
    %c4_i32 = arith.constant 4 : i32
    %58 = vector.broadcast %c4_i32 : i32 to vector<8x16xi32>
    %59 = arith.cmpi eq, %13, %58 : vector<8x16xi32>
    %cst_27 = arith.constant 0.000000e+00 : f32
    %60 = vector.shape_cast %59 : vector<8x16xi1> to vector<1x8x16xi1>
    %61 = vector.broadcast %60 : vector<1x8x16xi1> to vector<4x8x16xi1>
    %62 = vector.broadcast %cst_27 : f32 to vector<4x8x16xf32>
    %63 = arith.select %61, %57, %62 : vector<4x8x16xi1>, vector<4x8x16xf32>
    %64 = arith.addf %54, %63 : vector<4x8x16xf32>
    %65 = vector.extract_strided_slice %12 {offsets = [0, 0, 2], sizes = [4, 8, 14], strides = [1, 1, 1]} : vector<4x8x16xf32> to vector<4x8x14xf32>
    %cst_28 = arith.constant 0.000000e+00 : f32
    %66 = vector.broadcast %cst_28 : f32 to vector<4x8x2xf32>
    %67 = tpu.concatenate %65, %66 in 2 : vector<4x8x14xf32>, vector<4x8x2xf32> -> vector<4x8x16xf32>
    %c5_i32 = arith.constant 5 : i32
    %68 = vector.broadcast %c5_i32 : i32 to vector<8x16xi32>
    %69 = arith.cmpi eq, %13, %68 : vector<8x16xi32>
    %cst_29 = arith.constant 0.000000e+00 : f32
    %70 = vector.shape_cast %69 : vector<8x16xi1> to vector<1x8x16xi1>
    %71 = vector.broadcast %70 : vector<1x8x16xi1> to vector<4x8x16xi1>
    %72 = vector.broadcast %cst_29 : f32 to vector<4x8x16xf32>
    %73 = arith.select %71, %67, %72 : vector<4x8x16xi1>, vector<4x8x16xf32>
    %74 = arith.addf %64, %73 : vector<4x8x16xf32>
    %75 = vector.extract_strided_slice %12 {offsets = [0, 0, 1], sizes = [4, 8, 15], strides = [1, 1, 1]} : vector<4x8x16xf32> to vector<4x8x15xf32>
    %cst_30 = arith.constant 0.000000e+00 : f32
    %76 = vector.broadcast %cst_30 : f32 to vector<4x8x1xf32>
    %77 = tpu.concatenate %75, %76 in 2 : vector<4x8x15xf32>, vector<4x8x1xf32> -> vector<4x8x16xf32>
    %c6_i32 = arith.constant 6 : i32
    %78 = vector.broadcast %c6_i32 : i32 to vector<8x16xi32>
    %79 = arith.cmpi eq, %13, %78 : vector<8x16xi32>
    %cst_31 = arith.constant 0.000000e+00 : f32
    %80 = vector.shape_cast %79 : vector<8x16xi1> to vector<1x8x16xi1>
    %81 = vector.broadcast %80 : vector<1x8x16xi1> to vector<4x8x16xi1>
    %82 = vector.broadcast %cst_31 : f32 to vector<4x8x16xf32>
    %83 = arith.select %81, %77, %82 : vector<4x8x16xi1>, vector<4x8x16xf32>
    %84 = arith.addf %74, %83 : vector<4x8x16xf32>
    %c7_i32 = arith.constant 7 : i32
    %85 = vector.broadcast %c7_i32 : i32 to vector<8x16xi32>
    %86 = arith.cmpi eq, %13, %85 : vector<8x16xi32>
    %cst_32 = arith.constant 0.000000e+00 : f32
    %87 = vector.shape_cast %86 : vector<8x16xi1> to vector<1x8x16xi1>
    %88 = vector.broadcast %87 : vector<1x8x16xi1> to vector<4x8x16xi1>
    %89 = vector.broadcast %cst_32 : f32 to vector<4x8x16xf32>
    %90 = arith.select %88, %12, %89 : vector<4x8x16xi1>, vector<4x8x16xf32>
    %91 = arith.addf %84, %90 : vector<4x8x16xf32>
    %92 = arith.addf %10, %91 : vector<4x8x16xf32>
    %cst_33 = arith.constant 0.353553385 : f32
    %93 = vector.broadcast %cst_33 : f32 to vector<4x8x16xf32>
    %94 = arith.mulf %92, %93 : vector<4x8x16xf32>
    %c0_34 = arith.constant 0 : index
    %c0_35 = arith.constant 0 : index
    %95 = vector.load %arg8[%c0_34, %c0_35] : memref<8x16xf32, #tpu.memory_space<vmem>>, vector<8x16xf32>
    %96 = vector.shape_cast %95 : vector<8x16xf32> to vector<1x8x16xf32>
    %97 = vector.broadcast %96 : vector<1x8x16xf32> to vector<4x8x16xf32>
    %98 = arith.addf %94, %97 : vector<4x8x16xf32>
    %cst_36 = arith.constant dense<0xFF800000> : vector<4x8xf32>
    %99 = vector.multi_reduction <maximumf>, %98, %cst_36 [2] : vector<4x8x16xf32> to vector<4x8xf32>
    %100 = vector.shape_cast %99 : vector<4x8xf32> to vector<4x8x1xf32>
    %101 = vector.broadcast %100 : vector<4x8x1xf32> to vector<4x8x16xf32>
    %102 = arith.subf %98, %101 : vector<4x8x16xf32>
    %103 = math.exp %102 : vector<4x8x16xf32>
    %cst_37 = arith.constant dense<0.000000e+00> : vector<4x8xf32>
    %104 = vector.multi_reduction <add>, %103, %cst_37 [2] : vector<4x8x16xf32> to vector<4x8xf32>
    %105 = vector.shape_cast %104 : vector<4x8xf32> to vector<4x8x1xf32>
    %106 = tpu.reciprocal %105 {approx = true} : vector<4x8x1xf32> -> vector<4x8x1xf32>
    %107 = vector.broadcast %106 : vector<4x8x1xf32> to vector<4x8x16xf32>
    %108 = arith.mulf %103, %107 : vector<4x8x16xf32>
    %109 = arith.truncf %108 : vector<4x8x16xf32> to vector<4x8x16xbf16>
    %c0_38 = arith.constant 0 : index
    %c0_39 = arith.constant 0 : index
    %c0_40 = arith.constant 0 : index
    %c0_41 = arith.constant 0 : index
    %110 = vector.load %arg4[%c0_38, %c0_39, %c0_40, %c0_41] : memref<1x4x16x8xbf16, #tpu.memory_space<vmem>>, vector<1x4x16x8xbf16>
    %111 = vector.shape_cast %110 : vector<1x4x16x8xbf16> to vector<4x16x8xbf16>
    "tpu.trace_start"() <{level = 10 : i32, message = "nqk,nkd->nqd"}> : () -> ()
    %cst_42 = arith.constant dense<0.000000e+00> : vector<4x8x8xf32>
    %112 = tpu.matmul %109, %111, %cst_42 {dimension_numbers = #tpu.dot_dimension_numbers<[2], [1], [1], [2], [0, 0, 0, 1, 1, 2], [0], [0]>} : vector<4x8x16xbf16>, vector<4x16x8xbf16>, vector<4x8x8xf32> -> vector<4x8x8xf32>
    "tpu.trace_stop"() : () -> ()
    %113 = vector.extract_strided_slice %112 {offsets = [0, 0, 0], sizes = [1, 8, 8], strides = [1, 1, 1]} : vector<4x8x8xf32> to vector<1x8x8xf32>
    %114 = vector.shape_cast %113 : vector<1x8x8xf32> to vector<8x8xf32>
    %115 = arith.truncf %114 : vector<8x8xf32> to vector<8x8xbf16>
    %c0_43 = arith.constant 0 : index
    %c0_44 = arith.constant 0 : index
    %c0_45 = arith.constant 0 : index
    %116 = vector.load %arg9[%c0_43, %c0_44, %c0_45] : memref<1x8x32xbf16, #tpu.memory_space<vmem>>, vector<1x8x8xbf16>
    %117 = vector.shape_cast %116 : vector<1x8x8xbf16> to vector<8x8xbf16>
    %118 = vector.shape_cast %115 : vector<8x8xbf16> to vector<1x8x8xbf16>
    tpu.vector_store %arg9[%c0_43, %c0_44, %c0_45], %118 {strides = array<i32>} : memref<1x8x32xbf16, #tpu.memory_space<vmem>>, vector<1x8x8xbf16>,
    %119 = vector.extract_strided_slice %112 {offsets = [1, 0, 0], sizes = [1, 8, 8], strides = [1, 1, 1]} : vector<4x8x8xf32> to vector<1x8x8xf32>
    %120 = vector.shape_cast %119 : vector<1x8x8xf32> to vector<8x8xf32>
    %121 = arith.truncf %120 : vector<8x8xf32> to vector<8x8xbf16>
    %c0_46 = arith.constant 0 : index
    %c0_47 = arith.constant 0 : index
    %c8 = arith.constant 8 : index
    %122 = vector.load %arg9[%c0_46, %c0_47, %c8] : memref<1x8x32xbf16, #tpu.memory_space<vmem>>, vector<1x8x8xbf16>
    %123 = vector.shape_cast %122 : vector<1x8x8xbf16> to vector<8x8xbf16>
    %124 = vector.shape_cast %121 : vector<8x8xbf16> to vector<1x8x8xbf16>
    tpu.vector_store %arg9[%c0_46, %c0_47, %c8], %124 {strides = array<i32>} : memref<1x8x32xbf16, #tpu.memory_space<vmem>>, vector<1x8x8xbf16>,
    %125 = vector.extract_strided_slice %112 {offsets = [2, 0, 0], sizes = [1, 8, 8], strides = [1, 1, 1]} : vector<4x8x8xf32> to vector<1x8x8xf32>
    %126 = vector.shape_cast %125 : vector<1x8x8xf32> to vector<8x8xf32>
    %127 = arith.truncf %126 : vector<8x8xf32> to vector<8x8xbf16>
    %c0_48 = arith.constant 0 : index
    %c0_49 = arith.constant 0 : index
    %c16 = arith.constant 16 : index
    %128 = vector.load %arg9[%c0_48, %c0_49, %c16] : memref<1x8x32xbf16, #tpu.memory_space<vmem>>, vector<1x8x8xbf16>
    %129 = vector.shape_cast %128 : vector<1x8x8xbf16> to vector<8x8xbf16>
    %130 = vector.shape_cast %127 : vector<8x8xbf16> to vector<1x8x8xbf16>
    tpu.vector_store %arg9[%c0_48, %c0_49, %c16], %130 {strides = array<i32>} : memref<1x8x32xbf16, #tpu.memory_space<vmem>>, vector<1x8x8xbf16>,
    %131 = vector.extract_strided_slice %112 {offsets = [3, 0, 0], sizes = [1, 8, 8], strides = [1, 1, 1]} : vector<4x8x8xf32> to vector<1x8x8xf32>
    %132 = vector.shape_cast %131 : vector<1x8x8xf32> to vector<8x8xf32>
    %133 = arith.truncf %132 : vector<8x8xf32> to vector<8x8xbf16>
    %c0_50 = arith.constant 0 : index
    %c0_51 = arith.constant 0 : index
    %c24 = arith.constant 24 : index
    %134 = vector.load %arg9[%c0_50, %c0_51, %c24] : memref<1x8x32xbf16, #tpu.memory_space<vmem>>, vector<1x8x8xbf16>
    %135 = vector.shape_cast %134 : vector<1x8x8xbf16> to vector<8x8xbf16>
    %136 = vector.shape_cast %133 : vector<8x8xbf16> to vector<1x8x8xbf16>
    tpu.vector_store %arg9[%c0_50, %c0_51, %c24], %136 {strides = array<i32>} : memref<1x8x32xbf16, #tpu.memory_space<vmem>>, vector<1x8x8xbf16>,
    return
  }
  func.func @transform_0(%arg0: i32, %arg1: i32) -> (i32, i32, i32, i32) {
    %c0_i32 = arith.constant 0 : i32
    %c0_i32_0 = arith.constant 0 : i32
    %c0_i32_1 = arith.constant 0 : i32
    return %arg0, %arg1, %c0_i32, %c0_i32_0 : i32, i32, i32, i32
  }
  func.func @transform_1(%arg0: i32, %arg1: i32) -> (i32, i32, i32, i32) {
    %c0_i32 = arith.constant 0 : i32
    %c0_i32_0 = arith.constant 0 : i32
    %c0_i32_1 = arith.constant 0 : i32
    return %arg0, %arg1, %c0_i32, %c0_i32_0 : i32, i32, i32, i32
  }
  func.func @transform_2(%arg0: i32, %arg1: i32) -> (i32, i32, i32, i32) {
    %c0_i32 = arith.constant 0 : i32
    %c0_i32_0 = arith.constant 0 : i32
    %c0_i32_1 = arith.constant 0 : i32
    return %arg0, %arg1, %c0_i32, %c0_i32_0 : i32, i32, i32, i32
  }
  func.func @transform_3(%arg0: i32, %arg1: i32) -> (i32, i32, i32) {
    %c0_i32 = arith.constant 0 : i32
    %c0_i32_0 = arith.constant 0 : i32
    %c0_i32_1 = arith.constant 0 : i32
    return %arg1, %c0_i32, %c0_i32_0 : i32, i32, i32
  }
  func.func @transform_4(%arg0: i32, %arg1: i32) -> (i32, i32, i32) {
    %c0_i32 = arith.constant 0 : i32
    %c0_i32_0 = arith.constant 0 : i32
    %c0_i32_1 = arith.constant 0 : i32
    return %arg1, %c0_i32, %c0_i32_0 : i32, i32, i32
  }
  func.func @transform_5(%arg0: i32, %arg1: i32) -> (i32, i32, i32) {
    %c0_i32 = arith.constant 0 : i32
    %c0_i32_0 = arith.constant 0 : i32
    %c0_i32_1 = arith.constant 0 : i32
    return %arg1, %c0_i32, %c0_i32_0 : i32, i32, i32
  }
  func.func @transform_6(%arg0: i32, %arg1: i32) -> (i32, i32) {
    %c0_i32 = arith.constant 0 : i32
    %c0_i32_0 = arith.constant 0 : i32
    %c0_i32_1 = arith.constant 0 : i32
    return %c0_i32, %c0_i32_0 : i32, i32
  }
  func.func @transform_7(%arg0: i32, %arg1: i32) -> (i32, i32, i32) {
    %c0_i32 = arith.constant 0 : i32
    %c0_i32_0 = arith.constant 0 : i32
    return %arg0, %c0_i32, %arg1 : i32, i32, i32
  }
}

</mosaic_0001>

<llo_original>
// kernel: tpu_custom_call.1
$region0: #{tpu_custom_call.1}
  #allocation0 [shape = 'u32[]', space=smem, size = 0x4, offset = 0x4, fixed_abs, tag = 'smem constant byte address 0x4 - core index']
  #allocation1 [shape = 'u32[144,128]{1,0:T(1,128)}', space=vmem, size = 0x12000, scoped, tag = 'internal scratch']
  %s0 = inlined_call_operand.hbm [shape: f32[32,128], index: 0, kind: input, shape index: {}]
  %s1 = inlined_call_operand.hbm [shape: f32[8,128], index: 1, kind: input, shape index: {}]
  %s2 = inlined_call_operand.hbm [shape: f32[32,128], index: 2, kind: output, shape index: {}]
  %s3 = sld [smem:[#allocation0]]
  $region49: #{tpu_custom_call.1} parent=0
    _
  %s5 = ssub.s32 1, %s3
  %s6 = scalar_select 0, %s5, %s3
  $region1: #{tpu_custom_call.1} parent=0
    #allocation2 [shape = 'u8[8192]{0}', space=vmem, size = 0x2000, scoped, tag = 'input window, operand 0']
    #allocation3 [shape = 's32[2]{0}', space=sflag, size = 0x8, scoped, tag = 'scoped memory for tpu_custom_call.1']
    #allocation4 [shape = 's32[2]{0}', space=sflag, size = 0x8, scoped, tag = 'scoped memory for tpu_custom_call.1']
    #allocation5 [shape = 'u8[4096]{0}', space=vmem, size = 0x1000, scoped, tag = 'input window, operand 1, single buffered']
    #allocation6 [shape = 's32[1]{0}', space=sflag, size = 0x4, scoped, tag = 'scoped memory for tpu_custom_call.1']
    #allocation7 [shape = 'u8[8192]{0}', space=vmem, size = 0x2000, scoped, tag = 'output window, operand 0']
    %7 = vsyncpa [#allocation3], 0
    %s8 = scalar_lea.sflag [#allocation3], 1
    %9 = vsyncpa %s8, 0
    %10 = vsyncpa [#allocation6], 0
    %11 = vsyncpa [#allocation4], 0
    %s12 = scalar_lea.sflag [#allocation4], 1
    %13 = vsyncpa %s12, 0
    loop: start=0, step=1, limit=6
    $region2: #{tpu_custom_call.1} parent=1 // loop_pre_header
      _
    $region3: #{tpu_custom_call.1} parent=1 // loop_header
      %s15 = sphi 0, %s19
      %p16 = scmp.ge.s32.totalorder %s15, 6
      %s25 = sphi 0, %s27
      %s28 = sphi 0, %s25
      %s29 = sphi 0, %s28
      %s45 = sphi 0, %s29
      %s49 = sphi 0, %s49
      %s51 = sphi 0, %s49
      %s52 = sphi 0, %s51
      %s66 = sphi 0, %s52
      %s72 = sphi 0, %s74
      %s75 = sphi 0, %s72
      %s76 = sphi 0, %s75
      %s92 = sphi 0, %s76
    $region4: #{tpu_custom_call.1} parent=1 // loop_header_branch
      %18 = sbr.rel (%p16) target = $region8
    $region5: #{tpu_custom_call.1} parent=1 // loop_body
      %s20 = ssub.s32 %s15, 1
      %s21 = ssub.s32 %s15, 2
      %s22 = sadd.s32 %s15, 1
      %s23 = ssub.s32 %s15, %s22
      %p24 = scmp.eq.s32.totalorder %s23, 0
      %s26 = sadd.s32 %s25, 1
      %s27 = scalar_select %p24, %s25, %s26
      %p30 = pneg %p24
      %p31 = scmp.eq.s32.totalorder %s15, 3
      %p32 = por %p30, %p31
      %p33 = scmp.ne.s32.totalorder %s25, %s28
      %p34 = scmp.eq.s32.totalorder %s15, 0
      %p35 = por %p33, %p34
      %p36 = scmp.ne.s32.totalorder %s25, %s28
      %p37 = scmp.eq.s32.totalorder %s20, 3
      %p38 = por %p36, %p37
      %p39 = scmp.ne.s32.totalorder %s28, %s29
      %p40 = scmp.eq.s32.totalorder %s20, 0
      %p41 = por %p39, %p40
      %p42 = scmp.ne.s32.totalorder %s28, %s29
      %p43 = scmp.eq.s32.totalorder %s21, 3
      %p44 = por %p42, %p43
      %p46 = scmp.ne.s32.totalorder %s29, %s45
      %p47 = scmp.eq.s32.totalorder %s21, 0
      %p48 = por %p46, %p47
      %s50 = sadd.s32 %s49, 1
      %p53 = scmp.eq.s32.totalorder %s15, 3
      %p54 = scmp.ne.s32.totalorder %s49, %s51
      %p55 = scmp.eq.s32.totalorder %s15, 0
      %p56 = por %p54, %p55
      %p57 = scmp.ne.s32.totalorder %s49, %s51
      %p58 = scmp.eq.s32.totalorder %s20, 3
      %p59 = por %p57, %p58
      %p60 = scmp.ne.s32.totalorder %s51, %s52
      %p61 = scmp.eq.s32.totalorder %s20, 0
      %p62 = por %p60, %p61
      %p63 = scmp.ne.s32.totalorder %s51, %s52
      %p64 = scmp.eq.s32.totalorder %s21, 3
      %p65 = por %p63, %p64
      %p67 = scmp.ne.s32.totalorder %s52, %s66
      %p68 = scmp.eq.s32.totalorder %s21, 0
      %p69 = por %p67, %p68
      %s70 = ssub.s32 %s15, %s22
      %p71 = scmp.eq.s32.totalorder %s70, 0
      %s73 = sadd.s32 %s72, 1
      %s74 = scalar_select %p71, %s72, %s73
      %p77 = pneg %p71
      %p78 = scmp.eq.s32.totalorder %s15, 3
      %p79 = por %p77, %p78
      %p80 = scmp.ne.s32.totalorder %s72, %s75
      %p81 = scmp.eq.s32.totalorder %s15, 0
      %p82 = por %p80, %p81
      %p83 = scmp.ne.s32.totalorder %s72, %s75
      %p84 = scmp.eq.s32.totalorder %s20, 3
      %p85 = por %p83, %p84
      %p86 = scmp.ne.s32.totalorder %s75, %s76
      %p87 = scmp.eq.s32.totalorder %s20, 0
      %p88 = por %p86, %p87
      %p89 = scmp.ne.s32.totalorder %s75, %s76
      %p90 = scmp.eq.s32.totalorder %s21, 3
      %p91 = por %p89, %p90
      %p93 = scmp.ne.s32.totalorder %s76, %s92
      %p94 = scmp.eq.s32.totalorder %s21, 0
      %p95 = por %p93, %p94
      %p96 = scmp.le.s32.totalorder 1, %s15
      %p97 = scmp.lt.s32.totalorder %s15, 5
      %p98 = pnand %p96, %p97
      %p99 = pneg %p98
      // Predicated region
      $region9: #{tpu_custom_call.1} parent=5 // pred_check
        _
      $region10: #{tpu_custom_call.1} parent=5 // pred_check_branch
        %101 = sbr.rel (%p98) target = $region12
      $region11: #{tpu_custom_call.1} parent=5 // pred_region
        %s102 = ssub.s32 %s15, 1
        // Predicated region
        $region13: #{tpu_custom_call.1} parent=11 // pred_check
          %p103 = pneg %p62
        $region14: #{tpu_custom_call.1} parent=11 // pred_check_branch
          %105 = sbr.rel (%p103) target = $region16
        $region15: #{tpu_custom_call.1} parent=11 // pred_region
          %s107 = ssub.s32 128, 128
          %108 = vsyncadd [#allocation6], %s107
          %s110 = sshll.u32 [#allocation5], 4
          %s111 = int_to_ptr.vmem [resolvable:$true] %s110
          %113 = dma.hbm_to_vmem [thread:$0]  %s1, 128, %s111, [#allocation6]
        $region16: #{tpu_custom_call.1} parent=11 // pred_fallthru
          _
      $region12: #{tpu_custom_call.1} parent=5 // pred_fallthru
        _
      %p114 = scmp.lt.s32.totalorder %s15, 4
      // Predicated region
      $region17: #{tpu_custom_call.1} parent=5 // pred_check
        %p115 = pneg %p114
      $region18: #{tpu_custom_call.1} parent=5 // pred_check_branch
        %117 = sbr.rel (%p115) target = $region20
      $region19: #{tpu_custom_call.1} parent=5 // pred_region
        // Predicated region
        $region21: #{tpu_custom_call.1} parent=19 // pred_check
          %p118 = pneg %p35
        $region22: #{tpu_custom_call.1} parent=19 // pred_check_branch
          %120 = sbr.rel (%p118) target = $region24
        $region23: #{tpu_custom_call.1} parent=19 // pred_region
          %s121 = sand.u32 %s25, 1
          %s122 = scalar_lea.sflag [#allocation3], %s121
          %s123 = sand.u32 %s25, 1
          %s124 = smul.addr %s123, 8
          %s125 = scalar_lea.vmem [#allocation2], %s124
          %s127 = ssub.s32 128, 128
          %128 = vsyncadd %s122, %s127
          %s129 = smul.addr %s15, 128
          %s130 = scalar_lea.hbm %s0, %s129
          %s132 = sshll.u32 %s125, 4
          %s133 = int_to_ptr.vmem [resolvable:$true] %s132
          %135 = dma.hbm_to_vmem [thread:$0]  %s130, 128, %s133, %s122
        $region24: #{tpu_custom_call.1} parent=19 // pred_fallthru
          _
      $region20: #{tpu_custom_call.1} parent=5 // pred_fallthru
        _
      %p136 = scmp.le.s32.totalorder 1, %s15
      %p137 = scmp.lt.s32.totalorder %s15, 5
      %p138 = pnand %p136, %p137
      %p139 = pneg %p138
      // Predicated region
      $region25: #{tpu_custom_call.1} parent=5 // pred_check
        _
      $region26: #{tpu_custom_call.1} parent=5 // pred_check_branch
        %141 = sbr.rel (%p138) target = $region28
      $region27: #{tpu_custom_call.1} parent=5 // pred_region
        %s142 = ssub.s32 %s15, 1
        %s143 = sand.u32 %s28, 1
        %s144 = scalar_lea.sflag [#allocation3], %s143
        %s145 = sand.u32 %s28, 1
        %s146 = smul.addr %s145, 8
        %s147 = scalar_lea.vmem [#allocation2], %s146
        // Predicated region
        $region29: #{tpu_custom_call.1} parent=27 // pred_check
          %p148 = pneg %p41
        $region30: #{tpu_custom_call.1} parent=27 // pred_check_branch
          %150 = sbr.rel (%p148) target = $region32
        $region31: #{tpu_custom_call.1} parent=27 // pred_region
          %151 = dma.done %s144, 128
        $region32: #{tpu_custom_call.1} parent=27 // pred_fallthru
          _
        // Predicated region
        $region33: #{tpu_custom_call.1} parent=27 // pred_check
          %p152 = pneg %p62
        $region34: #{tpu_custom_call.1} parent=27 // pred_check_branch
          %154 = sbr.rel (%p152) target = $region36
        $region35: #{tpu_custom_call.1} parent=27 // pred_region
          %155 = dma.done [#allocation6], 128
        $region36: #{tpu_custom_call.1} parent=27 // pred_fallthru
          _
        %s156 = sand.u32 %s28, 1
        %s157 = scalar_lea.sflag [#allocation3], %s156
        %s158 = sand.u32 %s28, 1
        %s159 = smul.addr %s158, 8
        %s160 = scalar_lea.vmem [#allocation2], %s159
        %p161 = pneg %p41
        %p162 = pneg %p38
        %p163 = pneg %p62
        %p164 = pneg %p59
        %p165 = pneg %p88
        %p166 = pneg %p85
        %s167 = sand.u32 %s75, 1
        %s168 = scalar_lea.sflag [#allocation4], %s167
        %s169 = sand.u32 %s75, 1
        %s170 = smul.addr %s169, 8
        %s171 = scalar_lea.vmem [#allocation7], %s170
        %v172 = vld [vmem:[%s147] sm:$0xff]
        %v173 = vld [vmem:[#allocation5] sm:$0xff]
        %v174 = vadd.f32 %v172, %v173
        %175 = vst [vmem:[%s171] sm:$0xff] %v174
        %s176 = sand.u32 %s75, 1
        %s177 = scalar_lea.sflag [#allocation4], %s176
        %s178 = sand.u32 %s75, 1
        %s179 = smul.addr %s178, 8
        %s180 = scalar_lea.vmem [#allocation7], %s179
        // Predicated region
        $region37: #{tpu_custom_call.1} parent=27 // pred_check
          %p181 = pneg %p85
        $region38: #{tpu_custom_call.1} parent=27 // pred_check_branch
          %183 = sbr.rel (%p181) target = $region40
        $region39: #{tpu_custom_call.1} parent=27 // pred_region
          %s185 = ssub.s32 128, 128
          %186 = vsyncadd %s177, %s185
          %s187 = smul.addr %s20, 128
          %s188 = scalar_lea.hbm %s2, %s187
          %s190 = sshll.u32 %s180, 4
          %s191 = int_to_ptr.vmem [resolvable:$true] %s190
          %193 = dma.vmem_to_hbm [thread:$0]  %s191, 128, %s188, %s177
        $region40: #{tpu_custom_call.1} parent=27 // pred_fallthru
          _
      $region28: #{tpu_custom_call.1} parent=5 // pred_fallthru
        _
      %p194 = scmp.le.s32.totalorder 2, %s15
      // Predicated region
      $region41: #{tpu_custom_call.1} parent=5 // pred_check
        %p195 = pneg %p194
      $region42: #{tpu_custom_call.1} parent=5 // pred_check_branch
        %197 = sbr.rel (%p195) target = $region44
      $region43: #{tpu_custom_call.1} parent=5 // pred_region
        %s198 = ssub.s32 %s15, 2
        // Predicated region
        $region45: #{tpu_custom_call.1} parent=43 // pred_check
          %p199 = pneg %p91
        $region46: #{tpu_custom_call.1} parent=43 // pred_check_branch
          %201 = sbr.rel (%p199) target = $region48
        $region47: #{tpu_custom_call.1} parent=43 // pred_region
          %s202 = sand.u32 %s76, 1
          %s203 = scalar_lea.sflag [#allocation4], %s202
          %s204 = sand.u32 %s76, 1
          %s205 = smul.addr %s204, 8
          %s206 = scalar_lea.vmem [#allocation7], %s205
          %207 = dma.done %s203, 128
        $region48: #{tpu_custom_call.1} parent=43 // pred_fallthru
          _
      $region44: #{tpu_custom_call.1} parent=5 // pred_fallthru
        _
    $region6: #{tpu_custom_call.1} parent=1 // loop_footer
      %s19 = sadd.s32 1, %s15
    $region7: #{tpu_custom_call.1} parent=1 // loop_footer_branch
      %14 = sbr.rel target = $region3
    $region8: #{tpu_custom_call.1} parent=1 // loop_exit
      _
    %208 = vsyncpa [#allocation3], 1
    %s209 = scalar_lea.sflag [#allocation3], 1
    %210 = vsyncpa %s209, 1
    %211 = vsyncpa [#allocation6], 1
    %212 = vsyncpa [#allocation4], 1
    %s213 = scalar_lea.sflag [#allocation4], 1
    %214 = vsyncpa %s213, 1

// kernel: tpu_custom_call.1
$region0: #{tpu_custom_call.1}
  #allocation0 [shape = 'u32[]', space=smem, size = 0x4, offset = 0x4, fixed_abs, tag = 'smem constant byte address 0x4 - core index']
  #allocation1 [shape = 'u32[144,128]{1,0:T(1,128)}', space=vmem, size = 0x12000, scoped, tag = 'internal scratch']
  %s0 = inlined_call_operand.vmem [shape: f32[8,1], index: 0, kind: input, shape index: {}]
  %s1 = inlined_call_operand.vmem [shape: f32[1,8], index: 1, kind: input, shape index: {}]
  %s2 = inlined_call_operand.hbm [shape: f32[8,16], index: 2, kind: output, shape index: {}]
  %s3 = sld [smem:[#allocation0]]
  $region18: #{tpu_custom_call.1} parent=0
    _
  %s5 = ssub.s32 1, %s3
  %s6 = scalar_select 0, %s5, %s3
  $region1: #{tpu_custom_call.1} parent=0
    #allocation2 [shape = 'u8[4096]{0}', space=vmem, size = 0x1000, scoped, tag = 'output window, operand 0, single buffered']
    #allocation3 [shape = 's32[1]{0}', space=sflag, size = 0x4, scoped, tag = 'scoped memory for tpu_custom_call.1']
    %7 = vsyncpa [#allocation3], 0
    // Predicated region
    $region2: #{tpu_custom_call.1} parent=1 // pred_check
      _
    $region3: #{tpu_custom_call.1} parent=1 // pred_check_branch
      %9 = sbr.rel (0) target = $region5
    $region4: #{tpu_custom_call.1} parent=1 // pred_region
      _
    $region5: #{tpu_custom_call.1} parent=1 // pred_fallthru
      _
    // Predicated region
    $region6: #{tpu_custom_call.1} parent=1 // pred_check
      _
    $region7: #{tpu_custom_call.1} parent=1 // pred_check_branch
      %11 = sbr.rel (0) target = $region9
    $region8: #{tpu_custom_call.1} parent=1 // pred_region
      _
    $region9: #{tpu_custom_call.1} parent=1 // pred_fallthru
      _
    %v12 = vld [vmem:[%s0] sm:$0xff]
    %v13 = vld [vmem:[%s1] sm:$0x1]
    %15 = vset.pattern.permute.xlu0 0
    %16 = vperm.xlu0 %15, %v12
    %v17 = vpop.permute.xlu0 %16
    %v20 = vlaneseq
    %v21 = vshrl.u32 %v20, 7
    %v22 = vsub.s32 0, %v21
    %v23 = vrot.slane %v13, %v22
    %v25 = vmul.f32 %v17, %v23
    %v26 = vand.u32 2147483647, %v25
    %vm27 = vcmp.le.f32.partialorder %v26, 0.7853982
    %vm28 = vcmp.lt.s32.totalorder %v25, 0
    %v29 = vand.u32 %v25, 2139095040
    %v30 = vshrl.u32 %v29, 23
    %v31 = vsub.s32 %v30, 127
    %v32 = vand.u32 2147483647, %v25
    %v33 = vand.u32 %v32, 8388607
    %v34 = vor.u32 %v33, 8388608
    %v35 = vsub.s32 0, %v34
    %v36 = vadd.s32 %v31, 1
    %vm37 = vcmp.gt.s32.totalorder %v36, 0
    %v38 = vsel %vm37, %v36, 0
    %v39 = vshrl.u32 %v38, 5
    %v40 = vand.u32 %v38, 31
    %v41 = vsub.s32 32, %v40
    %v42 = vshrl.u32 683565275, %v41
    %v43 = vshll.u32 683565275, %v40
    %v44 = vshrl.u32 2475754826, %v41
    %v45 = vor.u32 %v43, %v44
    %v46 = vshll.u32 2475754826, %v40
    %v47 = vshrl.u32 2131351028, %v41
    %v48 = vor.u32 %v46, %v47
    %v49 = vshll.u32 2131351028, %v40
    %v50 = vshrl.u32 2102212464, %v41
    %v51 = vor.u32 %v49, %v50
    %v52 = vshll.u32 2102212464, %v40
    %v53 = vshrl.u32 920167782, %v41
    %v54 = vor.u32 %v52, %v53
    %v55 = vshll.u32 920167782, %v40
    %v56 = vshrl.u32 1326507024, %v41
    %v57 = vor.u32 %v55, %v56
    %vm58 = vcmp.lt.s32.totalorder %v39, 1
    %vm59 = vcmp.lt.s32.totalorder %v39, 2
    %vm60 = vcmp.lt.s32.totalorder %v39, 3
    %vm61 = vcmp.lt.s32.totalorder %v39, 4
    %v62 = vsel %vm58, %v42, %v45
    %v63 = vsel %vm61, %v51, 2102212464
    %v64 = vsel %vm60, %v48, %v63
    %v65 = vsel %vm59, %v62, %v64
    %v66 = vsel %vm58, %v45, %v48
    %v67 = vsel %vm61, %v54, 920167782
    %v68 = vsel %vm60, %v51, %v67
    %v69 = vsel %vm59, %v66, %v68
    %v70 = vsel %vm58, %v48, %v51
    %v71 = vsel %vm61, %v57, 1326507024
    %v72 = vsel %vm60, %v54, %v71
    %v73 = vsel %vm59, %v70, %v72
    %v74 = vshll.u32 %v34, 8
    %v75 = vmul.u32.u64.compose %v74, %v73
    %v76 = vextract.low.u32 %v75
    %v77 = vextract.high.u32 %v75
    %v78 = vmul.u32.u64.compose %v74, %v69
    %v79 = vextract.low.u32 %v78
    %v80 = vextract.high.u32 %v78
    %v81 = vmul.u32 %v74, %v65
    %v82 = vadd.s32 %v77, %v79
    %vm83 = vc.u32 %v77, %v79
    %v84 = vadd.s32 %v80, 1
    %v85 = vsel %vm83, %v84, %v80
    %v86 = vadd.s32 %v81, %v85
    %v87 = vadd.s32 %v86, 536870912
    %v88 = vshrl.u32 %v87, 30
    %v89 = vshll.u32 %v88, 30
    %v90 = vsub.s32 %v86, %v89
    %vm91 = vcmp.lt.s32.totalorder %v90, 0
    %v92 = vsub.s32 0, %v90
    %v93 = vsel %vm91, %v92, %v90
    %v94 = vclz %v93
    %v95 = vsub.s32 %v94, 2
    %vm96 = vcmp.gt.s32.totalorder 0, %v95
    %v97 = vsel %vm96, 0, %v95
    %v98 = vsub.s32 32, %v97
    %v99 = vshll.u32 %v90, %v97
    %v100 = vshrl.u32 %v82, %v98
    %v101 = vor.u32 %v99, %v100
    %v102 = vsub.s32 4294967266, %v97
    %v103 = vadd.s32 %v102, 127
    %v104 = vshll.u32 %v103, 23
    %v105 = vor.u32 4788187, %v104
    %v106 = vand.u32 2147483647, %v105
    %v108 = vcvt.s32.f32 %v101
    %v109 = vmul.f32 %v108, %v106
    %v110 = vxor.u32 %v109, 2147483648
    %v111 = vsel %vm28, %v110, %v109
    %v112 = vsub.s32 4, %v88
    %v113 = vsel %vm28, %v112, %v88
    %v114 = vsel %vm27, %v25, %v111
    %v115 = vsel %vm27, 0, %v113
    %v116 = vcosq.f32.pop %v114
    %v117 = vsinq.f32.pop %v114
    %vm118 = vweird.f32 %v25
    %v119 = vadd.s32 %v115, 3
    %v120 = vand.u32 %v119, 3
    %vm121 = vcmp.lt.s32.totalorder %v120, 2
    %vm122 = vcmp.eq.s32.totalorder %v120, 0
    %v123 = vxor.u32 %v117, 2147483648
    %v124 = vsel %vm122, %v116, %v123
    %vm125 = vcmp.eq.s32.totalorder %v120, 2
    %v126 = vxor.u32 %v116, 2147483648
    %v127 = vsel %vm125, %v126, %v117
    %v128 = vsel %vm121, %v124, %v127
    %v129 = vsel %vm118, nan, %v128
    %vm130 = vcmask 64512
    %131 = vst.msk [vmem:[#allocation2] sm:$0xff] %vm130, %v129
    %v132 = vand.u32 2147483647, %v25
    %vm133 = vcmp.le.f32.partialorder %v132, 0.7853982
    %vm134 = vcmp.lt.s32.totalorder %v25, 0
    %v135 = vand.u32 %v25, 2139095040
    %v136 = vshrl.u32 %v135, 23
    %v137 = vsub.s32 %v136, 127
    %v138 = vand.u32 2147483647, %v25
    %v139 = vand.u32 %v138, 8388607
    %v140 = vor.u32 %v139, 8388608
    %v141 = vsub.s32 0, %v140
    %v142 = vadd.s32 %v137, 1
    %vm143 = vcmp.gt.s32.totalorder %v142, 0
    %v144 = vsel %vm143, %v142, 0
    %v145 = vshrl.u32 %v144, 5
    %v146 = vand.u32 %v144, 31
    %v147 = vsub.s32 32, %v146
    %v148 = vshrl.u32 683565275, %v147
    %v149 = vshll.u32 683565275, %v146
    %v150 = vshrl.u32 2475754826, %v147
    %v151 = vor.u32 %v149, %v150
    %v152 = vshll.u32 2475754826, %v146
    %v153 = vshrl.u32 2131351028, %v147
    %v154 = vor.u32 %v152, %v153
    %v155 = vshll.u32 2131351028, %v146
    %v156 = vshrl.u32 2102212464, %v147
    %v157 = vor.u32 %v155, %v156
    %v158 = vshll.u32 2102212464, %v146
    %v159 = vshrl.u32 920167782, %v147
    %v160 = vor.u32 %v158, %v159
    %v161 = vshll.u32 920167782, %v146
    %v162 = vshrl.u32 1326507024, %v147
    %v163 = vor.u32 %v161, %v162
    %vm164 = vcmp.lt.s32.totalorder %v145, 1
    %vm165 = vcmp.lt.s32.totalorder %v145, 2
    %vm166 = vcmp.lt.s32.totalorder %v145, 3
    %vm167 = vcmp.lt.s32.totalorder %v145, 4
    %v168 = vsel %vm164, %v148, %v151
    %v169 = vsel %vm167, %v157, 2102212464
    %v170 = vsel %vm166, %v154, %v169
    %v171 = vsel %vm165, %v168, %v170
    %v172 = vsel %vm164, %v151, %v154
    %v173 = vsel %vm167, %v160, 920167782
    %v174 = vsel %vm166, %v157, %v173
    %v175 = vsel %vm165, %v172, %v174
    %v176 = vsel %vm164, %v154, %v157
    %v177 = vsel %vm167, %v163, 1326507024
    %v178 = vsel %vm166, %v160, %v177
    %v179 = vsel %vm165, %v176, %v178
    %v180 = vshll.u32 %v140, 8
    %v181 = vmul.u32.u64.compose %v180, %v179
    %v182 = vextract.low.u32 %v181
    %v183 = vextract.high.u32 %v181
    %v184 = vmul.u32.u64.compose %v180, %v175
    %v185 = vextract.low.u32 %v184
    %v186 = vextract.high.u32 %v184
    %v187 = vmul.u32 %v180, %v171
    %v188 = vadd.s32 %v183, %v185
    %vm189 = vc.u32 %v183, %v185
    %v190 = vadd.s32 %v186, 1
    %v191 = vsel %vm189, %v190, %v186
    %v192 = vadd.s32 %v187, %v191
    %v193 = vadd.s32 %v192, 536870912
    %v194 = vshrl.u32 %v193, 30
    %v195 = vshll.u32 %v194, 30
    %v196 = vsub.s32 %v192, %v195
    %vm197 = vcmp.lt.s32.totalorder %v196, 0
    %v198 = vsub.s32 0, %v196
    %v199 = vsel %vm197, %v198, %v196
    %v200 = vclz %v199
    %v201 = vsub.s32 %v200, 2
    %vm202 = vcmp.gt.s32.totalorder 0, %v201
    %v203 = vsel %vm202, 0, %v201
    %v204 = vsub.s32 32, %v203
    %v205 = vshll.u32 %v196, %v203
    %v206 = vshrl.u32 %v188, %v204
    %v207 = vor.u32 %v205, %v206
    %v208 = vsub.s32 4294967266, %v203
    %v209 = vadd.s32 %v208, 127
    %v210 = vshll.u32 %v209, 23
    %v211 = vor.u32 4788187, %v210
    %v212 = vand.u32 2147483647, %v211
    %v214 = vcvt.s32.f32 %v207
    %v215 = vmul.f32 %v214, %v212
    %v216 = vxor.u32 %v215, 2147483648
    %v217 = vsel %vm134, %v216, %v215
    %v218 = vsub.s32 4, %v194
    %v219 = vsel %vm134, %v218, %v194
    %v220 = vsel %vm133, %v25, %v217
    %v221 = vsel %vm133, 0, %v219
    %v222 = vcosq.f32.pop %v220
    %v223 = vsinq.f32.pop %v220
    %vm224 = vweird.f32 %v25
    %v225 = vand.u32 %v221, 3
    %vm226 = vcmp.lt.s32.totalorder %v225, 2
    %vm227 = vcmp.eq.s32.totalorder %v225, 0
    %v228 = vxor.u32 %v223, 2147483648
    %v229 = vsel %vm227, %v222, %v228
    %vm230 = vcmp.eq.s32.totalorder %v225, 2
    %v231 = vxor.u32 %v222, 2147483648
    %v232 = vsel %vm230, %v231, %v223
    %v233 = vsel %vm226, %v229, %v232
    %v234 = vsel %vm224, nan, %v233
    %236 = vrot.lane.b32.xlu0 %v234, 8
    %v237 = vpop.permute.xlu0 %236
    %vm239 = vcmask 130112
    %240 = vst.msk [vmem:[#allocation2] sm:$0xff] %vm239, %v237
    // Predicated region
    $region10: #{tpu_custom_call.1} parent=1 // pred_check
      _
    $region11: #{tpu_custom_call.1} parent=1 // pred_check_branch
      %242 = sbr.rel (0) target = $region13
    $region12: #{tpu_custom_call.1} parent=1 // pred_region
      %s244 = ssub.s32 128, 128
      %245 = vsyncadd [#allocation3], %s244
      %s247 = sshll.u32 [#allocation2], 4
      %s248 = int_to_ptr.vmem [resolvable:$true] %s247
      %250 = dma.vmem_to_hbm [thread:$0]  %s248, 128, %s2, [#allocation3]
    $region13: #{tpu_custom_call.1} parent=1 // pred_fallthru
      _
    // Predicated region
    $region14: #{tpu_custom_call.1} parent=1 // pred_check
      _
    $region15: #{tpu_custom_call.1} parent=1 // pred_check_branch
      %252 = sbr.rel (0) target = $region17
    $region16: #{tpu_custom_call.1} parent=1 // pred_region
      %253 = dma.done [#allocation3], 128
    $region17: #{tpu_custom_call.1} parent=1 // pred_fallthru
      _
    %254 = vsyncpa [#allocation3], 1

// kernel: _lambda_.10
$region0: #{_lambda_.10}
  #allocation0 [shape = 'u32[]', space=smem, size = 0x4, offset = 0x4, fixed_abs, tag = 'smem constant byte address 0x4 - core index']
  #allocation1 [shape = 'u32[144,128]{1,0:T(1,128)}', space=vmem, size = 0x12000, scoped, tag = 'internal scratch']
  %s0 = inlined_call_operand.vmem [shape: bf16[32,32], index: 0, kind: input, shape index: {}]
  %s1 = inlined_call_operand.vmem [shape: bf16[32,96], index: 1, kind: input, shape index: {}]
  %s2 = inlined_call_operand.vmem [shape: f32[1,96], index: 2, kind: input, shape index: {}]
  %s3 = inlined_call_operand.vmem [shape: bf16[32,96], index: 3, kind: output, shape index: {}]
  %s4 = sld [smem:[#allocation0]]
  $region22: #{_lambda_.10} parent=0
    _
  %s6 = ssub.s32 1, %s4
  %s7 = scalar_select 0, %s6, %s4
  // Predicated region
  $region2: #{_lambda_.10} parent=0 // pred_check
    _
  $region3: #{_lambda_.10} parent=0 // pred_check_branch
    %9 = sbr.rel (0) target = $region5
  $region4: #{_lambda_.10} parent=0 // pred_region
    _
  $region5: #{_lambda_.10} parent=0 // pred_fallthru
    _
  // Predicated region
  $region6: #{_lambda_.10} parent=0 // pred_check
    _
  $region7: #{_lambda_.10} parent=0 // pred_check_branch
    %11 = sbr.rel (0) target = $region9
  $region8: #{_lambda_.10} parent=0 // pred_region
    _
  $region9: #{_lambda_.10} parent=0 // pred_fallthru
    _
  // Predicated region
  $region10: #{_lambda_.10} parent=0 // pred_check
    _
  $region11: #{_lambda_.10} parent=0 // pred_check_branch
    %13 = sbr.rel (0) target = $region13
  $region12: #{_lambda_.10} parent=0 // pred_region
    _
  $region13: #{_lambda_.10} parent=0 // pred_fallthru
    _
  %v15 = vld [vmem:[%s0] sm:$0xf]
  %v16 = vld [vmem:[%s0 + $0x4] sm:$0xf]
  %v17 = vld [vmem:[%s0 + $0x8] sm:$0xf]
  %v18 = vld [vmem:[%s0 + $0xc] sm:$0xf]
  %v19 = vld [vmem:[%s1] sm:$0xf]
  %v20 = vld [vmem:[%s1 + $0x4] sm:$0xf]
  %v21 = vld [vmem:[%s1 + $0x8] sm:$0xf]
  %v22 = vld [vmem:[%s1 + $0xc] sm:$0xf]
  %v23 = vld [vmem:[%s2] sm:$0x1]
  %v25 = vlaneseq
  %v26 = vshrl.u32 %v25, 7
  %v27 = vsub.s32 0, %v26
  %v28 = vrot.slane %v23, %v27
  %v34 = vunpack.c.l.b16 %v15
  %v35 = vunpack.c.l.b16 %v16
  %v36 = vunpack.c.l.b16 %v17
  %v37 = vunpack.c.l.b16 %v18
  %v38 = vpack.c.b16 %v35, %v34
  %v39 = vpack.c.b16 %v37, %v36
  %v44 = vunpack.c.l.b16 %v19
  %v45 = vunpack.c.l.b16 %v20
  %v46 = vunpack.c.l.b16 %v21
  %v47 = vunpack.c.l.b16 %v22
  %v48 = vpack.c.b16 %v45, %v44
  %v49 = vpack.c.b16 %v47, %v46
  %vm52 = vcmask 261120
  %v54 = vsel %vm52, %v38, 0
  %v57 = vsel %vm52, %v39, 0
  %59 = vmatprep.subr.bf16.mxu0 0
  %60 = vmatpush1.bf16.msra.mxu0 %v48
  %61 = vmatprep.subr.bf16.mxu0 0
  %62 = vmatpush1.bf16.msra.mxu0 %v49
  %63 = vmatprep.subr.bf16.mxu0 0
  %64 = vmatpush1.bf16.msra.mxu0 0
  %65 = vmatprep.subr.bf16.mxu0 0
  %66 = vmatpush1.bf16.msra.mxu0 0
  %67 = vmatprep.subr.bf16.mxu0 0
  %68 = vmatpush1.bf16.msra.mxu0 0
  %69 = vmatprep.subr.bf16.mxu0 0
  %70 = vmatpush1.bf16.msra.mxu0 0
  %71 = vmatprep.subr.bf16.mxu0 0
  %72 = vmatpush1.bf16.msra.mxu0 0
  %73 = vmatprep.subr.bf16.mxu0 0
  %74 = vmatpush1.bf16.msra.mxu0 0
  %75 = vmatprep.subr.bf16.mxu0 0
  %76 = vmatpush1.bf16.msra.mxu0 0
  %77 = vmatprep.subr.bf16.mxu0 0
  %78 = vmatpush1.bf16.msra.mxu0 0
  %79 = vmatprep.subr.bf16.mxu0 0
  %80 = vmatpush1.bf16.msra.mxu0 0
  %81 = vmatprep.subr.bf16.mxu0 0
  %82 = vmatpush1.bf16.msra.mxu0 0
  %83 = vmatprep.subr.bf16.mxu0 0
  %84 = vmatpush1.bf16.msra.mxu0 0
  %85 = vmatprep.subr.bf16.mxu0 0
  %86 = vmatpush1.bf16.msra.mxu0 0
  %87 = vmatprep.subr.bf16.mxu0 0
  %88 = vmatpush1.bf16.msra.mxu0 0
  %89 = vmatprep.subr.bf16.mxu0 0
  %90 = vmatpush1.bf16.msra.mxu0 0
  %91 = vmatprep.mubr.bf16.mxu0 0
  %92 = vmatmul.mubr.bf16.gmra.mrb[0].mxu0 %v54
  %v93 = vpop.f32.mrb[0].mxu0
  %v94 = vadd.f32 %v28, %v93
  %v95 = vpop.f32.mrb[0].mxu0
  %v96 = vpop.f32.mrb[0].mxu0
  %v97 = vadd.f32 %v28, %v96
  %v98 = vpop.f32.mrb[0].mxu0
  %99 = vmatprep.mubr.bf16.mxu0 0
  %100 = vmatmul.mubr.bf16.gmra.mrb[0].mxu0 %v57
  %v101 = vpop.f32.mrb[0].mxu0
  %v102 = vadd.f32 %v28, %v101
  %v103 = vpop.f32.mrb[0].mxu0
  %v104 = vpop.f32.mrb[0].mxu0
  %v105 = vadd.f32 %v28, %v104
  %v106 = vpop.f32.mrb[0].mxu0
  %107 = vdwg.mxu0
  %v108 = vpack.c.bf16 %v97, %v94
  %v109 = vpack.c.bf16 %v105, %v102
  %v112 = vunpack.c.l.b16 %v108
  %v113 = vunpack.c.h.b16 %v108
  %v114 = vunpack.c.l.b16 %v109
  %v115 = vunpack.c.h.b16 %v109
  %v116 = vpack.c.b16 %v112, %v112
  %v117 = vpack.c.b16 %v113, %v113
  %v118 = vpack.c.b16 %v114, %v114
  %v119 = vpack.c.b16 %v115, %v115
  %vm124 = vcmask 781312
  %125 = vst.msk [vmem:[%s3] sm:$0xf] %vm124, %v116
  %126 = vst.msk [vmem:[%s3 + $0x4] sm:$0xf] %vm124, %v117
  %127 = vst.msk [vmem:[%s3 + $0x8] sm:$0xf] %vm124, %v118
  %128 = vst.msk [vmem:[%s3 + $0xc] sm:$0xf] %vm124, %v119
  // Predicated region
  $region14: #{_lambda_.10} parent=0 // pred_check
    _
  $region15: #{_lambda_.10} parent=0 // pred_check_branch
    %130 = sbr.rel (0) target = $region17
  $region16: #{_lambda_.10} parent=0 // pred_region
    _
  $region17: #{_lambda_.10} parent=0 // pred_fallthru
    _
  // Predicated region
  $region18: #{_lambda_.10} parent=0 // pred_check
    _
  $region19: #{_lambda_.10} parent=0 // pred_check_branch
    %132 = sbr.rel (0) target = $region21
  $region20: #{_lambda_.10} parent=0 // pred_region
    _
  $region21: #{_lambda_.10} parent=0 // pred_fallthru
    _

// kernel: _lambda_.9
$region0: #{_lambda_.9}
  #allocation0 [shape = 'u32[]', space=smem, size = 0x4, offset = 0x4, fixed_abs, tag = 'smem constant byte address 0x4 - core index']
  #allocation1 [shape = 'u32[144,128]{1,0:T(1,128)}', space=vmem, size = 0x12000, scoped, tag = 'internal scratch']
  %s0 = inlined_call_operand.vmem [shape: bf16[16,32], index: 0, kind: input, shape index: {}]
  %s1 = inlined_call_operand.vmem [shape: bf16[32,64], index: 1, kind: input, shape index: {}]
  %s2 = inlined_call_operand.vmem [shape: f32[1,64], index: 2, kind: input, shape index: {}]
  %s3 = inlined_call_operand.vmem [shape: bf16[16,64], index: 3, kind: output, shape index: {}]
  %s4 = sld [smem:[#allocation0]]
  $region22: #{_lambda_.9} parent=0
    _
  %s6 = ssub.s32 1, %s4
  %s7 = scalar_select 0, %s6, %s4
  // Predicated region
  $region2: #{_lambda_.9} parent=0 // pred_check
    _
  $region3: #{_lambda_.9} parent=0 // pred_check_branch
    %9 = sbr.rel (0) target = $region5
  $region4: #{_lambda_.9} parent=0 // pred_region
    _
  $region5: #{_lambda_.9} parent=0 // pred_fallthru
    _
  // Predicated region
  $region6: #{_lambda_.9} parent=0 // pred_check
    _
  $region7: #{_lambda_.9} parent=0 // pred_check_branch
    %11 = sbr.rel (0) target = $region9
  $region8: #{_lambda_.9} parent=0 // pred_region
    _
  $region9: #{_lambda_.9} parent=0 // pred_fallthru
    _
  // Predicated region
  $region10: #{_lambda_.9} parent=0 // pred_check
    _
  $region11: #{_lambda_.9} parent=0 // pred_check_branch
    %13 = sbr.rel (0) target = $region13
  $region12: #{_lambda_.9} parent=0 // pred_region
    _
  $region13: #{_lambda_.9} parent=0 // pred_fallthru
    _
  %v15 = vld [vmem:[%s0] sm:$0xf]
  %v16 = vld [vmem:[%s0 + $0x4] sm:$0xf]
  %v17 = vld [vmem:[%s1] sm:$0xf]
  %v18 = vld [vmem:[%s1 + $0x4] sm:$0xf]
  %v19 = vld [vmem:[%s1 + $0x8] sm:$0xf]
  %v20 = vld [vmem:[%s1 + $0xc] sm:$0xf]
  %v21 = vld [vmem:[%s2] sm:$0x1]
  %v23 = vlaneseq
  %v24 = vshrl.u32 %v23, 7
  %v25 = vsub.s32 0, %v24
  %v26 = vrot.slane %v21, %v25
  %v30 = vunpack.c.l.b16 %v15
  %v31 = vunpack.c.l.b16 %v16
  %v32 = vpack.c.b16 %v31, %v30
  %v37 = vunpack.c.l.b16 %v17
  %v38 = vunpack.c.l.b16 %v18
  %v39 = vunpack.c.l.b16 %v19
  %v40 = vunpack.c.l.b16 %v20
  %v41 = vpack.c.b16 %v38, %v37
  %v42 = vpack.c.b16 %v40, %v39
  %vm45 = vcmask 261120
  %v47 = vsel %vm45, %v32, 0
  %49 = vmatprep.subr.bf16.mxu0 0
  %50 = vmatpush1.bf16.msra.mxu0 %v41
  %51 = vmatprep.subr.bf16.mxu0 0
  %52 = vmatpush1.bf16.msra.mxu0 %v42
  %53 = vmatprep.subr.bf16.mxu0 0
  %54 = vmatpush1.bf16.msra.mxu0 0
  %55 = vmatprep.subr.bf16.mxu0 0
  %56 = vmatpush1.bf16.msra.mxu0 0
  %57 = vmatprep.subr.bf16.mxu0 0
  %58 = vmatpush1.bf16.msra.mxu0 0
  %59 = vmatprep.subr.bf16.mxu0 0
  %60 = vmatpush1.bf16.msra.mxu0 0
  %61 = vmatprep.subr.bf16.mxu0 0
  %62 = vmatpush1.bf16.msra.mxu0 0
  %63 = vmatprep.subr.bf16.mxu0 0
  %64 = vmatpush1.bf16.msra.mxu0 0
  %65 = vmatprep.subr.bf16.mxu0 0
  %66 = vmatpush1.bf16.msra.mxu0 0
  %67 = vmatprep.subr.bf16.mxu0 0
  %68 = vmatpush1.bf16.msra.mxu0 0
  %69 = vmatprep.subr.bf16.mxu0 0
  %70 = vmatpush1.bf16.msra.mxu0 0
  %71 = vmatprep.subr.bf16.mxu0 0
  %72 = vmatpush1.bf16.msra.mxu0 0
  %73 = vmatprep.subr.bf16.mxu0 0
  %74 = vmatpush1.bf16.msra.mxu0 0
  %75 = vmatprep.subr.bf16.mxu0 0
  %76 = vmatpush1.bf16.msra.mxu0 0
  %77 = vmatprep.subr.bf16.mxu0 0
  %78 = vmatpush1.bf16.msra.mxu0 0
  %79 = vmatprep.subr.bf16.mxu0 0
  %80 = vmatpush1.bf16.msra.mxu0 0
  %81 = vmatprep.mubr.bf16.mxu0 0
  %82 = vmatmul.mubr.bf16.gmra.mrb[0].mxu0 %v47
  %v83 = vpop.f32.mrb[0].mxu0
  %v84 = vadd.f32 %v26, %v83
  %v85 = vpop.f32.mrb[0].mxu0
  %v86 = vpop.f32.mrb[0].mxu0
  %v87 = vadd.f32 %v26, %v86
  %v88 = vpop.f32.mrb[0].mxu0
  %89 = vdwg.mxu0
  %v90 = vpack.c.bf16 %v87, %v84
  %v92 = vunpack.c.l.b16 %v90
  %v93 = vunpack.c.h.b16 %v90
  %v94 = vpack.c.b16 %v92, %v92
  %v95 = vpack.c.b16 %v93, %v93
  %vm98 = vcmask 519168
  %99 = vst.msk [vmem:[%s3] sm:$0xf] %vm98, %v94
  %100 = vst.msk [vmem:[%s3 + $0x4] sm:$0xf] %vm98, %v95
  // Predicated region
  $region14: #{_lambda_.9} parent=0 // pred_check
    _
  $region15: #{_lambda_.9} parent=0 // pred_check_branch
    %102 = sbr.rel (0) target = $region17
  $region16: #{_lambda_.9} parent=0 // pred_region
    _
  $region17: #{_lambda_.9} parent=0 // pred_fallthru
    _
  // Predicated region
  $region18: #{_lambda_.9} parent=0 // pred_check
    _
  $region19: #{_lambda_.9} parent=0 // pred_check_branch
    %104 = sbr.rel (0) target = $region21
  $region20: #{_lambda_.9} parent=0 // pred_region
    _
  $region21: #{_lambda_.9} parent=0 // pred_fallthru
    _

// kernel: _lambda_.12
$region0: #{_lambda_.12}
  #allocation0 [shape = 'u32[]', space=smem, size = 0x4, offset = 0x4, fixed_abs, tag = 'smem constant byte address 0x4 - core index']
  #allocation1 [shape = 'u32[144,128]{1,0:T(1,128)}', space=vmem, size = 0x12000, scoped, tag = 'internal scratch']
  %s0 = inlined_call_operand.vmem [shape: bf16[16,32], index: 0, kind: input, shape index: {}]
  %s1 = inlined_call_operand.vmem [shape: bf16[32,32], index: 1, kind: input, shape index: {}]
  %s2 = inlined_call_operand.vmem [shape: f32[1,32], index: 2, kind: input, shape index: {}]
  %s3 = inlined_call_operand.vmem [shape: bf16[16,32], index: 3, kind: input, shape index: {}]
  %s4 = inlined_call_operand.vmem [shape: f32[1,32], index: 4, kind: input, shape index: {}]
  %s5 = inlined_call_operand.vmem [shape: f32[1,32], index: 5, kind: input, shape index: {}]
  %s6 = inlined_call_operand.vmem [shape: bf16[16,32], index: 6, kind: output, shape index: {}]
  %s7 = sld [smem:[#allocation0]]
  $region34: #{_lambda_.12} parent=0
    _
  %s9 = ssub.s32 1, %s7
  %s10 = scalar_select 0, %s9, %s7
  // Predicated region
  $region2: #{_lambda_.12} parent=0 // pred_check
    _
  $region3: #{_lambda_.12} parent=0 // pred_check_branch
    %12 = sbr.rel (0) target = $region5
  $region4: #{_lambda_.12} parent=0 // pred_region
    _
  $region5: #{_lambda_.12} parent=0 // pred_fallthru
    _
  // Predicated region
  $region6: #{_lambda_.12} parent=0 // pred_check
    _
  $region7: #{_lambda_.12} parent=0 // pred_check_branch
    %14 = sbr.rel (0) target = $region9
  $region8: #{_lambda_.12} parent=0 // pred_region
    _
  $region9: #{_lambda_.12} parent=0 // pred_fallthru
    _
  // Predicated region
  $region10: #{_lambda_.12} parent=0 // pred_check
    _
  $region11: #{_lambda_.12} parent=0 // pred_check_branch
    %16 = sbr.rel (0) target = $region13
  $region12: #{_lambda_.12} parent=0 // pred_region
    _
  $region13: #{_lambda_.12} parent=0 // pred_fallthru
    _
  // Predicated region
  $region14: #{_lambda_.12} parent=0 // pred_check
    _
  $region15: #{_lambda_.12} parent=0 // pred_check_branch
    %18 = sbr.rel (0) target = $region17
  $region16: #{_lambda_.12} parent=0 // pred_region
    _
  $region17: #{_lambda_.12} parent=0 // pred_fallthru
    _
  // Predicated region
  $region18: #{_lambda_.12} parent=0 // pred_check
    _
  $region19: #{_lambda_.12} parent=0 // pred_check_branch
    %20 = sbr.rel (0) target = $region21
  $region20: #{_lambda_.12} parent=0 // pred_region
    _
  $region21: #{_lambda_.12} parent=0 // pred_fallthru
    _
  // Predicated region
  $region22: #{_lambda_.12} parent=0 // pred_check
    _
  $region23: #{_lambda_.12} parent=0 // pred_check_branch
    %22 = sbr.rel (0) target = $region25
  $region24: #{_lambda_.12} parent=0 // pred_region
    _
  $region25: #{_lambda_.12} parent=0 // pred_fallthru
    _
  %v24 = vld [vmem:[%s0] sm:$0xf]
  %v25 = vld [vmem:[%s0 + $0x4] sm:$0xf]
  %v26 = vld [vmem:[%s1] sm:$0xf]
  %v27 = vld [vmem:[%s1 + $0x4] sm:$0xf]
  %v28 = vld [vmem:[%s1 + $0x8] sm:$0xf]
  %v29 = vld [vmem:[%s1 + $0xc] sm:$0xf]
  %v30 = vld [vmem:[%s2] sm:$0x1]
  %v32 = vlaneseq
  %v33 = vshrl.u32 %v32, 7
  %v34 = vsub.s32 0, %v33
  %v35 = vrot.slane %v30, %v34
  %v39 = vunpack.c.l.b16 %v24
  %v40 = vunpack.c.l.b16 %v25
  %v41 = vpack.c.b16 %v40, %v39
  %v46 = vunpack.c.l.b16 %v26
  %v47 = vunpack.c.l.b16 %v27
  %v48 = vunpack.c.l.b16 %v28
  %v49 = vunpack.c.l.b16 %v29
  %v50 = vpack.c.b16 %v47, %v46
  %v51 = vpack.c.b16 %v49, %v48
  %vm54 = vcmask 261120
  %v56 = vsel %vm54, %v41, 0
  %58 = vmatprep.subr.bf16.mxu0 0
  %59 = vmatpush1.bf16.msra.mxu0 %v50
  %60 = vmatprep.subr.bf16.mxu0 0
  %61 = vmatpush1.bf16.msra.mxu0 %v51
  %62 = vmatprep.subr.bf16.mxu0 0
  %63 = vmatpush1.bf16.msra.mxu0 0
  %64 = vmatprep.subr.bf16.mxu0 0
  %65 = vmatpush1.bf16.msra.mxu0 0
  %66 = vmatprep.subr.bf16.mxu0 0
  %67 = vmatpush1.bf16.msra.mxu0 0
  %68 = vmatprep.subr.bf16.mxu0 0
  %69 = vmatpush1.bf16.msra.mxu0 0
  %70 = vmatprep.subr.bf16.mxu0 0
  %71 = vmatpush1.bf16.msra.mxu0 0
  %72 = vmatprep.subr.bf16.mxu0 0
  %73 = vmatpush1.bf16.msra.mxu0 0
  %74 = vmatprep.subr.bf16.mxu0 0
  %75 = vmatpush1.bf16.msra.mxu0 0
  %76 = vmatprep.subr.bf16.mxu0 0
  %77 = vmatpush1.bf16.msra.mxu0 0
  %78 = vmatprep.subr.bf16.mxu0 0
  %79 = vmatpush1.bf16.msra.mxu0 0
  %80 = vmatprep.subr.bf16.mxu0 0
  %81 = vmatpush1.bf16.msra.mxu0 0
  %82 = vmatprep.subr.bf16.mxu0 0
  %83 = vmatpush1.bf16.msra.mxu0 0
  %84 = vmatprep.subr.bf16.mxu0 0
  %85 = vmatpush1.bf16.msra.mxu0 0
  %86 = vmatprep.subr.bf16.mxu0 0
  %87 = vmatpush1.bf16.msra.mxu0 0
  %88 = vmatprep.subr.bf16.mxu0 0
  %89 = vmatpush1.bf16.msra.mxu0 0
  %90 = vmatprep.mubr.bf16.mxu0 0
  %91 = vmatmul.mubr.bf16.gmra.mrb[0].mxu0 %v56
  %v92 = vpop.f32.mrb[0].mxu0
  %v93 = vadd.f32 %v35, %v92
  %v94 = vpop.f32.mrb[0].mxu0
  %v95 = vpop.f32.mrb[0].mxu0
  %v96 = vadd.f32 %v35, %v95
  %v97 = vpop.f32.mrb[0].mxu0
  %98 = vdwg.mxu0
  %v99 = vld [vmem:[%s3] sm:$0xf]
  %v100 = vld [vmem:[%s3 + $0x4] sm:$0xf]
  %v101 = vunpack.c.l.bf16 %v99
  %v102 = vunpack.c.l.bf16 %v100
  %v103 = vadd.f32 %v101, %v93
  %v104 = vadd.f32 %v102, %v96
  %v105 = vsel %vm54, %v103, 0.0
  %106 = vadd.xlane.f32.xlu0 %v105
  %v107 = vpop.xlane.xlu0 %106
  %v108 = vsel %vm54, %v104, 0.0
  %109 = vadd.xlane.f32.xlu0 %v108
  %v110 = vpop.xlane.xlu0 %109
  %v111 = vrcp.pop 32.0
  %v112 = vmul.f32 %v107, %v111
  %v113 = vmul.f32 %v110, %v111
  %v114 = vsub.f32 %v103, %v112
  %v115 = vsub.f32 %v104, %v113
  %v116 = vmul.f32 %v114, %v114
  %v117 = vmul.f32 %v115, %v115
  %v118 = vsel %vm54, %v116, 0.0
  %119 = vadd.xlane.f32.xlu0 %v118
  %v120 = vpop.xlane.xlu0 %119
  %v121 = vsel %vm54, %v117, 0.0
  %122 = vadd.xlane.f32.xlu0 %v121
  %v123 = vpop.xlane.xlu0 %122
  %v124 = vmul.f32 %v120, %v111
  %v125 = vmul.f32 %v123, %v111
  %v126 = vadd.f32 %v124, 1e-05
  %v127 = vadd.f32 %v125, 1e-05
  %v128 = vrsqrt.pop %v126
  %v129 = vrsqrt.pop %v127
  %v130 = vmul.f32 %v114, %v128
  %v131 = vmul.f32 %v115, %v129
  %v132 = vld [vmem:[%s4] sm:$0x1]
  %v134 = vlaneseq
  %v135 = vshrl.u32 %v134, 7
  %v136 = vsub.s32 0, %v135
  %v137 = vrot.slane %v132, %v136
  %v139 = vmul.f32 %v130, %v137
  %v140 = vmul.f32 %v131, %v137
  %v141 = vld [vmem:[%s5] sm:$0x1]
  %v143 = vlaneseq
  %v144 = vshrl.u32 %v143, 7
  %v145 = vsub.s32 0, %v144
  %v146 = vrot.slane %v141, %v145
  %v148 = vadd.f32 %v139, %v146
  %v149 = vadd.f32 %v140, %v146
  %v150 = vpack.c.bf16 %v149, %v148
  %v152 = vunpack.c.l.b16 %v150
  %v153 = vunpack.c.h.b16 %v150
  %v154 = vpack.c.b16 %v152, %v152
  %v155 = vpack.c.b16 %v153, %v153
  %vm158 = vcmask 257024
  %159 = vst.msk [vmem:[%s6] sm:$0xf] %vm158, %v154
  %160 = vst.msk [vmem:[%s6 + $0x4] sm:$0xf] %vm158, %v155
  // Predicated region
  $region26: #{_lambda_.12} parent=0 // pred_check
    _
  $region27: #{_lambda_.12} parent=0 // pred_check_branch
    %162 = sbr.rel (0) target = $region29
  $region28: #{_lambda_.12} parent=0 // pred_region
    _
  $region29: #{_lambda_.12} parent=0 // pred_fallthru
    _
  // Predicated region
  $region30: #{_lambda_.12} parent=0 // pred_check
    _
  $region31: #{_lambda_.12} parent=0 // pred_check_branch
    %164 = sbr.rel (0) target = $region33
  $region32: #{_lambda_.12} parent=0 // pred_region
    _
  $region33: #{_lambda_.12} parent=0 // pred_fallthru
    _

// kernel: _lambda_.13
$region0: #{_lambda_.13}
  #allocation0 [shape = 'u32[]', space=smem, size = 0x4, offset = 0x4, fixed_abs, tag = 'smem constant byte address 0x4 - core index']
  #allocation1 [shape = 'u32[144,128]{1,0:T(1,128)}', space=vmem, size = 0x12000, scoped, tag = 'internal scratch']
  %s0 = inlined_call_operand.vmem [shape: bf16[16,32], index: 0, kind: input, shape index: {}]
  %s1 = inlined_call_operand.vmem [shape: bf16[32,64], index: 1, kind: input, shape index: {}]
  %s2 = inlined_call_operand.vmem [shape: f32[1,64], index: 2, kind: input, shape index: {}]
  %s3 = inlined_call_operand.vmem [shape: bf16[64,32], index: 3, kind: input, shape index: {}]
  %s4 = inlined_call_operand.vmem [shape: f32[1,32], index: 4, kind: input, shape index: {}]
  %s5 = inlined_call_operand.vmem [shape: f32[1,32], index: 5, kind: input, shape index: {}]
  %s6 = inlined_call_operand.vmem [shape: f32[1,32], index: 6, kind: input, shape index: {}]
  %s7 = inlined_call_operand.vmem [shape: bf16[16,32], index: 7, kind: output, shape index: {}]
  %s8 = sld [smem:[#allocation0]]
  $region38: #{_lambda_.13} parent=0
    _
  %s10 = ssub.s32 1, %s8
  %s11 = scalar_select 0, %s10, %s8
  // Predicated region
  $region2: #{_lambda_.13} parent=0 // pred_check
    _
  $region3: #{_lambda_.13} parent=0 // pred_check_branch
    %13 = sbr.rel (0) target = $region5
  $region4: #{_lambda_.13} parent=0 // pred_region
    _
  $region5: #{_lambda_.13} parent=0 // pred_fallthru
    _
  // Predicated region
  $region6: #{_lambda_.13} parent=0 // pred_check
    _
  $region7: #{_lambda_.13} parent=0 // pred_check_branch
    %15 = sbr.rel (0) target = $region9
  $region8: #{_lambda_.13} parent=0 // pred_region
    _
  $region9: #{_lambda_.13} parent=0 // pred_fallthru
    _
  // Predicated region
  $region10: #{_lambda_.13} parent=0 // pred_check
    _
  $region11: #{_lambda_.13} parent=0 // pred_check_branch
    %17 = sbr.rel (0) target = $region13
  $region12: #{_lambda_.13} parent=0 // pred_region
    _
  $region13: #{_lambda_.13} parent=0 // pred_fallthru
    _
  // Predicated region
  $region14: #{_lambda_.13} parent=0 // pred_check
    _
  $region15: #{_lambda_.13} parent=0 // pred_check_branch
    %19 = sbr.rel (0) target = $region17
  $region16: #{_lambda_.13} parent=0 // pred_region
    _
  $region17: #{_lambda_.13} parent=0 // pred_fallthru
    _
  // Predicated region
  $region18: #{_lambda_.13} parent=0 // pred_check
    _
  $region19: #{_lambda_.13} parent=0 // pred_check_branch
    %21 = sbr.rel (0) target = $region21
  $region20: #{_lambda_.13} parent=0 // pred_region
    _
  $region21: #{_lambda_.13} parent=0 // pred_fallthru
    _
  // Predicated region
  $region22: #{_lambda_.13} parent=0 // pred_check
    _
  $region23: #{_lambda_.13} parent=0 // pred_check_branch
    %23 = sbr.rel (0) target = $region25
  $region24: #{_lambda_.13} parent=0 // pred_region
    _
  $region25: #{_lambda_.13} parent=0 // pred_fallthru
    _
  // Predicated region
  $region26: #{_lambda_.13} parent=0 // pred_check
    _
  $region27: #{_lambda_.13} parent=0 // pred_check_branch
    %25 = sbr.rel (0) target = $region29
  $region28: #{_lambda_.13} parent=0 // pred_region
    _
  $region29: #{_lambda_.13} parent=0 // pred_fallthru
    _
  %v27 = vld [vmem:[%s0] sm:$0xf]
  %v28 = vld [vmem:[%s0 + $0x4] sm:$0xf]
  %v29 = vld [vmem:[%s1] sm:$0xf]
  %v30 = vld [vmem:[%s1 + $0x4] sm:$0xf]
  %v31 = vld [vmem:[%s1 + $0x8] sm:$0xf]
  %v32 = vld [vmem:[%s1 + $0xc] sm:$0xf]
  %v33 = vld [vmem:[%s2] sm:$0x1]
  %v35 = vlaneseq
  %v36 = vshrl.u32 %v35, 7
  %v37 = vsub.s32 0, %v36
  %v38 = vrot.slane %v33, %v37
  %v42 = vunpack.c.l.b16 %v27
  %v43 = vunpack.c.l.b16 %v28
  %v44 = vpack.c.b16 %v43, %v42
  %v49 = vunpack.c.l.b16 %v29
  %v50 = vunpack.c.l.b16 %v30
  %v51 = vunpack.c.l.b16 %v31
  %v52 = vunpack.c.l.b16 %v32
  %v53 = vpack.c.b16 %v50, %v49
  %v54 = vpack.c.b16 %v52, %v51
  %vm57 = vcmask 261120
  %v59 = vsel %vm57, %v44, 0
  %61 = vmatprep.subr.bf16.mxu0 0
  %62 = vmatpush1.bf16.msra.mxu0 %v53
  %63 = vmatprep.subr.bf16.mxu0 0
  %64 = vmatpush1.bf16.msra.mxu0 %v54
  %65 = vmatprep.subr.bf16.mxu0 0
  %66 = vmatpush1.bf16.msra.mxu0 0
  %67 = vmatprep.subr.bf16.mxu0 0
  %68 = vmatpush1.bf16.msra.mxu0 0
  %69 = vmatprep.subr.bf16.mxu0 0
  %70 = vmatpush1.bf16.msra.mxu0 0
  %71 = vmatprep.subr.bf16.mxu0 0
  %72 = vmatpush1.bf16.msra.mxu0 0
  %73 = vmatprep.subr.bf16.mxu0 0
  %74 = vmatpush1.bf16.msra.mxu0 0
  %75 = vmatprep.subr.bf16.mxu0 0
  %76 = vmatpush1.bf16.msra.mxu0 0
  %77 = vmatprep.subr.bf16.mxu0 0
  %78 = vmatpush1.bf16.msra.mxu0 0
  %79 = vmatprep.subr.bf16.mxu0 0
  %80 = vmatpush1.bf16.msra.mxu0 0
  %81 = vmatprep.subr.bf16.mxu0 0
  %82 = vmatpush1.bf16.msra.mxu0 0
  %83 = vmatprep.subr.bf16.mxu0 0
  %84 = vmatpush1.bf16.msra.mxu0 0
  %85 = vmatprep.subr.bf16.mxu0 0
  %86 = vmatpush1.bf16.msra.mxu0 0
  %87 = vmatprep.subr.bf16.mxu0 0
  %88 = vmatpush1.bf16.msra.mxu0 0
  %89 = vmatprep.subr.bf16.mxu0 0
  %90 = vmatpush1.bf16.msra.mxu0 0
  %91 = vmatprep.subr.bf16.mxu0 0
  %92 = vmatpush1.bf16.msra.mxu0 0
  %93 = vmatprep.mubr.bf16.mxu0 0
  %94 = vmatmul.mubr.bf16.gmra.mrb[0].mxu0 %v59
  %v95 = vpop.f32.mrb[0].mxu0
  %v96 = vadd.f32 %v38, %v95
  %v97 = vpop.f32.mrb[0].mxu0
  %v98 = vpop.f32.mrb[0].mxu0
  %v99 = vadd.f32 %v38, %v98
  %v100 = vpop.f32.mrb[0].mxu0
  %101 = vdwg.mxu0
  %v102 = vmax.f32 %v96, 0.0
  %v103 = vmax.f32 %v99, 0.0
  %v104 = vpack.c.bf16 %v103, %v102
  %v105 = vld [vmem:[%s3] sm:$0xf]
  %v106 = vld [vmem:[%s3 + $0x4] sm:$0xf]
  %v107 = vld [vmem:[%s3 + $0x8] sm:$0xf]
  %v108 = vld [vmem:[%s3 + $0xc] sm:$0xf]
  %v109 = vld [vmem:[%s3 + $0x10] sm:$0xf]
  %v110 = vld [vmem:[%s3 + $0x14] sm:$0xf]
  %v111 = vld [vmem:[%s3 + $0x18] sm:$0xf]
  %v112 = vld [vmem:[%s3 + $0x1c] sm:$0xf]
  %v113 = vld [vmem:[%s4] sm:$0x1]
  %v115 = vlaneseq
  %v116 = vshrl.u32 %v115, 7
  %v117 = vsub.s32 0, %v116
  %v118 = vrot.slane %v113, %v117
  %v128 = vunpack.c.l.b16 %v105
  %v129 = vunpack.c.l.b16 %v106
  %v130 = vunpack.c.l.b16 %v107
  %v131 = vunpack.c.l.b16 %v108
  %v132 = vunpack.c.l.b16 %v109
  %v133 = vunpack.c.l.b16 %v110
  %v134 = vunpack.c.l.b16 %v111
  %v135 = vunpack.c.l.b16 %v112
  %v136 = vpack.c.b16 %v129, %v128
  %v137 = vpack.c.b16 %v131, %v130
  %v138 = vpack.c.b16 %v133, %v132
  %v139 = vpack.c.b16 %v135, %v134
  %vm144 = vcmask 523264
  %v146 = vsel %vm144, %v104, 0
  %148 = vmatprep.subr.bf16.mxu0 0
  %149 = vmatpush1.bf16.msra.mxu0 %v136
  %150 = vmatprep.subr.bf16.mxu0 0
  %151 = vmatpush1.bf16.msra.mxu0 %v137
  %152 = vmatprep.subr.bf16.mxu0 0
  %153 = vmatpush1.bf16.msra.mxu0 %v138
  %154 = vmatprep.subr.bf16.mxu0 0
  %155 = vmatpush1.bf16.msra.mxu0 %v139
  %156 = vmatprep.subr.bf16.mxu0 0
  %157 = vmatpush1.bf16.msra.mxu0 0
  %158 = vmatprep.subr.bf16.mxu0 0
  %159 = vmatpush1.bf16.msra.mxu0 0
  %160 = vmatprep.subr.bf16.mxu0 0
  %161 = vmatpush1.bf16.msra.mxu0 0
  %162 = vmatprep.subr.bf16.mxu0 0
  %163 = vmatpush1.bf16.msra.mxu0 0
  %164 = vmatprep.subr.bf16.mxu0 0
  %165 = vmatpush1.bf16.msra.mxu0 0
  %166 = vmatprep.subr.bf16.mxu0 0
  %167 = vmatpush1.bf16.msra.mxu0 0
  %168 = vmatprep.subr.bf16.mxu0 0
  %169 = vmatpush1.bf16.msra.mxu0 0
  %170 = vmatprep.subr.bf16.mxu0 0
  %171 = vmatpush1.bf16.msra.mxu0 0
  %172 = vmatprep.subr.bf16.mxu0 0
  %173 = vmatpush1.bf16.msra.mxu0 0
  %174 = vmatprep.subr.bf16.mxu0 0
  %175 = vmatpush1.bf16.msra.mxu0 0
  %176 = vmatprep.subr.bf16.mxu0 0
  %177 = vmatpush1.bf16.msra.mxu0 0
  %178 = vmatprep.subr.bf16.mxu0 0
  %179 = vmatpush1.bf16.msra.mxu0 0
  %180 = vmatprep.mubr.bf16.mxu0 0
  %181 = vmatmul.mubr.bf16.gmra.mrb[0].mxu0 %v146
  %v182 = vpop.f32.mrb[0].mxu0
  %v183 = vadd.f32 %v118, %v182
  %v184 = vpop.f32.mrb[0].mxu0
  %v185 = vpop.f32.mrb[0].mxu0
  %v186 = vadd.f32 %v118, %v185
  %v187 = vpop.f32.mrb[0].mxu0
  %188 = vdwg.mxu0
  %v189 = vunpack.c.l.bf16 %v27
  %v190 = vunpack.c.l.bf16 %v28
  %v191 = vadd.f32 %v189, %v183
  %v192 = vadd.f32 %v190, %v186
  %v193 = vsel %vm57, %v191, 0.0
  %194 = vadd.xlane.f32.xlu0 %v193
  %v195 = vpop.xlane.xlu0 %194
  %v196 = vsel %vm57, %v192, 0.0
  %197 = vadd.xlane.f32.xlu0 %v196
  %v198 = vpop.xlane.xlu0 %197
  %v199 = vrcp.pop 32.0
  %v200 = vmul.f32 %v195, %v199
  %v201 = vmul.f32 %v198, %v199
  %v202 = vsub.f32 %v191, %v200
  %v203 = vsub.f32 %v192, %v201
  %v204 = vmul.f32 %v202, %v202
  %v205 = vmul.f32 %v203, %v203
  %v206 = vsel %vm57, %v204, 0.0
  %207 = vadd.xlane.f32.xlu0 %v206
  %v208 = vpop.xlane.xlu0 %207
  %v209 = vsel %vm57, %v205, 0.0
  %210 = vadd.xlane.f32.xlu0 %v209
  %v211 = vpop.xlane.xlu0 %210
  %v212 = vmul.f32 %v208, %v199
  %v213 = vmul.f32 %v211, %v199
  %v214 = vadd.f32 %v212, 1e-05
  %v215 = vadd.f32 %v213, 1e-05
  %v216 = vrsqrt.pop %v214
  %v217 = vrsqrt.pop %v215
  %v218 = vmul.f32 %v202, %v216
  %v219 = vmul.f32 %v203, %v217
  %v220 = vld [vmem:[%s5] sm:$0x1]
  %v222 = vlaneseq
  %v223 = vshrl.u32 %v222, 7
  %v224 = vsub.s32 0, %v223
  %v225 = vrot.slane %v220, %v224
  %v227 = vmul.f32 %v218, %v225
  %v228 = vmul.f32 %v219, %v225
  %v229 = vld [vmem:[%s6] sm:$0x1]
  %v231 = vlaneseq
  %v232 = vshrl.u32 %v231, 7
  %v233 = vsub.s32 0, %v232
  %v234 = vrot.slane %v229, %v233
  %v236 = vadd.f32 %v227, %v234
  %v237 = vadd.f32 %v228, %v234
  %v238 = vpack.c.bf16 %v237, %v236
  %v240 = vunpack.c.l.b16 %v238
  %v241 = vunpack.c.h.b16 %v238
  %v242 = vpack.c.b16 %v240, %v240
  %v243 = vpack.c.b16 %v241, %v241
  %vm246 = vcmask 257024
  %247 = vst.msk [vmem:[%s7] sm:$0xf] %vm246, %v242
  %248 = vst.msk [vmem:[%s7 + $0x4] sm:$0xf] %vm246, %v243
  // Predicated region
  $region30: #{_lambda_.13} parent=0 // pred_check
    _
  $region31: #{_lambda_.13} parent=0 // pred_check_branch
    %250 = sbr.rel (0) target = $region33
  $region32: #{_lambda_.13} parent=0 // pred_region
    _
  $region33: #{_lambda_.13} parent=0 // pred_fallthru
    _
  // Predicated region
  $region34: #{_lambda_.13} parent=0 // pred_check
    _
  $region35: #{_lambda_.13} parent=0 // pred_check_branch
    %252 = sbr.rel (0) target = $region37
  $region36: #{_lambda_.13} parent=0 // pred_region
    _
  $region37: #{_lambda_.13} parent=0 // pred_fallthru
    _

// kernel: _lambda_.11
$region0: #{_lambda_.11}
  #allocation0 [shape = 'u32[]', space=smem, size = 0x4, offset = 0x4, fixed_abs, tag = 'smem constant byte address 0x4 - core index']
  #allocation1 [shape = 'u32[144,128]{1,0:T(1,128)}', space=vmem, size = 0x12000, scoped, tag = 'internal scratch']
  %s0 = inlined_call_operand.vmem [shape: bf16[2,4,8,8], index: 0, kind: input, shape index: {}]
  %s1 = inlined_call_operand.vmem [shape: bf16[2,4,16,8], index: 1, kind: input, shape index: {}]
  %s2 = inlined_call_operand.vmem [shape: bf16[2,4,16,8], index: 2, kind: input, shape index: {}]
  %s3 = inlined_call_operand.vmem [shape: bf16[4,16,8], index: 3, kind: input, shape index: {}]
  %s4 = inlined_call_operand.vmem [shape: bf16[4,1,8], index: 4, kind: input, shape index: {}]
  %s5 = inlined_call_operand.vmem [shape: bf16[4,1,8], index: 5, kind: input, shape index: {}]
  %s6 = inlined_call_operand.vmem [shape: f32[8,16], index: 6, kind: input, shape index: {}]
  %s7 = inlined_call_operand.vmem [shape: bf16[2,8,32], index: 7, kind: output, shape index: {}]
  %s8 = sld [smem:[#allocation0]]
  $region61: #{_lambda_.11} parent=0
    _
  %s10 = ssub.s32 1, %s8
  %s11 = scalar_select 0, %s10, %s8
  loop: start=0, step=1, limit=4
  $region2: #{_lambda_.11} parent=0 // loop_pre_header
    _
  $region3: #{_lambda_.11} parent=0 // loop_header
    %s13 = sphi 0, %s17
    %p14 = scmp.ge.s32.totalorder %s13, 4
    %s20 = sphi 0, %s32
    %s21 = sphi 0, %s28
    %s22 = sphi 0, %s20
    %s23 = sphi 0, %s21
    %s24 = sphi 0, %s22
    %s25 = sphi 0, %s23
    %s37 = sphi 0, %s39
    %s40 = sphi 0, %s37
    %s41 = sphi 0, %s40
    %s57 = sphi 0, %s41
    %s65 = sphi 0, %s67
    %s68 = sphi 0, %s65
    %s69 = sphi 0, %s68
    %s85 = sphi 0, %s69
    %s93 = sphi 0, %s95
    %s96 = sphi 0, %s93
    %s97 = sphi 0, %s96
    %s113 = sphi 0, %s97
    %s119 = sphi 0, %s121
    %s122 = sphi 0, %s119
    %s123 = sphi 0, %s122
    %s139 = sphi 0, %s123
    %s145 = sphi 0, %s147
    %s148 = sphi 0, %s145
    %s149 = sphi 0, %s148
    %s165 = sphi 0, %s149
    %s171 = sphi 0, %s173
    %s174 = sphi 0, %s171
    %s175 = sphi 0, %s174
    %s191 = sphi 0, %s175
    %s195 = sphi 0, %s195
    %s197 = sphi 0, %s195
    %s198 = sphi 0, %s197
    %s212 = sphi 0, %s198
    %s220 = sphi 0, %s222
    %s223 = sphi 0, %s220
    %s224 = sphi 0, %s223
    %s240 = sphi 0, %s224
  $region4: #{_lambda_.11} parent=0 // loop_header_branch
    %16 = sbr.rel (%p14) target = $region8
  $region5: #{_lambda_.11} parent=0 // loop_body
    %s18 = ssub.s32 %s13, 1
    %s19 = ssub.s32 %s13, 2
    %s26 = sadd.s32 1, %s21
    %p27 = scmp.ge.s32.totalorder %s26, 1
    %s28 = scalar_select %p27, 0, %s26
    %s29 = sadd.s32 1, %s20
    %s30 = scalar_select %p27, %s29, %s20
    %p31 = scmp.ge.s32.totalorder %s30, 2
    %s32 = scalar_select %p31, 0, %s30
    %s33 = ssub.s32 %s20, %s32
    %s34 = ssub.s32 %s21, %s28
    %s35 = sor.u32 %s33, %s34
    %p36 = scmp.eq.s32.totalorder %s35, 0
    %s38 = sadd.s32 %s37, 1
    %s39 = scalar_select %p36, %s37, %s38
    %p42 = pneg %p36
    %p43 = scmp.eq.s32.totalorder %s13, 1
    %p44 = por %p42, %p43
    %p45 = scmp.ne.s32.totalorder %s37, %s40
    %p46 = scmp.eq.s32.totalorder %s13, 0
    %p47 = por %p45, %p46
    %p48 = scmp.ne.s32.totalorder %s37, %s40
    %p49 = scmp.eq.s32.totalorder %s18, 1
    %p50 = por %p48, %p49
    %p51 = scmp.ne.s32.totalorder %s40, %s41
    %p52 = scmp.eq.s32.totalorder %s18, 0
    %p53 = por %p51, %p52
    %p54 = scmp.ne.s32.totalorder %s40, %s41
    %p55 = scmp.eq.s32.totalorder %s19, 1
    %p56 = por %p54, %p55
    %p58 = scmp.ne.s32.totalorder %s41, %s57
    %p59 = scmp.eq.s32.totalorder %s19, 0
    %p60 = por %p58, %p59
    %s61 = ssub.s32 %s20, %s32
    %s62 = ssub.s32 %s21, %s28
    %s63 = sor.u32 %s61, %s62
    %p64 = scmp.eq.s32.totalorder %s63, 0
    %s66 = sadd.s32 %s65, 1
    %s67 = scalar_select %p64, %s65, %s66
    %p70 = pneg %p64
    %p71 = scmp.eq.s32.totalorder %s13, 1
    %p72 = por %p70, %p71
    %p73 = scmp.ne.s32.totalorder %s65, %s68
    %p74 = scmp.eq.s32.totalorder %s13, 0
    %p75 = por %p73, %p74
    %p76 = scmp.ne.s32.totalorder %s65, %s68
    %p77 = scmp.eq.s32.totalorder %s18, 1
    %p78 = por %p76, %p77
    %p79 = scmp.ne.s32.totalorder %s68, %s69
    %p80 = scmp.eq.s32.totalorder %s18, 0
    %p81 = por %p79, %p80
    %p82 = scmp.ne.s32.totalorder %s68, %s69
    %p83 = scmp.eq.s32.totalorder %s19, 1
    %p84 = por %p82, %p83
    %p86 = scmp.ne.s32.totalorder %s69, %s85
    %p87 = scmp.eq.s32.totalorder %s19, 0
    %p88 = por %p86, %p87
    %s89 = ssub.s32 %s20, %s32
    %s90 = ssub.s32 %s21, %s28
    %s91 = sor.u32 %s89, %s90
    %p92 = scmp.eq.s32.totalorder %s91, 0
    %s94 = sadd.s32 %s93, 1
    %s95 = scalar_select %p92, %s93, %s94
    %p98 = pneg %p92
    %p99 = scmp.eq.s32.totalorder %s13, 1
    %p100 = por %p98, %p99
    %p101 = scmp.ne.s32.totalorder %s93, %s96
    %p102 = scmp.eq.s32.totalorder %s13, 0
    %p103 = por %p101, %p102
    %p104 = scmp.ne.s32.totalorder %s93, %s96
    %p105 = scmp.eq.s32.totalorder %s18, 1
    %p106 = por %p104, %p105
    %p107 = scmp.ne.s32.totalorder %s96, %s97
    %p108 = scmp.eq.s32.totalorder %s18, 0
    %p109 = por %p107, %p108
    %p110 = scmp.ne.s32.totalorder %s96, %s97
    %p111 = scmp.eq.s32.totalorder %s19, 1
    %p112 = por %p110, %p111
    %p114 = scmp.ne.s32.totalorder %s97, %s113
    %p115 = scmp.eq.s32.totalorder %s19, 0
    %p116 = por %p114, %p115
    %s117 = ssub.s32 %s21, %s28
    %p118 = scmp.eq.s32.totalorder %s117, 0
    %s120 = sadd.s32 %s119, 1
    %s121 = scalar_select %p118, %s119, %s120
    %p124 = pneg %p118
    %p125 = scmp.eq.s32.totalorder %s13, 1
    %p126 = por %p124, %p125
    %p127 = scmp.ne.s32.totalorder %s119, %s122
    %p128 = scmp.eq.s32.totalorder %s13, 0
    %p129 = por %p127, %p128
    %p130 = scmp.ne.s32.totalorder %s119, %s122
    %p131 = scmp.eq.s32.totalorder %s18, 1
    %p132 = por %p130, %p131
    %p133 = scmp.ne.s32.totalorder %s122, %s123
    %p134 = scmp.eq.s32.totalorder %s18, 0
    %p135 = por %p133, %p134
    %p136 = scmp.ne.s32.totalorder %s122, %s123
    %p137 = scmp.eq.s32.totalorder %s19, 1
    %p138 = por %p136, %p137
    %p140 = scmp.ne.s32.totalorder %s123, %s139
    %p141 = scmp.eq.s32.totalorder %s19, 0
    %p142 = por %p140, %p141
    %s143 = ssub.s32 %s21, %s28
    %p144 = scmp.eq.s32.totalorder %s143, 0
    %s146 = sadd.s32 %s145, 1
    %s147 = scalar_select %p144, %s145, %s146
    %p150 = pneg %p144
    %p151 = scmp.eq.s32.totalorder %s13, 1
    %p152 = por %p150, %p151
    %p153 = scmp.ne.s32.totalorder %s145, %s148
    %p154 = scmp.eq.s32.totalorder %s13, 0
    %p155 = por %p153, %p154
    %p156 = scmp.ne.s32.totalorder %s145, %s148
    %p157 = scmp.eq.s32.totalorder %s18, 1
    %p158 = por %p156, %p157
    %p159 = scmp.ne.s32.totalorder %s148, %s149
    %p160 = scmp.eq.s32.totalorder %s18, 0
    %p161 = por %p159, %p160
    %p162 = scmp.ne.s32.totalorder %s148, %s149
    %p163 = scmp.eq.s32.totalorder %s19, 1
    %p164 = por %p162, %p163
    %p166 = scmp.ne.s32.totalorder %s149, %s165
    %p167 = scmp.eq.s32.totalorder %s19, 0
    %p168 = por %p166, %p167
    %s169 = ssub.s32 %s21, %s28
    %p170 = scmp.eq.s32.totalorder %s169, 0
    %s172 = sadd.s32 %s171, 1
    %s173 = scalar_select %p170, %s171, %s172
    %p176 = pneg %p170
    %p177 = scmp.eq.s32.totalorder %s13, 1
    %p178 = por %p176, %p177
    %p179 = scmp.ne.s32.totalorder %s171, %s174
    %p180 = scmp.eq.s32.totalorder %s13, 0
    %p181 = por %p179, %p180
    %p182 = scmp.ne.s32.totalorder %s171, %s174
    %p183 = scmp.eq.s32.totalorder %s18, 1
    %p184 = por %p182, %p183
    %p185 = scmp.ne.s32.totalorder %s174, %s175
    %p186 = scmp.eq.s32.totalorder %s18, 0
    %p187 = por %p185, %p186
    %p188 = scmp.ne.s32.totalorder %s174, %s175
    %p189 = scmp.eq.s32.totalorder %s19, 1
    %p190 = por %p188, %p189
    %p192 = scmp.ne.s32.totalorder %s175, %s191
    %p193 = scmp.eq.s32.totalorder %s19, 0
    %p194 = por %p192, %p193
    %s196 = sadd.s32 %s195, 1
    %p199 = scmp.eq.s32.totalorder %s13, 1
    %p200 = scmp.ne.s32.totalorder %s195, %s197
    %p201 = scmp.eq.s32.totalorder %s13, 0
    %p202 = por %p200, %p201
    %p203 = scmp.ne.s32.totalorder %s195, %s197
    %p204 = scmp.eq.s32.totalorder %s18, 1
    %p205 = por %p203, %p204
    %p206 = scmp.ne.s32.totalorder %s197, %s198
    %p207 = scmp.eq.s32.totalorder %s18, 0
    %p208 = por %p206, %p207
    %p209 = scmp.ne.s32.totalorder %s197, %s198
    %p210 = scmp.eq.s32.totalorder %s19, 1
    %p211 = por %p209, %p210
    %p213 = scmp.ne.s32.totalorder %s198, %s212
    %p214 = scmp.eq.s32.totalorder %s19, 0
    %p215 = por %p213, %p214
    %s216 = ssub.s32 %s20, %s32
    %s217 = ssub.s32 %s21, %s28
    %s218 = sor.u32 %s216, %s217
    %p219 = scmp.eq.s32.totalorder %s218, 0
    %s221 = sadd.s32 %s220, 1
    %s222 = scalar_select %p219, %s220, %s221
    %p225 = pneg %p219
    %p226 = scmp.eq.s32.totalorder %s13, 1
    %p227 = por %p225, %p226
    %p228 = scmp.ne.s32.totalorder %s220, %s223
    %p229 = scmp.eq.s32.totalorder %s13, 0
    %p230 = por %p228, %p229
    %p231 = scmp.ne.s32.totalorder %s220, %s223
    %p232 = scmp.eq.s32.totalorder %s18, 1
    %p233 = por %p231, %p232
    %p234 = scmp.ne.s32.totalorder %s223, %s224
    %p235 = scmp.eq.s32.totalorder %s18, 0
    %p236 = por %p234, %p235
    %p237 = scmp.ne.s32.totalorder %s223, %s224
    %p238 = scmp.eq.s32.totalorder %s19, 1
    %p239 = por %p237, %p238
    %p241 = scmp.ne.s32.totalorder %s224, %s240
    %p242 = scmp.eq.s32.totalorder %s19, 0
    %p243 = por %p241, %p242
    %p244 = scmp.le.s32.totalorder 1, %s13
    %p245 = scmp.lt.s32.totalorder %s13, 3
    %p246 = pnand %p244, %p245
    %p247 = pneg %p246
    // Predicated region
    $region9: #{_lambda_.11} parent=5 // pred_check
      _
    $region10: #{_lambda_.11} parent=5 // pred_check_branch
      %249 = sbr.rel (%p246) target = $region12
    $region11: #{_lambda_.11} parent=5 // pred_region
      %s250 = ssub.s32 %s13, 1
      // Predicated region
      $region13: #{_lambda_.11} parent=11 // pred_check
        %p251 = pneg %p135
      $region14: #{_lambda_.11} parent=11 // pred_check_branch
        %253 = sbr.rel (%p251) target = $region16
      $region15: #{_lambda_.11} parent=11 // pred_region
        %s254 = smul.u32 4, %s23
        %p255 = scmp.lt.s32.totalorder %s254, 3
        %s256 = scalar_select %p255, %s254, 3
        %s257 = smul.addr %s256, 2
        %s258 = smul.addr %s257, 4
        %s259 = scalar_lea.vmem %s3, %s258
        %s260 = smul.u32 4, %s23
      $region16: #{_lambda_.11} parent=11 // pred_fallthru
        _
      // Predicated region
      $region17: #{_lambda_.11} parent=11 // pred_check
        %p261 = pneg %p161
      $region18: #{_lambda_.11} parent=11 // pred_check_branch
        %263 = sbr.rel (%p261) target = $region20
      $region19: #{_lambda_.11} parent=11 // pred_region
        %s264 = smul.u32 4, %s23
        %p265 = scmp.lt.s32.totalorder %s264, 3
        %s266 = scalar_select %p265, %s264, 3
        %s267 = scalar_lea.vmem %s4, %s266
        %s268 = smul.u32 4, %s23
      $region20: #{_lambda_.11} parent=11 // pred_fallthru
        _
      // Predicated region
      $region21: #{_lambda_.11} parent=11 // pred_check
        %p269 = pneg %p187
      $region22: #{_lambda_.11} parent=11 // pred_check_branch
        %271 = sbr.rel (%p269) target = $region24
      $region23: #{_lambda_.11} parent=11 // pred_region
        %s272 = smul.u32 4, %s23
        %p273 = scmp.lt.s32.totalorder %s272, 3
        %s274 = scalar_select %p273, %s272, 3
        %s275 = scalar_lea.vmem %s5, %s274
        %s276 = smul.u32 4, %s23
      $region24: #{_lambda_.11} parent=11 // pred_fallthru
        _
      // Predicated region
      $region25: #{_lambda_.11} parent=11 // pred_check
        %p277 = pneg %p208
      $region26: #{_lambda_.11} parent=11 // pred_check_branch
        %279 = sbr.rel (%p277) target = $region28
      $region27: #{_lambda_.11} parent=11 // pred_region
        _
      $region28: #{_lambda_.11} parent=11 // pred_fallthru
        _
    $region12: #{_lambda_.11} parent=5 // pred_fallthru
      _
    %p280 = scmp.lt.s32.totalorder %s13, 2
    // Predicated region
    $region29: #{_lambda_.11} parent=5 // pred_check
      %p281 = pneg %p280
    $region30: #{_lambda_.11} parent=5 // pred_check_branch
      %283 = sbr.rel (%p281) target = $region32
    $region31: #{_lambda_.11} parent=5 // pred_region
      // Predicated region
      $region33: #{_lambda_.11} parent=31 // pred_check
        %p284 = pneg %p47
      $region34: #{_lambda_.11} parent=31 // pred_check_branch
        %286 = sbr.rel (%p284) target = $region36
      $region35: #{_lambda_.11} parent=31 // pred_region
        %s287 = smul.u32 4, %s21
        %p288 = scmp.lt.s32.totalorder %s20, 1
        %s289 = scalar_select %p288, %s20, 1
        %p290 = scmp.lt.s32.totalorder %s287, 3
        %s291 = scalar_select %p290, %s287, 3
        %s292 = smul.addr %s289, 4
        %s293 = sadd.s32 %s291, %s292
        %s294 = smul.addr %s293, 4
        %s295 = scalar_lea.vmem %s0, %s294
        %s296 = smul.u32 4, %s21
      $region36: #{_lambda_.11} parent=31 // pred_fallthru
        _
      // Predicated region
      $region37: #{_lambda_.11} parent=31 // pred_check
        %p297 = pneg %p75
      $region38: #{_lambda_.11} parent=31 // pred_check_branch
        %299 = sbr.rel (%p297) target = $region40
      $region39: #{_lambda_.11} parent=31 // pred_region
        %s300 = smul.u32 4, %s21
        %p301 = scmp.lt.s32.totalorder %s20, 1
        %s302 = scalar_select %p301, %s20, 1
        %p303 = scmp.lt.s32.totalorder %s300, 3
        %s304 = scalar_select %p303, %s300, 3
        %s305 = smul.addr %s304, 2
        %s306 = smul.addr %s302, 8
        %s307 = sadd.s32 %s305, %s306
        %s308 = smul.addr %s307, 4
        %s309 = scalar_lea.vmem %s1, %s308
        %s310 = smul.u32 4, %s21
      $region40: #{_lambda_.11} parent=31 // pred_fallthru
        _
      // Predicated region
      $region41: #{_lambda_.11} parent=31 // pred_check
        %p311 = pneg %p103
      $region42: #{_lambda_.11} parent=31 // pred_check_branch
        %313 = sbr.rel (%p311) target = $region44
      $region43: #{_lambda_.11} parent=31 // pred_region
        %s314 = smul.u32 4, %s21
        %p315 = scmp.lt.s32.totalorder %s20, 1
        %s316 = scalar_select %p315, %s20, 1
        %p317 = scmp.lt.s32.totalorder %s314, 3
        %s318 = scalar_select %p317, %s314, 3
        %s319 = smul.addr %s318, 2
        %s320 = smul.addr %s316, 8
        %s321 = sadd.s32 %s319, %s320
        %s322 = smul.addr %s321, 4
        %s323 = scalar_lea.vmem %s2, %s322
        %s324 = smul.u32 4, %s21
      $region44: #{_lambda_.11} parent=31 // pred_fallthru
        _
    $region32: #{_lambda_.11} parent=5 // pred_fallthru
      _
    %p325 = scmp.le.s32.totalorder 1, %s13
    %p326 = scmp.lt.s32.totalorder %s13, 3
    %p327 = pnand %p325, %p326
    %p328 = pneg %p327
    // Predicated region
    $region45: #{_lambda_.11} parent=5 // pred_check
      _
    $region46: #{_lambda_.11} parent=5 // pred_check_branch
      %330 = sbr.rel (%p327) target = $region48
    $region47: #{_lambda_.11} parent=5 // pred_region
      %s331 = ssub.s32 %s13, 1
      %s332 = smul.u32 4, %s23
      %p333 = scmp.lt.s32.totalorder %s22, 1
      %s334 = scalar_select %p333, %s22, 1
      %p335 = scmp.lt.s32.totalorder %s332, 3
      %s336 = scalar_select %p335, %s332, 3
      %s337 = smul.addr %s334, 4
      %s338 = sadd.s32 %s336, %s337
      %s339 = smul.addr %s338, 4
      %s340 = scalar_lea.vmem %s0, %s339
      %p341 = pneg %p53
      %p342 = pneg %p50
      %s343 = smul.u32 4, %s23
      %p344 = scmp.lt.s32.totalorder %s22, 1
      %s345 = scalar_select %p344, %s22, 1
      %p346 = scmp.lt.s32.totalorder %s343, 3
      %s347 = scalar_select %p346, %s343, 3
      %s348 = smul.addr %s347, 2
      %s349 = smul.addr %s345, 8
      %s350 = sadd.s32 %s348, %s349
      %s351 = smul.addr %s350, 4
      %s352 = scalar_lea.vmem %s1, %s351
      %p353 = pneg %p81
      %p354 = pneg %p78
      %s355 = smul.u32 4, %s23
      %p356 = scmp.lt.s32.totalorder %s22, 1
      %s357 = scalar_select %p356, %s22, 1
      %p358 = scmp.lt.s32.totalorder %s355, 3
      %s359 = scalar_select %p358, %s355, 3
      %s360 = smul.addr %s359, 2
      %s361 = smul.addr %s357, 8
      %s362 = sadd.s32 %s360, %s361
      %s363 = smul.addr %s362, 4
      %s364 = scalar_lea.vmem %s2, %s363
      %p365 = pneg %p109
      %p366 = pneg %p106
      %s367 = smul.u32 4, %s23
      %p368 = scmp.lt.s32.totalorder %s367, 3
      %s369 = scalar_select %p368, %s367, 3
      %s370 = smul.addr %s369, 2
      %s371 = smul.addr %s370, 4
      %s372 = scalar_lea.vmem %s3, %s371
      %p373 = pneg %p135
      %p374 = pneg %p132
      %s375 = smul.u32 4, %s23
      %p376 = scmp.lt.s32.totalorder %s375, 3
      %s377 = scalar_select %p376, %s375, 3
      %s378 = scalar_lea.vmem %s4, %s377
      %p379 = pneg %p161
      %p380 = pneg %p158
      %s381 = smul.u32 4, %s23
      %p382 = scmp.lt.s32.totalorder %s381, 3
      %s383 = scalar_select %p382, %s381, 3
      %s384 = scalar_lea.vmem %s5, %s383
      %p385 = pneg %p187
      %p386 = pneg %p184
      %p387 = pneg %p208
      %p388 = pneg %p205
      %p389 = pneg %p236
      %p390 = pneg %p233
      %p391 = scmp.lt.s32.totalorder %s22, 1
      %s392 = scalar_select %p391, %s22, 1
      %p393 = scmp.lt.s32.totalorder %s23, 0
      %s394 = scalar_select %p393, %s23, 0
      %s395 = sadd.s32 %s394, %s392
      %s396 = smul.addr %s395, 4
      %s397 = scalar_lea.vmem %s7, %s396
      %s398 = smul.u32 4, %s23
      %p399 = scmp.lt.s32.totalorder %s22, 1
      %s400 = scalar_select %p399, %s22, 1
      %p401 = scmp.lt.s32.totalorder %s398, 3
      %s402 = scalar_select %p401, %s398, 3
      %s403 = smul.addr %s400, 4
      %s404 = sadd.s32 %s402, %s403
      %s405 = smul.addr %s404, 4
      %s406 = scalar_lea.vmem %s0, %s405
      %s407 = smul.u32 4, %s23
      %s408 = smul.u32 4, %s23
      %p409 = scmp.lt.s32.totalorder %s22, 1
      %s410 = scalar_select %p409, %s22, 1
      %p411 = scmp.lt.s32.totalorder %s408, 3
      %s412 = scalar_select %p411, %s408, 3
      %s413 = smul.addr %s412, 2
      %s414 = smul.addr %s410, 8
      %s415 = sadd.s32 %s413, %s414
      %s416 = smul.addr %s415, 4
      %s417 = scalar_lea.vmem %s1, %s416
      %s418 = smul.u32 4, %s23
      %s419 = smul.u32 4, %s23
      %p420 = scmp.lt.s32.totalorder %s22, 1
      %s421 = scalar_select %p420, %s22, 1
      %p422 = scmp.lt.s32.totalorder %s419, 3
      %s423 = scalar_select %p422, %s419, 3
      %s424 = smul.addr %s423, 2
      %s425 = smul.addr %s421, 8
      %s426 = sadd.s32 %s424, %s425
      %s427 = smul.addr %s426, 4
      %s428 = scalar_lea.vmem %s2, %s427
      %s429 = smul.u32 4, %s23
      %s430 = smul.u32 4, %s23
      %p431 = scmp.lt.s32.totalorder %s430, 3
      %s432 = scalar_select %p431, %s430, 3
      %s433 = smul.addr %s432, 2
      %s434 = smul.addr %s433, 4
      %s435 = scalar_lea.vmem %s3, %s434
      %s436 = smul.u32 4, %s23
      %s437 = smul.u32 4, %s23
      %p438 = scmp.lt.s32.totalorder %s437, 3
      %s439 = scalar_select %p438, %s437, 3
      %s440 = scalar_lea.vmem %s4, %s439
      %s441 = smul.u32 4, %s23
      %s442 = smul.u32 4, %s23
      %p443 = scmp.lt.s32.totalorder %s442, 3
      %s444 = scalar_select %p443, %s442, 3
      %s445 = scalar_lea.vmem %s5, %s444
      %s446 = smul.u32 4, %s23
      %p447 = scmp.lt.s32.totalorder %s22, 1
      %s448 = scalar_select %p447, %s22, 1
      %p449 = scmp.lt.s32.totalorder %s23, 0
      %s450 = scalar_select %p449, %s23, 0
      %s451 = sadd.s32 %s450, %s448
      %s452 = smul.addr %s451, 4
      %s453 = scalar_lea.vmem %s7, %s452
      %v455 = vld [vmem:[%s406] sm:$0xf]
      %v456 = vld [vmem:[%s406 + $0x4] sm:$0xf]
      %v457 = vld [vmem:[%s406 + $0x8] sm:$0xf]
      %v458 = vld [vmem:[%s406 + $0xc] sm:$0xf]
      %v459 = vld [vmem:[%s440] sm:$0x1]
      %v460 = vld [vmem:[%s440 + $0x1] sm:$0x1]
      %v461 = vld [vmem:[%s440 + $0x2] sm:$0x1]
      %v462 = vld [vmem:[%s440 + $0x3] sm:$0x1]
      %v464 = vpack.i.b16 %v459, %v459
      %v466 = vlaneseq
      %v467 = vshrl.u32 %v466, 7
      %v468 = vsub.s32 0, %v467
      %v469 = vrot.slane %v464, %v468
      %v471 = vpack.i.b16 %v460, %v460
      %v473 = vlaneseq
      %v474 = vshrl.u32 %v473, 7
      %v475 = vsub.s32 0, %v474
      %v476 = vrot.slane %v471, %v475
      %v478 = vpack.i.b16 %v461, %v461
      %v480 = vlaneseq
      %v481 = vshrl.u32 %v480, 7
      %v482 = vsub.s32 0, %v481
      %v483 = vrot.slane %v478, %v482
      %v485 = vpack.i.b16 %v462, %v462
      %v487 = vlaneseq
      %v488 = vshrl.u32 %v487, 7
      %v489 = vsub.s32 0, %v488
      %v490 = vrot.slane %v485, %v489
      %v491 = vadd.bf16 %v455, %v469
      %v492 = vadd.bf16 %v456, %v476
      %v493 = vadd.bf16 %v457, %v483
      %v494 = vadd.bf16 %v458, %v490
      %v495 = vld [vmem:[%s445] sm:$0x1]
      %v496 = vld [vmem:[%s445 + $0x1] sm:$0x1]
      %v497 = vld [vmem:[%s445 + $0x2] sm:$0x1]
      %v498 = vld [vmem:[%s445 + $0x3] sm:$0x1]
      %v500 = vpack.i.b16 %v495, %v495
      %v502 = vlaneseq
      %v503 = vshrl.u32 %v502, 7
      %v504 = vsub.s32 0, %v503
      %v505 = vrot.slane %v500, %v504
      %v507 = vpack.i.b16 %v496, %v496
      %v509 = vlaneseq
      %v510 = vshrl.u32 %v509, 7
      %v511 = vsub.s32 0, %v510
      %v512 = vrot.slane %v507, %v511
      %v514 = vpack.i.b16 %v497, %v497
      %v516 = vlaneseq
      %v517 = vshrl.u32 %v516, 7
      %v518 = vsub.s32 0, %v517
      %v519 = vrot.slane %v514, %v518
      %v521 = vpack.i.b16 %v498, %v498
      %v523 = vlaneseq
      %v524 = vshrl.u32 %v523, 7
      %v525 = vsub.s32 0, %v524
      %v526 = vrot.slane %v521, %v525
      %v527 = vadd.bf16 %v455, %v505
      %v528 = vadd.bf16 %v456, %v512
      %v529 = vadd.bf16 %v457, %v519
      %v530 = vadd.bf16 %v458, %v526
      %v531 = vld [vmem:[%s417] sm:$0xf]
      %v532 = vld [vmem:[%s417 + $0x4] sm:$0xf]
      %v533 = vld [vmem:[%s417 + $0x8] sm:$0xf]
      %v534 = vld [vmem:[%s417 + $0xc] sm:$0xf]
      %v535 = vld [vmem:[%s417 + $0x10] sm:$0xf]
      %v536 = vld [vmem:[%s417 + $0x14] sm:$0xf]
      %v537 = vld [vmem:[%s417 + $0x18] sm:$0xf]
      %v538 = vld [vmem:[%s417 + $0x1c] sm:$0xf]
      %v539 = vld [vmem:[%s435] sm:$0xf]
      %v540 = vld [vmem:[%s435 + $0x4] sm:$0xf]
      %v541 = vld [vmem:[%s435 + $0x8] sm:$0xf]
      %v542 = vld [vmem:[%s435 + $0xc] sm:$0xf]
      %v543 = vld [vmem:[%s435 + $0x10] sm:$0xf]
      %v544 = vld [vmem:[%s435 + $0x14] sm:$0xf]
      %v545 = vld [vmem:[%s435 + $0x18] sm:$0xf]
      %v546 = vld [vmem:[%s435 + $0x1c] sm:$0xf]
      %v549 = vunpack.c.l.b16 %v539
      %v550 = vunpack.c.l.b16 %v540
      %v551 = vpack.c.b16 %v550, %v549
      %vm552 = vcmask 64512
      %v554 = vsel %vm552, %v527, 0
      %v557 = vsel %vm552, %v551, 0
      %559 = vmatprep.subr.bf16.mxu0 0
      %560 = vmatpush1.bf16.xpose.msra.mxu0 %v557
      %561 = vmatprep.subr.bf16.mxu0 0
      %562 = vmatpush1.bf16.xpose.msra.mxu0 0
      %563 = vmatprep.subr.bf16.mxu0 0
      %564 = vmatpush1.bf16.xpose.msra.mxu0 0
      %565 = vmatprep.subr.bf16.mxu0 0
      %566 = vmatpush1.bf16.xpose.msra.mxu0 0
      %567 = vmatprep.subr.bf16.mxu0 0
      %568 = vmatpush1.bf16.xpose.msra.mxu0 0
      %569 = vmatprep.subr.bf16.mxu0 0
      %570 = vmatpush1.bf16.xpose.msra.mxu0 0
      %571 = vmatprep.subr.bf16.mxu0 0
      %572 = vmatpush1.bf16.xpose.msra.mxu0 0
      %573 = vmatprep.subr.bf16.mxu0 0
      %574 = vmatpush1.bf16.xpose.msra.mxu0 0
      %575 = vmatprep.subr.bf16.mxu0 0
      %576 = vmatpush1.bf16.xpose.msra.mxu0 0
      %577 = vmatprep.subr.bf16.mxu0 0
      %578 = vmatpush1.bf16.xpose.msra.mxu0 0
      %579 = vmatprep.subr.bf16.mxu0 0
      %580 = vmatpush1.bf16.xpose.msra.mxu0 0
      %581 = vmatprep.subr.bf16.mxu0 0
      %582 = vmatpush1.bf16.xpose.msra.mxu0 0
      %583 = vmatprep.subr.bf16.mxu0 0
      %584 = vmatpush1.bf16.xpose.msra.mxu0 0
      %585 = vmatprep.subr.bf16.mxu0 0
      %586 = vmatpush1.bf16.xpose.msra.mxu0 0
      %587 = vmatprep.subr.bf16.mxu0 0
      %588 = vmatpush1.bf16.xpose.msra.mxu0 0
      %589 = vmatprep.subr.bf16.mxu0 0
      %590 = vmatpush1.bf16.xpose.msra.mxu0 0
      %591 = vmatprep.mubr.bf16.mxu0 0
      %592 = vmatmul.mubr.bf16.gmra.mrb[0].mxu0 %v554
      %v593 = vpop.f32.mrb[0].mxu0
      %v594 = vadd.f32 0.0, %v593
      %v595 = vpop.f32.mrb[0].mxu0
      %v596 = vpop.f32.mrb[0].mxu0
      %v597 = vpop.f32.mrb[0].mxu0
      %598 = vdwg.mxu0
      %v601 = vunpack.c.l.b16 %v541
      %v602 = vunpack.c.l.b16 %v542
      %v603 = vpack.c.b16 %v602, %v601
      %v605 = vsel %vm552, %v528, 0
      %v608 = vsel %vm552, %v603, 0
      %610 = vmatprep.subr.bf16.mxu0 0
      %611 = vmatpush1.bf16.xpose.msra.mxu0 %v608
      %612 = vmatprep.subr.bf16.mxu0 0
      %613 = vmatpush1.bf16.xpose.msra.mxu0 0
      %614 = vmatprep.subr.bf16.mxu0 0
      %615 = vmatpush1.bf16.xpose.msra.mxu0 0
      %616 = vmatprep.subr.bf16.mxu0 0
      %617 = vmatpush1.bf16.xpose.msra.mxu0 0
      %618 = vmatprep.subr.bf16.mxu0 0
      %619 = vmatpush1.bf16.xpose.msra.mxu0 0
      %620 = vmatprep.subr.bf16.mxu0 0
      %621 = vmatpush1.bf16.xpose.msra.mxu0 0
      %622 = vmatprep.subr.bf16.mxu0 0
      %623 = vmatpush1.bf16.xpose.msra.mxu0 0
      %624 = vmatprep.subr.bf16.mxu0 0
      %625 = vmatpush1.bf16.xpose.msra.mxu0 0
      %626 = vmatprep.subr.bf16.mxu0 0
      %627 = vmatpush1.bf16.xpose.msra.mxu0 0
      %628 = vmatprep.subr.bf16.mxu0 0
      %629 = vmatpush1.bf16.xpose.msra.mxu0 0
      %630 = vmatprep.subr.bf16.mxu0 0
      %631 = vmatpush1.bf16.xpose.msra.mxu0 0
      %632 = vmatprep.subr.bf16.mxu0 0
      %633 = vmatpush1.bf16.xpose.msra.mxu0 0
      %634 = vmatprep.subr.bf16.mxu0 0
      %635 = vmatpush1.bf16.xpose.msra.mxu0 0
      %636 = vmatprep.subr.bf16.mxu0 0
      %637 = vmatpush1.bf16.xpose.msra.mxu0 0
      %638 = vmatprep.subr.bf16.mxu0 0
      %639 = vmatpush1.bf16.xpose.msra.mxu0 0
      %640 = vmatprep.subr.bf16.mxu0 0
      %641 = vmatpush1.bf16.xpose.msra.mxu0 0
      %642 = vmatprep.mubr.bf16.mxu0 0
      %643 = vmatmul.mubr.bf16.gmra.mrb[0].mxu0 %v605
      %v644 = vpop.f32.mrb[0].mxu0
      %v645 = vadd.f32 0.0, %v644
      %v646 = vpop.f32.mrb[0].mxu0
      %v647 = vpop.f32.mrb[0].mxu0
      %v648 = vpop.f32.mrb[0].mxu0
      %649 = vdwg.mxu0
      %v652 = vunpack.c.l.b16 %v543
      %v653 = vunpack.c.l.b16 %v544
      %v654 = vpack.c.b16 %v653, %v652
      %v656 = vsel %vm552, %v529, 0
      %v659 = vsel %vm552, %v654, 0
      %661 = vmatprep.subr.bf16.mxu0 0
      %662 = vmatpush1.bf16.xpose.msra.mxu0 %v659
      %663 = vmatprep.subr.bf16.mxu0 0
      %664 = vmatpush1.bf16.xpose.msra.mxu0 0
      %665 = vmatprep.subr.bf16.mxu0 0
      %666 = vmatpush1.bf16.xpose.msra.mxu0 0
      %667 = vmatprep.subr.bf16.mxu0 0
      %668 = vmatpush1.bf16.xpose.msra.mxu0 0
      %669 = vmatprep.subr.bf16.mxu0 0
      %670 = vmatpush1.bf16.xpose.msra.mxu0 0
      %671 = vmatprep.subr.bf16.mxu0 0
      %672 = vmatpush1.bf16.xpose.msra.mxu0 0
      %673 = vmatprep.subr.bf16.mxu0 0
      %674 = vmatpush1.bf16.xpose.msra.mxu0 0
      %675 = vmatprep.subr.bf16.mxu0 0
      %676 = vmatpush1.bf16.xpose.msra.mxu0 0
      %677 = vmatprep.subr.bf16.mxu0 0
      %678 = vmatpush1.bf16.xpose.msra.mxu0 0
      %679 = vmatprep.subr.bf16.mxu0 0
      %680 = vmatpush1.bf16.xpose.msra.mxu0 0
      %681 = vmatprep.subr.bf16.mxu0 0
      %682 = vmatpush1.bf16.xpose.msra.mxu0 0
      %683 = vmatprep.subr.bf16.mxu0 0
      %684 = vmatpush1.bf16.xpose.msra.mxu0 0
      %685 = vmatprep.subr.bf16.mxu0 0
      %686 = vmatpush1.bf16.xpose.msra.mxu0 0
      %687 = vmatprep.subr.bf16.mxu0 0
      %688 = vmatpush1.bf16.xpose.msra.mxu0 0
      %689 = vmatprep.subr.bf16.mxu0 0
      %690 = vmatpush1.bf16.xpose.msra.mxu0 0
      %691 = vmatprep.subr.bf16.mxu0 0
      %692 = vmatpush1.bf16.xpose.msra.mxu0 0
      %693 = vmatprep.mubr.bf16.mxu0 0
      %694 = vmatmul.mubr.bf16.gmra.mrb[0].mxu0 %v656
      %v695 = vpop.f32.mrb[0].mxu0
      %v696 = vadd.f32 0.0, %v695
      %v697 = vpop.f32.mrb[0].mxu0
      %v698 = vpop.f32.mrb[0].mxu0
      %v699 = vpop.f32.mrb[0].mxu0
      %700 = vdwg.mxu0
      %v703 = vunpack.c.l.b16 %v545
      %v704 = vunpack.c.l.b16 %v546
      %v705 = vpack.c.b16 %v704, %v703
      %v707 = vsel %vm552, %v530, 0
      %v710 = vsel %vm552, %v705, 0
      %712 = vmatprep.subr.bf16.mxu0 0
      %713 = vmatpush1.bf16.xpose.msra.mxu0 %v710
      %714 = vmatprep.subr.bf16.mxu0 0
      %715 = vmatpush1.bf16.xpose.msra.mxu0 0
      %716 = vmatprep.subr.bf16.mxu0 0
      %717 = vmatpush1.bf16.xpose.msra.mxu0 0
      %718 = vmatprep.subr.bf16.mxu0 0
      %719 = vmatpush1.bf16.xpose.msra.mxu0 0
      %720 = vmatprep.subr.bf16.mxu0 0
      %721 = vmatpush1.bf16.xpose.msra.mxu0 0
      %722 = vmatprep.subr.bf16.mxu0 0
      %723 = vmatpush1.bf16.xpose.msra.mxu0 0
      %724 = vmatprep.subr.bf16.mxu0 0
      %725 = vmatpush1.bf16.xpose.msra.mxu0 0
      %726 = vmatprep.subr.bf16.mxu0 0
      %727 = vmatpush1.bf16.xpose.msra.mxu0 0
      %728 = vmatprep.subr.bf16.mxu0 0
      %729 = vmatpush1.bf16.xpose.msra.mxu0 0
      %730 = vmatprep.subr.bf16.mxu0 0
      %731 = vmatpush1.bf16.xpose.msra.mxu0 0
      %732 = vmatprep.subr.bf16.mxu0 0
      %733 = vmatpush1.bf16.xpose.msra.mxu0 0
      %734 = vmatprep.subr.bf16.mxu0 0
      %735 = vmatpush1.bf16.xpose.msra.mxu0 0
      %736 = vmatprep.subr.bf16.mxu0 0
      %737 = vmatpush1.bf16.xpose.msra.mxu0 0
      %738 = vmatprep.subr.bf16.mxu0 0
      %739 = vmatpush1.bf16.xpose.msra.mxu0 0
      %740 = vmatprep.subr.bf16.mxu0 0
      %741 = vmatpush1.bf16.xpose.msra.mxu0 0
      %742 = vmatprep.subr.bf16.mxu0 0
      %743 = vmatpush1.bf16.xpose.msra.mxu0 0
      %744 = vmatprep.mubr.bf16.mxu0 0
      %745 = vmatmul.mubr.bf16.gmra.mrb[0].mxu0 %v707
      %v746 = vpop.f32.mrb[0].mxu0
      %v747 = vadd.f32 0.0, %v746
      %v748 = vpop.f32.mrb[0].mxu0
      %v749 = vpop.f32.mrb[0].mxu0
      %v750 = vpop.f32.mrb[0].mxu0
      %751 = vdwg.mxu0
      %v752 = vlaneseq
      %v753 = vshrl.u32 %v752, 7
      %758 = vrot.lane.b32.xlu0 %v594, 121
      %v759 = vpop.permute.xlu0 %758
      %760 = vrot.lane.b32.xlu0 %v645, 121
      %v761 = vpop.permute.xlu0 %760
      %762 = vrot.lane.b32.xlu0 %v696, 121
      %v763 = vpop.permute.xlu0 %762
      %764 = vrot.lane.b32.xlu0 %v747, 121
      %v765 = vpop.permute.xlu0 %764
      %vm770 = vcmask 72704
      %v771 = vsel %vm770, %v759, 0.0
      %v772 = vsel %vm770, %v761, 0.0
      %v773 = vsel %vm770, %v763, 0.0
      %v774 = vsel %vm770, %v765, 0.0
      %vm775 = vcmp.eq.s32.totalorder %v753, 0
      %v776 = vsel %vm775, 1, 0
      %vm777 = vcmp.eq.s32.totalorder %v776, 1
      %v778 = vsel %vm777, %v771, 0.0
      %v779 = vsel %vm777, %v772, 0.0
      %v780 = vsel %vm777, %v773, 0.0
      %v781 = vsel %vm777, %v774, 0.0
      %v782 = vadd.f32 %v778, 0.0
      %v783 = vadd.f32 %v779, 0.0
      %v784 = vadd.f32 %v780, 0.0
      %v785 = vadd.f32 %v781, 0.0
      %786 = vrot.lane.b32.xlu0 %v594, 122
      %v787 = vpop.permute.xlu0 %786
      %788 = vrot.lane.b32.xlu0 %v645, 122
      %v789 = vpop.permute.xlu0 %788
      %790 = vrot.lane.b32.xlu0 %v696, 122
      %v791 = vpop.permute.xlu0 %790
      %792 = vrot.lane.b32.xlu0 %v747, 122
      %v793 = vpop.permute.xlu0 %792
      %vm798 = vcmask 80896
      %v799 = vsel %vm798, %v787, 0.0
      %v800 = vsel %vm798, %v789, 0.0
      %v801 = vsel %vm798, %v791, 0.0
      %v802 = vsel %vm798, %v793, 0.0
      %vm803 = vcmp.eq.s32.totalorder %v753, 1
      %v804 = vsel %vm803, 1, 0
      %vm805 = vcmp.eq.s32.totalorder %v804, 1
      %v806 = vsel %vm805, %v799, 0.0
      %v807 = vsel %vm805, %v800, 0.0
      %v808 = vsel %vm805, %v801, 0.0
      %v809 = vsel %vm805, %v802, 0.0
      %v810 = vadd.f32 %v782, %v806
      %v811 = vadd.f32 %v783, %v807
      %v812 = vadd.f32 %v784, %v808
      %v813 = vadd.f32 %v785, %v809
      %814 = vrot.lane.b32.xlu0 %v594, 123
      %v815 = vpop.permute.xlu0 %814
      %816 = vrot.lane.b32.xlu0 %v645, 123
      %v817 = vpop.permute.xlu0 %816
      %818 = vrot.lane.b32.xlu0 %v696, 123
      %v819 = vpop.permute.xlu0 %818
      %820 = vrot.lane.b32.xlu0 %v747, 123
      %v821 = vpop.permute.xlu0 %820
      %vm826 = vcmask 89088
      %v827 = vsel %vm826, %v815, 0.0
      %v828 = vsel %vm826, %v817, 0.0
      %v829 = vsel %vm826, %v819, 0.0
      %v830 = vsel %vm826, %v821, 0.0
      %vm831 = vcmp.eq.s32.totalorder %v753, 2
      %v832 = vsel %vm831, 1, 0
      %vm833 = vcmp.eq.s32.totalorder %v832, 1
      %v834 = vsel %vm833, %v827, 0.0
      %v835 = vsel %vm833, %v828, 0.0
      %v836 = vsel %vm833, %v829, 0.0
      %v837 = vsel %vm833, %v830, 0.0
      %v838 = vadd.f32 %v810, %v834
      %v839 = vadd.f32 %v811, %v835
      %v840 = vadd.f32 %v812, %v836
      %v841 = vadd.f32 %v813, %v837
      %842 = vrot.lane.b32.xlu0 %v594, 124
      %v843 = vpop.permute.xlu0 %842
      %844 = vrot.lane.b32.xlu0 %v645, 124
      %v845 = vpop.permute.xlu0 %844
      %846 = vrot.lane.b32.xlu0 %v696, 124
      %v847 = vpop.permute.xlu0 %846
      %848 = vrot.lane.b32.xlu0 %v747, 124
      %v849 = vpop.permute.xlu0 %848
      %vm854 = vcmask 97280
      %v855 = vsel %vm854, %v843, 0.0
      %v856 = vsel %vm854, %v845, 0.0
      %v857 = vsel %vm854, %v847, 0.0
      %v858 = vsel %vm854, %v849, 0.0
      %vm859 = vcmp.eq.s32.totalorder %v753, 3
      %v860 = vsel %vm859, 1, 0
      %vm861 = vcmp.eq.s32.totalorder %v860, 1
      %v862 = vsel %vm861, %v855, 0.0
      %v863 = vsel %vm861, %v856, 0.0
      %v864 = vsel %vm861, %v857, 0.0
      %v865 = vsel %vm861, %v858, 0.0
      %v866 = vadd.f32 %v838, %v862
      %v867 = vadd.f32 %v839, %v863
      %v868 = vadd.f32 %v840, %v864
      %v869 = vadd.f32 %v841, %v865
      %870 = vrot.lane.b32.xlu0 %v594, 125
      %v871 = vpop.permute.xlu0 %870
      %872 = vrot.lane.b32.xlu0 %v645, 125
      %v873 = vpop.permute.xlu0 %872
      %874 = vrot.lane.b32.xlu0 %v696, 125
      %v875 = vpop.permute.xlu0 %874
      %876 = vrot.lane.b32.xlu0 %v747, 125
      %v877 = vpop.permute.xlu0 %876
      %vm882 = vcmask 105472
      %v883 = vsel %vm882, %v871, 0.0
      %v884 = vsel %vm882, %v873, 0.0
      %v885 = vsel %vm882, %v875, 0.0
      %v886 = vsel %vm882, %v877, 0.0
      %vm887 = vcmp.eq.s32.totalorder %v753, 4
      %v888 = vsel %vm887, 1, 0
      %vm889 = vcmp.eq.s32.totalorder %v888, 1
      %v890 = vsel %vm889, %v883, 0.0
      %v891 = vsel %vm889, %v884, 0.0
      %v892 = vsel %vm889, %v885, 0.0
      %v893 = vsel %vm889, %v886, 0.0
      %v894 = vadd.f32 %v866, %v890
      %v895 = vadd.f32 %v867, %v891
      %v896 = vadd.f32 %v868, %v892
      %v897 = vadd.f32 %v869, %v893
      %898 = vrot.lane.b32.xlu0 %v594, 126
      %v899 = vpop.permute.xlu0 %898
      %900 = vrot.lane.b32.xlu0 %v645, 126
      %v901 = vpop.permute.xlu0 %900
      %902 = vrot.lane.b32.xlu0 %v696, 126
      %v903 = vpop.permute.xlu0 %902
      %904 = vrot.lane.b32.xlu0 %v747, 126
      %v905 = vpop.permute.xlu0 %904
      %vm910 = vcmask 113664
      %v911 = vsel %vm910, %v899, 0.0
      %v912 = vsel %vm910, %v901, 0.0
      %v913 = vsel %vm910, %v903, 0.0
      %v914 = vsel %vm910, %v905, 0.0
      %vm915 = vcmp.eq.s32.totalorder %v753, 5
      %v916 = vsel %vm915, 1, 0
      %vm917 = vcmp.eq.s32.totalorder %v916, 1
      %v918 = vsel %vm917, %v911, 0.0
      %v919 = vsel %vm917, %v912, 0.0
      %v920 = vsel %vm917, %v913, 0.0
      %v921 = vsel %vm917, %v914, 0.0
      %v922 = vadd.f32 %v894, %v918
      %v923 = vadd.f32 %v895, %v919
      %v924 = vadd.f32 %v896, %v920
      %v925 = vadd.f32 %v897, %v921
      %926 = vrot.lane.b32.xlu0 %v594, 127
      %v927 = vpop.permute.xlu0 %926
      %928 = vrot.lane.b32.xlu0 %v645, 127
      %v929 = vpop.permute.xlu0 %928
      %930 = vrot.lane.b32.xlu0 %v696, 127
      %v931 = vpop.permute.xlu0 %930
      %932 = vrot.lane.b32.xlu0 %v747, 127
      %v933 = vpop.permute.xlu0 %932
      %vm938 = vcmask 121856
      %v939 = vsel %vm938, %v927, 0.0
      %v940 = vsel %vm938, %v929, 0.0
      %v941 = vsel %vm938, %v931, 0.0
      %v942 = vsel %vm938, %v933, 0.0
      %vm943 = vcmp.eq.s32.totalorder %v753, 6
      %v944 = vsel %vm943, 1, 0
      %vm945 = vcmp.eq.s32.totalorder %v944, 1
      %v946 = vsel %vm945, %v939, 0.0
      %v947 = vsel %vm945, %v940, 0.0
      %v948 = vsel %vm945, %v941, 0.0
      %v949 = vsel %vm945, %v942, 0.0
      %v950 = vadd.f32 %v922, %v946
      %v951 = vadd.f32 %v923, %v947
      %v952 = vadd.f32 %v924, %v948
      %v953 = vadd.f32 %v925, %v949
      %vm954 = vcmp.eq.s32.totalorder %v753, 7
      %v955 = vsel %vm954, 1, 0
      %vm956 = vcmp.eq.s32.totalorder %v955, 1
      %v957 = vsel %vm956, %v594, 0.0
      %v958 = vsel %vm956, %v645, 0.0
      %v959 = vsel %vm956, %v696, 0.0
      %v960 = vsel %vm956, %v747, 0.0
      %v961 = vadd.f32 %v950, %v957
      %v962 = vadd.f32 %v951, %v958
      %v963 = vadd.f32 %v952, %v959
      %v964 = vadd.f32 %v953, %v960
      %v967 = vunpack.c.l.b16 %v531
      %v968 = vunpack.c.l.b16 %v532
      %v969 = vpack.c.b16 %v968, %v967
      %v971 = vsel %vm552, %v491, 0
      %v974 = vsel %vm552, %v969, 0
      %976 = vmatprep.subr.bf16.mxu0 0
      %977 = vmatpush1.bf16.xpose.msra.mxu0 %v974
      %978 = vmatprep.subr.bf16.mxu0 0
      %979 = vmatpush1.bf16.xpose.msra.mxu0 0
      %980 = vmatprep.subr.bf16.mxu0 0
      %981 = vmatpush1.bf16.xpose.msra.mxu0 0
      %982 = vmatprep.subr.bf16.mxu0 0
      %983 = vmatpush1.bf16.xpose.msra.mxu0 0
      %984 = vmatprep.subr.bf16.mxu0 0
      %985 = vmatpush1.bf16.xpose.msra.mxu0 0
      %986 = vmatprep.subr.bf16.mxu0 0
      %987 = vmatpush1.bf16.xpose.msra.mxu0 0
      %988 = vmatprep.subr.bf16.mxu0 0
      %989 = vmatpush1.bf16.xpose.msra.mxu0 0
      %990 = vmatprep.subr.bf16.mxu0 0
      %991 = vmatpush1.bf16.xpose.msra.mxu0 0
      %992 = vmatprep.subr.bf16.mxu0 0
      %993 = vmatpush1.bf16.xpose.msra.mxu0 0
      %994 = vmatprep.subr.bf16.mxu0 0
      %995 = vmatpush1.bf16.xpose.msra.mxu0 0
      %996 = vmatprep.subr.bf16.mxu0 0
      %997 = vmatpush1.bf16.xpose.msra.mxu0 0
      %998 = vmatprep.subr.bf16.mxu0 0
      %999 = vmatpush1.bf16.xpose.msra.mxu0 0
      %1000 = vmatprep.subr.bf16.mxu0 0
      %1001 = vmatpush1.bf16.xpose.msra.mxu0 0
      %1002 = vmatprep.subr.bf16.mxu0 0
      %1003 = vmatpush1.bf16.xpose.msra.mxu0 0
      %1004 = vmatprep.subr.bf16.mxu0 0
      %1005 = vmatpush1.bf16.xpose.msra.mxu0 0
      %1006 = vmatprep.subr.bf16.mxu0 0
      %1007 = vmatpush1.bf16.xpose.msra.mxu0 0
      %1008 = vmatprep.mubr.bf16.mxu0 0
      %1009 = vmatmul.mubr.bf16.gmra.mrb[0].mxu0 %v971
      %v1010 = vpop.f32.mrb[0].mxu0
      %v1011 = vadd.f32 %v961, %v1010
      %v1012 = vpop.f32.mrb[0].mxu0
      %v1013 = vpop.f32.mrb[0].mxu0
      %v1014 = vpop.f32.mrb[0].mxu0
      %1015 = vdwg.mxu0
      %v1018 = vunpack.c.l.b16 %v533
      %v1019 = vunpack.c.l.b16 %v534
      %v1020 = vpack.c.b16 %v1019, %v1018
      %v1022 = vsel %vm552, %v492, 0
      %v1025 = vsel %vm552, %v1020, 0
      %1027 = vmatprep.subr.bf16.mxu0 0
      %1028 = vmatpush1.bf16.xpose.msra.mxu0 %v1025
      %1029 = vmatprep.subr.bf16.mxu0 0
      %1030 = vmatpush1.bf16.xpose.msra.mxu0 0
      %1031 = vmatprep.subr.bf16.mxu0 0
      %1032 = vmatpush1.bf16.xpose.msra.mxu0 0
      %1033 = vmatprep.subr.bf16.mxu0 0
      %1034 = vmatpush1.bf16.xpose.msra.mxu0 0
      %1035 = vmatprep.subr.bf16.mxu0 0
      %1036 = vmatpush1.bf16.xpose.msra.mxu0 0
      %1037 = vmatprep.subr.bf16.mxu0 0
      %1038 = vmatpush1.bf16.xpose.msra.mxu0 0
      %1039 = vmatprep.subr.bf16.mxu0 0
      %1040 = vmatpush1.bf16.xpose.msra.mxu0 0
      %1041 = vmatprep.subr.bf16.mxu0 0
      %1042 = vmatpush1.bf16.xpose.msra.mxu0 0
      %1043 = vmatprep.subr.bf16.mxu0 0
      %1044 = vmatpush1.bf16.xpose.msra.mxu0 0
      %1045 = vmatprep.subr.bf16.mxu0 0
      %1046 = vmatpush1.bf16.xpose.msra.mxu0 0
      %1047 = vmatprep.subr.bf16.mxu0 0
      %1048 = vmatpush1.bf16.xpose.msra.mxu0 0
      %1049 = vmatprep.subr.bf16.mxu0 0
      %1050 = vmatpush1.bf16.xpose.msra.mxu0 0
      %1051 = vmatprep.subr.bf16.mxu0 0
      %1052 = vmatpush1.bf16.xpose.msra.mxu0 0
      %1053 = vmatprep.subr.bf16.mxu0 0
      %1054 = vmatpush1.bf16.xpose.msra.mxu0 0
      %1055 = vmatprep.subr.bf16.mxu0 0
      %1056 = vmatpush1.bf16.xpose.msra.mxu0 0
      %1057 = vmatprep.subr.bf16.mxu0 0
      %1058 = vmatpush1.bf16.xpose.msra.mxu0 0
      %1059 = vmatprep.mubr.bf16.mxu0 0
      %1060 = vmatmul.mubr.bf16.gmra.mrb[0].mxu0 %v1022
      %v1061 = vpop.f32.mrb[0].mxu0
      %v1062 = vadd.f32 %v962, %v1061
      %v1063 = vpop.f32.mrb[0].mxu0
      %v1064 = vpop.f32.mrb[0].mxu0
      %v1065 = vpop.f32.mrb[0].mxu0
      %1066 = vdwg.mxu0
      %v1069 = vunpack.c.l.b16 %v535
      %v1070 = vunpack.c.l.b16 %v536
      %v1071 = vpack.c.b16 %v1070, %v1069
      %v1073 = vsel %vm552, %v493, 0
      %v1076 = vsel %vm552, %v1071, 0
      %1078 = vmatprep.subr.bf16.mxu0 0
      %1079 = vmatpush1.bf16.xpose.msra.mxu0 %v1076
      %1080 = vmatprep.subr.bf16.mxu0 0
      %1081 = vmatpush1.bf16.xpose.msra.mxu0 0
      %1082 = vmatprep.subr.bf16.mxu0 0
      %1083 = vmatpush1.bf16.xpose.msra.mxu0 0
      %1084 = vmatprep.subr.bf16.mxu0 0
      %1085 = vmatpush1.bf16.xpose.msra.mxu0 0
      %1086 = vmatprep.subr.bf16.mxu0 0
      %1087 = vmatpush1.bf16.xpose.msra.mxu0 0
      %1088 = vmatprep.subr.bf16.mxu0 0
      %1089 = vmatpush1.bf16.xpose.msra.mxu0 0
      %1090 = vmatprep.subr.bf16.mxu0 0
      %1091 = vmatpush1.bf16.xpose.msra.mxu0 0
      %1092 = vmatprep.subr.bf16.mxu0 0
      %1093 = vmatpush1.bf16.xpose.msra.mxu0 0
      %1094 = vmatprep.subr.bf16.mxu0 0
      %1095 = vmatpush1.bf16.xpose.msra.mxu0 0
      %1096 = vmatprep.subr.bf16.mxu0 0
      %1097 = vmatpush1.bf16.xpose.msra.mxu0 0
      %1098 = vmatprep.subr.bf16.mxu0 0
      %1099 = vmatpush1.bf16.xpose.msra.mxu0 0
      %1100 = vmatprep.subr.bf16.mxu0 0
      %1101 = vmatpush1.bf16.xpose.msra.mxu0 0
      %1102 = vmatprep.subr.bf16.mxu0 0
      %1103 = vmatpush1.bf16.xpose.msra.mxu0 0
      %1104 = vmatprep.subr.bf16.mxu0 0
      %1105 = vmatpush1.bf16.xpose.msra.mxu0 0
      %1106 = vmatprep.subr.bf16.mxu0 0
      %1107 = vmatpush1.bf16.xpose.msra.mxu0 0
      %1108 = vmatprep.subr.bf16.mxu0 0
      %1109 = vmatpush1.bf16.xpose.msra.mxu0 0
      %1110 = vmatprep.mubr.bf16.mxu0 0
      %1111 = vmatmul.mubr.bf16.gmra.mrb[0].mxu0 %v1073
      %v1112 = vpop.f32.mrb[0].mxu0
      %v1113 = vadd.f32 %v963, %v1112
      %v1114 = vpop.f32.mrb[0].mxu0
      %v1115 = vpop.f32.mrb[0].mxu0
      %v1116 = vpop.f32.mrb[0].mxu0
      %1117 = vdwg.mxu0
      %v1120 = vunpack.c.l.b16 %v537
      %v1121 = vunpack.c.l.b16 %v538
      %v1122 = vpack.c.b16 %v1121, %v1120
      %v1124 = vsel %vm552, %v494, 0
      %v1127 = vsel %vm552, %v1122, 0
      %1129 = vmatprep.subr.bf16.mxu0 0
      %1130 = vmatpush1.bf16.xpose.msra.mxu0 %v1127
      %1131 = vmatprep.subr.bf16.mxu0 0
      %1132 = vmatpush1.bf16.xpose.msra.mxu0 0
      %1133 = vmatprep.subr.bf16.mxu0 0
      %1134 = vmatpush1.bf16.xpose.msra.mxu0 0
      %1135 = vmatprep.subr.bf16.mxu0 0
      %1136 = vmatpush1.bf16.xpose.msra.mxu0 0
      %1137 = vmatprep.subr.bf16.mxu0 0
      %1138 = vmatpush1.bf16.xpose.msra.mxu0 0
      %1139 = vmatprep.subr.bf16.mxu0 0
      %1140 = vmatpush1.bf16.xpose.msra.mxu0 0
      %1141 = vmatprep.subr.bf16.mxu0 0
      %1142 = vmatpush1.bf16.xpose.msra.mxu0 0
      %1143 = vmatprep.subr.bf16.mxu0 0
      %1144 = vmatpush1.bf16.xpose.msra.mxu0 0
      %1145 = vmatprep.subr.bf16.mxu0 0
      %1146 = vmatpush1.bf16.xpose.msra.mxu0 0
      %1147 = vmatprep.subr.bf16.mxu0 0
      %1148 = vmatpush1.bf16.xpose.msra.mxu0 0
      %1149 = vmatprep.subr.bf16.mxu0 0
      %1150 = vmatpush1.bf16.xpose.msra.mxu0 0
      %1151 = vmatprep.subr.bf16.mxu0 0
      %1152 = vmatpush1.bf16.xpose.msra.mxu0 0
      %1153 = vmatprep.subr.bf16.mxu0 0
      %1154 = vmatpush1.bf16.xpose.msra.mxu0 0
      %1155 = vmatprep.subr.bf16.mxu0 0
      %1156 = vmatpush1.bf16.xpose.msra.mxu0 0
      %1157 = vmatprep.subr.bf16.mxu0 0
      %1158 = vmatpush1.bf16.xpose.msra.mxu0 0
      %1159 = vmatprep.subr.bf16.mxu0 0
      %1160 = vmatpush1.bf16.xpose.msra.mxu0 0
      %1161 = vmatprep.mubr.bf16.mxu0 0
      %1162 = vmatmul.mubr.bf16.gmra.mrb[0].mxu0 %v1124
      %v1163 = vpop.f32.mrb[0].mxu0
      %v1164 = vadd.f32 %v964, %v1163
      %v1165 = vpop.f32.mrb[0].mxu0
      %v1166 = vpop.f32.mrb[0].mxu0
      %v1167 = vpop.f32.mrb[0].mxu0
      %1168 = vdwg.mxu0
      %v1169 = vmul.f32 %v1011, 0.35355338
      %v1170 = vmul.f32 %v1062, 0.35355338
      %v1171 = vmul.f32 %v1113, 0.35355338
      %v1172 = vmul.f32 %v1164, 0.35355338
      %v1173 = vld [vmem:[%s6] sm:$0xff]
      %v1174 = vadd.f32 %v1169, %v1173
      %v1175 = vadd.f32 %v1170, %v1173
      %v1176 = vadd.f32 %v1171, %v1173
      %v1177 = vadd.f32 %v1172, %v1173
      %vm1178 = vcmask 130048
      %v1179 = vsel %vm1178, %v1174, -inf
      %1180 = vmax.xlane.f32.xlu0 %v1179
      %v1181 = vpop.xlane.xlu0 %1180
      %v1182 = vsel %vm1178, %v1175, -inf
      %1183 = vmax.xlane.f32.xlu0 %v1182
      %v1184 = vpop.xlane.xlu0 %1183
      %v1185 = vsel %vm1178, %v1176, -inf
      %1186 = vmax.xlane.f32.xlu0 %v1185
      %v1187 = vpop.xlane.xlu0 %1186
      %v1188 = vsel %vm1178, %v1177, -inf
      %1189 = vmax.xlane.f32.xlu0 %v1188
      %v1190 = vpop.xlane.xlu0 %1189
      %v1191 = vsub.f32 %v1174, %v1181
      %v1192 = vsub.f32 %v1175, %v1184
      %v1193 = vsub.f32 %v1176, %v1187
      %v1194 = vsub.f32 %v1177, %v1190
      %v1195 = vmul.f32 %v1191, 1.442695
      %v1196 = vpow.pop %v1195
      %v1197 = vmul.f32 %v1192, 1.442695
      %v1198 = vpow.pop %v1197
      %v1199 = vmul.f32 %v1193, 1.442695
      %v1200 = vpow.pop %v1199
      %v1201 = vmul.f32 %v1194, 1.442695
      %v1202 = vpow.pop %v1201
      %v1203 = vsel %vm1178, %v1196, 0.0
      %1204 = vadd.xlane.f32.xlu0 %v1203
      %v1205 = vpop.xlane.xlu0 %1204
      %v1206 = vsel %vm1178, %v1198, 0.0
      %1207 = vadd.xlane.f32.xlu0 %v1206
      %v1208 = vpop.xlane.xlu0 %1207
      %v1209 = vsel %vm1178, %v1200, 0.0
      %1210 = vadd.xlane.f32.xlu0 %v1209
      %v1211 = vpop.xlane.xlu0 %1210
      %v1212 = vsel %vm1178, %v1202, 0.0
      %1213 = vadd.xlane.f32.xlu0 %v1212
      %v1214 = vpop.xlane.xlu0 %1213
      %v1215 = vrcp.pop %v1205
      %v1216 = vrcp.pop %v1208
      %v1217 = vrcp.pop %v1211
      %v1218 = vrcp.pop %v1214
      %v1219 = vmul.f32 %v1196, %v1215
      %v1220 = vmul.f32 %v1198, %v1216
      %v1221 = vmul.f32 %v1200, %v1217
      %v1222 = vmul.f32 %v1202, %v1218
      %v1223 = vpack.c.bf16 %v1219, %v1219
      %v1224 = vpack.c.bf16 %v1220, %v1220
      %v1225 = vpack.c.bf16 %v1221, %v1221
      %v1226 = vpack.c.bf16 %v1222, %v1222
      %v1227 = vld [vmem:[%s428] sm:$0xf]
      %v1228 = vld [vmem:[%s428 + $0x4] sm:$0xf]
      %v1229 = vld [vmem:[%s428 + $0x8] sm:$0xf]
      %v1230 = vld [vmem:[%s428 + $0xc] sm:$0xf]
      %v1231 = vld [vmem:[%s428 + $0x10] sm:$0xf]
      %v1232 = vld [vmem:[%s428 + $0x14] sm:$0xf]
      %v1233 = vld [vmem:[%s428 + $0x18] sm:$0xf]
      %v1234 = vld [vmem:[%s428 + $0x1c] sm:$0xf]
      %v1237 = vunpack.c.l.b16 %v1227
      %v1238 = vunpack.c.l.b16 %v1228
      %v1239 = vpack.c.b16 %v1238, %v1237
      %v1242 = vsel %vm1178, %v1223, 0
      %1244 = vmatprep.subr.bf16.mxu0 0
      %1245 = vmatpush1.bf16.msra.mxu0 %v1239
      %1246 = vmatprep.subr.bf16.mxu0 0
      %1247 = vmatpush1.bf16.msra.mxu0 0
      %1248 = vmatprep.subr.bf16.mxu0 0
      %1249 = vmatpush1.bf16.msra.mxu0 0
      %1250 = vmatprep.subr.bf16.mxu0 0
      %1251 = vmatpush1.bf16.msra.mxu0 0
      %1252 = vmatprep.subr.bf16.mxu0 0
      %1253 = vmatpush1.bf16.msra.mxu0 0
      %1254 = vmatprep.subr.bf16.mxu0 0
      %1255 = vmatpush1.bf16.msra.mxu0 0
      %1256 = vmatprep.subr.bf16.mxu0 0
      %1257 = vmatpush1.bf16.msra.mxu0 0
      %1258 = vmatprep.subr.bf16.mxu0 0
      %1259 = vmatpush1.bf16.msra.mxu0 0
      %1260 = vmatprep.subr.bf16.mxu0 0
      %1261 = vmatpush1.bf16.msra.mxu0 0
      %1262 = vmatprep.subr.bf16.mxu0 0
      %1263 = vmatpush1.bf16.msra.mxu0 0
      %1264 = vmatprep.subr.bf16.mxu0 0
      %1265 = vmatpush1.bf16.msra.mxu0 0
      %1266 = vmatprep.subr.bf16.mxu0 0
      %1267 = vmatpush1.bf16.msra.mxu0 0
      %1268 = vmatprep.subr.bf16.mxu0 0
      %1269 = vmatpush1.bf16.msra.mxu0 0
      %1270 = vmatprep.subr.bf16.mxu0 0
      %1271 = vmatpush1.bf16.msra.mxu0 0
      %1272 = vmatprep.subr.bf16.mxu0 0
      %1273 = vmatpush1.bf16.msra.mxu0 0
      %1274 = vmatprep.subr.bf16.mxu0 0
      %1275 = vmatpush1.bf16.msra.mxu0 0
      %1276 = vmatprep.mubr.bf16.mxu0 0
      %1277 = vmatmul.mubr.bf16.gmra.mrb[0].mxu0 %v1242
      %v1278 = vpop.f32.mrb[0].mxu0
      %v1279 = vadd.f32 0.0, %v1278
      %v1280 = vpop.f32.mrb[0].mxu0
      %v1281 = vpop.f32.mrb[0].mxu0
      %v1282 = vpop.f32.mrb[0].mxu0
      %1283 = vdwg.mxu0
      %v1286 = vunpack.c.l.b16 %v1229
      %v1287 = vunpack.c.l.b16 %v1230
      %v1288 = vpack.c.b16 %v1287, %v1286
      %v1291 = vsel %vm1178, %v1224, 0
      %1293 = vmatprep.subr.bf16.mxu0 0
      %1294 = vmatpush1.bf16.msra.mxu0 %v1288
      %1295 = vmatprep.subr.bf16.mxu0 0
      %1296 = vmatpush1.bf16.msra.mxu0 0
      %1297 = vmatprep.subr.bf16.mxu0 0
      %1298 = vmatpush1.bf16.msra.mxu0 0
      %1299 = vmatprep.subr.bf16.mxu0 0
      %1300 = vmatpush1.bf16.msra.mxu0 0
      %1301 = vmatprep.subr.bf16.mxu0 0
      %1302 = vmatpush1.bf16.msra.mxu0 0
      %1303 = vmatprep.subr.bf16.mxu0 0
      %1304 = vmatpush1.bf16.msra.mxu0 0
      %1305 = vmatprep.subr.bf16.mxu0 0
      %1306 = vmatpush1.bf16.msra.mxu0 0
      %1307 = vmatprep.subr.bf16.mxu0 0
      %1308 = vmatpush1.bf16.msra.mxu0 0
      %1309 = vmatprep.subr.bf16.mxu0 0
      %1310 = vmatpush1.bf16.msra.mxu0 0
      %1311 = vmatprep.subr.bf16.mxu0 0
      %1312 = vmatpush1.bf16.msra.mxu0 0
      %1313 = vmatprep.subr.bf16.mxu0 0
      %1314 = vmatpush1.bf16.msra.mxu0 0
      %1315 = vmatprep.subr.bf16.mxu0 0
      %1316 = vmatpush1.bf16.msra.mxu0 0
      %1317 = vmatprep.subr.bf16.mxu0 0
      %1318 = vmatpush1.bf16.msra.mxu0 0
      %1319 = vmatprep.subr.bf16.mxu0 0
      %1320 = vmatpush1.bf16.msra.mxu0 0
      %1321 = vmatprep.subr.bf16.mxu0 0
      %1322 = vmatpush1.bf16.msra.mxu0 0
      %1323 = vmatprep.subr.bf16.mxu0 0
      %1324 = vmatpush1.bf16.msra.mxu0 0
      %1325 = vmatprep.mubr.bf16.mxu0 0
      %1326 = vmatmul.mubr.bf16.gmra.mrb[0].mxu0 %v1291
      %v1327 = vpop.f32.mrb[0].mxu0
      %v1328 = vadd.f32 0.0, %v1327
      %v1329 = vpop.f32.mrb[0].mxu0
      %v1330 = vpop.f32.mrb[0].mxu0
      %v1331 = vpop.f32.mrb[0].mxu0
      %1332 = vdwg.mxu0
      %v1335 = vunpack.c.l.b16 %v1231
      %v1336 = vunpack.c.l.b16 %v1232
      %v1337 = vpack.c.b16 %v1336, %v1335
      %v1340 = vsel %vm1178, %v1225, 0
      %1342 = vmatprep.subr.bf16.mxu0 0
      %1343 = vmatpush1.bf16.msra.mxu0 %v1337
      %1344 = vmatprep.subr.bf16.mxu0 0
      %1345 = vmatpush1.bf16.msra.mxu0 0
      %1346 = vmatprep.subr.bf16.mxu0 0
      %1347 = vmatpush1.bf16.msra.mxu0 0
      %1348 = vmatprep.subr.bf16.mxu0 0
      %1349 = vmatpush1.bf16.msra.mxu0 0
      %1350 = vmatprep.subr.bf16.mxu0 0
      %1351 = vmatpush1.bf16.msra.mxu0 0
      %1352 = vmatprep.subr.bf16.mxu0 0
      %1353 = vmatpush1.bf16.msra.mxu0 0
      %1354 = vmatprep.subr.bf16.mxu0 0
      %1355 = vmatpush1.bf16.msra.mxu0 0
      %1356 = vmatprep.subr.bf16.mxu0 0
      %1357 = vmatpush1.bf16.msra.mxu0 0
      %1358 = vmatprep.subr.bf16.mxu0 0
      %1359 = vmatpush1.bf16.msra.mxu0 0
      %1360 = vmatprep.subr.bf16.mxu0 0
      %1361 = vmatpush1.bf16.msra.mxu0 0
      %1362 = vmatprep.subr.bf16.mxu0 0
      %1363 = vmatpush1.bf16.msra.mxu0 0
      %1364 = vmatprep.subr.bf16.mxu0 0
      %1365 = vmatpush1.bf16.msra.mxu0 0
      %1366 = vmatprep.subr.bf16.mxu0 0
      %1367 = vmatpush1.bf16.msra.mxu0 0
      %1368 = vmatprep.subr.bf16.mxu0 0
      %1369 = vmatpush1.bf16.msra.mxu0 0
      %1370 = vmatprep.subr.bf16.mxu0 0
      %1371 = vmatpush1.bf16.msra.mxu0 0
      %1372 = vmatprep.subr.bf16.mxu0 0
      %1373 = vmatpush1.bf16.msra.mxu0 0
      %1374 = vmatprep.mubr.bf16.mxu0 0
      %1375 = vmatmul.mubr.bf16.gmra.mrb[0].mxu0 %v1340
      %v1376 = vpop.f32.mrb[0].mxu0
      %v1377 = vadd.f32 0.0, %v1376
      %v1378 = vpop.f32.mrb[0].mxu0
      %v1379 = vpop.f32.mrb[0].mxu0
      %v1380 = vpop.f32.mrb[0].mxu0
      %1381 = vdwg.mxu0
      %v1384 = vunpack.c.l.b16 %v1233
      %v1385 = vunpack.c.l.b16 %v1234
      %v1386 = vpack.c.b16 %v1385, %v1384
      %v1389 = vsel %vm1178, %v1226, 0
      %1391 = vmatprep.subr.bf16.mxu0 0
      %1392 = vmatpush1.bf16.msra.mxu0 %v1386
      %1393 = vmatprep.subr.bf16.mxu0 0
      %1394 = vmatpush1.bf16.msra.mxu0 0
      %1395 = vmatprep.subr.bf16.mxu0 0
      %1396 = vmatpush1.bf16.msra.mxu0 0
      %1397 = vmatprep.subr.bf16.mxu0 0
      %1398 = vmatpush1.bf16.msra.mxu0 0
      %1399 = vmatprep.subr.bf16.mxu0 0
      %1400 = vmatpush1.bf16.msra.mxu0 0
      %1401 = vmatprep.subr.bf16.mxu0 0
      %1402 = vmatpush1.bf16.msra.mxu0 0
      %1403 = vmatprep.subr.bf16.mxu0 0
      %1404 = vmatpush1.bf16.msra.mxu0 0
      %1405 = vmatprep.subr.bf16.mxu0 0
      %1406 = vmatpush1.bf16.msra.mxu0 0
      %1407 = vmatprep.subr.bf16.mxu0 0
      %1408 = vmatpush1.bf16.msra.mxu0 0
      %1409 = vmatprep.subr.bf16.mxu0 0
      %1410 = vmatpush1.bf16.msra.mxu0 0
      %1411 = vmatprep.subr.bf16.mxu0 0
      %1412 = vmatpush1.bf16.msra.mxu0 0
      %1413 = vmatprep.subr.bf16.mxu0 0
      %1414 = vmatpush1.bf16.msra.mxu0 0
      %1415 = vmatprep.subr.bf16.mxu0 0
      %1416 = vmatpush1.bf16.msra.mxu0 0
      %1417 = vmatprep.subr.bf16.mxu0 0
      %1418 = vmatpush1.bf16.msra.mxu0 0
      %1419 = vmatprep.subr.bf16.mxu0 0
      %1420 = vmatpush1.bf16.msra.mxu0 0
      %1421 = vmatprep.subr.bf16.mxu0 0
      %1422 = vmatpush1.bf16.msra.mxu0 0
      %1423 = vmatprep.mubr.bf16.mxu0 0
      %1424 = vmatmul.mubr.bf16.gmra.mrb[0].mxu0 %v1389
      %v1425 = vpop.f32.mrb[0].mxu0
      %v1426 = vadd.f32 0.0, %v1425
      %v1427 = vpop.f32.mrb[0].mxu0
      %v1428 = vpop.f32.mrb[0].mxu0
      %v1429 = vpop.f32.mrb[0].mxu0
      %1430 = vdwg.mxu0
      %v1431 = vpack.c.bf16 %v1279, %v1279
      %vm1432 = vcmask 60416
      %1433 = vst.msk [vmem:[%s453] sm:$0xf] %vm1432, %v1431
      %v1434 = vpack.c.bf16 %v1328, %v1328
      %v1436 = vunpack.c.l.b16 %v1434
      %v1437 = vpack.c.b16 %v1436, %v1436
      %1438 = vrot.lane.b32.xlu0 %v1437, 8
      %v1439 = vpop.permute.xlu0 %1438
      %vm1441 = vcmask 126016
      %1442 = vst.msk [vmem:[%s453] sm:$0xf] %vm1441, %v1439
      %v1443 = vpack.c.bf16 %v1377, %v1377
      %v1445 = vunpack.c.l.b16 %v1443
      %v1446 = vpack.c.b16 %v1445, %v1445
      %1447 = vrot.lane.b32.xlu0 %v1446, 16
      %v1448 = vpop.permute.xlu0 %1447
      %vm1450 = vcmask 191616
      %1451 = vst.msk [vmem:[%s453] sm:$0xf] %vm1450, %v1448
      %v1452 = vpack.c.bf16 %v1426, %v1426
      %v1454 = vunpack.c.l.b16 %v1452
      %v1455 = vpack.c.b16 %v1454, %v1454
      %1456 = vrot.lane.b32.xlu0 %v1455, 24
      %v1457 = vpop.permute.xlu0 %1456
      %vm1459 = vcmask 257216
      %1460 = vst.msk [vmem:[%s453] sm:$0xf] %vm1459, %v1457
      %p1461 = scmp.lt.s32.totalorder %s22, 1
      %s1462 = scalar_select %p1461, %s22, 1
      %p1463 = scmp.lt.s32.totalorder %s23, 0
      %s1464 = scalar_select %p1463, %s23, 0
      %s1465 = sadd.s32 %s1464, %s1462
      %s1466 = smul.addr %s1465, 4
      %s1467 = scalar_lea.vmem %s7, %s1466
      // Predicated region
      $region49: #{_lambda_.11} parent=47 // pred_check
        %p1468 = pneg %p233
      $region50: #{_lambda_.11} parent=47 // pred_check_branch
        %1470 = sbr.rel (%p1468) target = $region52
      $region51: #{_lambda_.11} parent=47 // pred_region
        _
      $region52: #{_lambda_.11} parent=47 // pred_fallthru
        _
    $region48: #{_lambda_.11} parent=5 // pred_fallthru
      _
    %p1471 = scmp.le.s32.totalorder 2, %s13
    // Predicated region
    $region53: #{_lambda_.11} parent=5 // pred_check
      %p1472 = pneg %p1471
    $region54: #{_lambda_.11} parent=5 // pred_check_branch
      %1474 = sbr.rel (%p1472) target = $region56
    $region55: #{_lambda_.11} parent=5 // pred_region
      %s1475 = ssub.s32 %s13, 2
      // Predicated region
      $region57: #{_lambda_.11} parent=55 // pred_check
        %p1476 = pneg %p239
      $region58: #{_lambda_.11} parent=55 // pred_check_branch
        %1478 = sbr.rel (%p1476) target = $region60
      $region59: #{_lambda_.11} parent=55 // pred_region
        %p1479 = scmp.lt.s32.totalorder %s24, 1
        %s1480 = scalar_select %p1479, %s24, 1
        %p1481 = scmp.lt.s32.totalorder %s25, 0
        %s1482 = scalar_select %p1481, %s25, 0
        %s1483 = sadd.s32 %s1482, %s1480
        %s1484 = smul.addr %s1483, 4
        %s1485 = scalar_lea.vmem %s7, %s1484
      $region60: #{_lambda_.11} parent=55 // pred_fallthru
        _
    $region56: #{_lambda_.11} parent=5 // pred_fallthru
      _
  $region6: #{_lambda_.11} parent=0 // loop_footer
    %s17 = sadd.s32 1, %s13
  $region7: #{_lambda_.11} parent=0 // loop_footer_branch
    %12 = sbr.rel target = $region3
  $region8: #{_lambda_.11} parent=0 // loop_exit
    _

</llo_original>
